<compile_context>
chip_gen: v6e
topology: v6e:2x2x1
jax: 0.10.0
libtpu: 0.0.40
codegen_flags: <defaults>
</compile_context>

<pallas_src>
import functools

import jax
import jax.numpy as jnp
from jax.experimental import pallas as pl
from jax.experimental.pallas import tpu as pltpu

VMEM = pltpu.MemorySpace.VMEM


def _silu(x):
    # SiLU(x) = x * sigmoid(x); exp + approx reciprocal go to the otherwise-idle EUP.
    return x * pl.reciprocal(1.0 + jnp.exp(-x), approx=True)


# ---------------------------------------------------------------------------
# Fused d_step kernel (single invocation, whole-array VMEM operands)
# ---------------------------------------------------------------------------
def gan_dstep_kernel(x_ref, c_ref, fold_ref, seg_ref, w192_ref, w384_ref, bias_ref,
                     out_ref, *, n, dsum, moment, w_layout, b_layout):
    wslabs = (w192_ref, w384_ref)

    def W(name):                                    # static slice of a weight slab
        slab, r0, nr, nc = w_layout[name]
        return wslabs[slab][r0:r0 + nr, 0:nc]

    def B(name):                                    # static slice of the bias slab
        row, nc = b_layout[name]
        return bias_ref[row:row + 1, 0:nc]          # [1, nc] -> broadcasts over rows

    def mm(a, name):
        return jnp.dot(a, W(name), preferred_element_type=jnp.float32)

    x2 = x_ref[...]                                 # [2N, R*A*V]  (true rows first)
    c2 = c_ref[...]                                 # [2N, C]

    # ---- all four axis reductions (r | a | v | total) in ONE MXU pass ----
    if moment == 1:
        red = jnp.dot(x2, fold_ref[...], preferred_element_type=jnp.float32)
    else:
        red = jnp.dot(x2 ** moment, fold_ref[...], preferred_element_type=jnp.float32)
        # Total_E_D_Net always reduces raw x (moment=1): patch its single column.
        t_col = jnp.sum(x2, axis=-1, keepdims=True)
        red = jnp.concatenate([red[:, :dsum], t_col, red[:, dsum + 1:]], axis=1)

    # ---- per-segment data_scale: one update_scale_coef step on the real half ----
    mb = jnp.sum(red[:n], axis=0, keepdims=True) * (1.0 / n)            # [1, W] batch mean
    m = jnp.dot(mb, seg_ref[...], preferred_element_type=jnp.float32)   # per-lane segment mean
    m_safe = jnp.where(m == 0.0, 1.0, m)
    z = red * jnp.where(m == 0.0, 0.0, 1.0 / m_safe)                    # [2N, W] scaled

    z0 = z[:, 0:dsum]                 # [2N, R+A+V]  fused CR_D_Net input (r | a | v)
    x0t = z[:, dsum:dsum + 1]         # [2N, 1]      Total_E_D_Net input

    # ---- fused CR_D_Net x3: Conv1d stack as block-Toeplitz matmuls ----
    a1 = _silu(mm(z0, "t1") + B("b1"))
    a2 = _silu(mm(a1, "t2") + B("b2"))
    a3 = _silu(mm(a2, "t3") + B("b3"))
    z2 = mm(a3, "ew") + B("eb")                                         # [2N, 192]

    # ---- fused pos_emb ‖ scale_emb conditioning MLP (one pass for true+fake rows) ----
    ps = _silu(mm(c2, "cw1") + B("cb1"))
    ps = _silu(mm(ps, "cw2") + B("cb2"))
    ps = mm(ps, "cw3") + B("cb3")                                       # [2N, 384]; (+1) folded in
    z3 = ps[:, 0:192] + z2 * ps[:, 192:384]                             # pos + z2*(scale+1)

    # ---- per-net LayerNorm(64) via block-mean matmul; affine folded into qw1 ----
    mu = mm(z3, "mavg")
    d = z3 - mu
    var = mm(d * d, "mavg")
    h = d * jax.lax.rsqrt(var + 1e-5)
    h = _silu(mm(h, "qw1") + B("qb1"))
    h = _silu(mm(h, "qw2") + B("qb2"))
    # Sum of the 3 CR scores per row; the per-net output biases cancel in the diff.
    cr_rows = jnp.sum(h * B("qw3"), axis=-1, keepdims=True)             # [2N, 1]

    # ---- Total_E_D_Net (x column of W1 is a rank-1 VPU update; no K=1 matmul) ----
    ht = _silu(x0t * B("tw1x") + mm(c2, "tw1c") + B("tb1"))
    ht = _silu(mm(ht, "tw2") + B("tb2"))
    tot_rows = jnp.sum(ht * B("tw3"), axis=-1, keepdims=True)           # [2N, 1]

    # ---- WGAN d_step loss: -(d_true - d_fake).mean() over the 4 nets' scores ----
    sign = jnp.where(jax.lax.broadcasted_iota(jnp.int32, (2 * n, 1), 0) < n, 1.0, -1.0)
    diff = jnp.sum(sign * (cr_rows + tot_rows))
    loss = -diff / float(4 * n)
    out_ref[...] = jnp.broadcast_to(loss, out_ref.shape)                # lane-dense (1, 128)


# ---------------------------------------------------------------------------
# Wrapper
# ---------------------------------------------------------------------------
def make_gan_d_step(n, dsum, w_layout, b_layout, moment=1):
    kernel = functools.partial(gan_dstep_kernel, n=n, dsum=dsum, moment=moment,
                               w_layout=w_layout, b_layout=b_layout)

    @jax.jit
    def step(x_true, x_fake, c, fold, seg, w192, w384, bias):
        x2 = jnp.concatenate([x_true.reshape(n, -1), x_fake.reshape(n, -1)], axis=0)
        c2 = jnp.concatenate([c, c], axis=0)
        args = (x2, c2, fold, seg, w192, w384, bias)

        nbytes = sum(int(a.size) * a.dtype.itemsize for a in args) + 512
        flops = 2 * int(x2.shape[0]) * (int(x2.shape[1]) * int(fold.shape[1])
                                        + sum(nr * nc for (_, _, nr, nc) in w_layout.values()))
        cost = pl.CostEstimate(flops=int(flops),
                               transcendentals=int(8 * x2.shape[0] * 384),
                               bytes_accessed=int(nbytes))

        out = pl.pallas_call(
            kernel,
            out_shape=jax.ShapeDtypeStruct((1, 128), jnp.float32),
            in_specs=[pl.BlockSpec(memory_space=VMEM)] * len(args),
            out_specs=pl.BlockSpec(memory_space=VMEM),
            cost_estimate=cost,
        )(*args)
        return out[0, 0]

    return step


# ---------------------------------------------------------------------------
# Fold / segment matrices (reduction + data_scale on the MXU)
# ---------------------------------------------------------------------------
def _fold_width(r, a, v):
    p = r + a + v + 1
    return max(64, 64 * ((p + 63) // 64))


def make_fold_matrix(r, a, v):
    width = _fold_width(r, a, v)
    rav = r * a * v
    idx = jnp.arange(rav)
    ri = idx // (a * v)
    ai = (idx // v) % a
    vi = idx % v
    f = jnp.zeros((rav, width), jnp.float32)
    f = f.at[idx, ri].set(1.0)                 # sum over (A,V) -> columns [0, R)
    f = f.at[idx, r + ai].set(1.0)             # sum over (R,V) -> columns [R, R+A)
    f = f.at[idx, r + a + vi].set(1.0)         # sum over (R,A) -> columns [R+A, R+A+V)
    f = f.at[:, r + a + v].set(1.0)            # total sum      -> column  R+A+V
    return f


def make_seg_matrix(r, a, v):
    width = _fold_width(r, a, v)
    s = jnp.zeros((width, width), jnp.float32)
    for start, size in ((0, r), (r, a), (r + a, v), (r + a + v, 1)):
        s = s.at[start:start + size, start:start + size].set(1.0 / size)
    return s


# ---------------------------------------------------------------------------
# Parameter construction (torch-like shapes) + kernel-ready fused packing
# ---------------------------------------------------------------------------
def _linear(key, fan_in, fan_out, w_gain=0.05, b_gain=0.01):
    kw, kb = jax.random.split(key)
    w = w_gain * jax.random.normal(kw, (fan_in, fan_out), jnp.float32)   # pre-transposed [in, out]
    b = b_gain * jax.random.normal(kb, (1, fan_out), jnp.float32)
    return w, b


def _conv_toeplitz(w, lin):
    """w: [Cout, Cin, K] -> T: [Cin*Lin, Cout*Lout] with channel-major flatten."""
    cout, cin, k = w.shape
    lout = lin - k + 1
    co, ci, kk, jj = jnp.meshgrid(jnp.arange(cout), jnp.arange(cin),
                                  jnp.arange(k), jnp.arange(lout), indexing="ij")
    rows = (ci * lin + jj + kk).reshape(-1)
    cols = (co * lout + jj).reshape(-1)
    vals = jnp.broadcast_to(w[:, :, :, None], (cout, cin, k, lout)).reshape(-1)
    t = jnp.zeros((cin * lin, cout * lout), jnp.float32)
    return t.at[rows, cols].set(vals)


def _block_diag(mats):
    rows = sum(m.shape[0] for m in mats)
    cols = sum(m.shape[1] for m in mats)
    out = jnp.zeros((rows, cols), jnp.float32)
    r = c = 0
    for m in mats:
        out = out.at[r:r + m.shape[0], c:c + m.shape[1]].set(m)
        r += m.shape[0]
        c += m.shape[1]
    return out


def _pack_rows(named, width):
    """Row-stack 2-D mats (rows padded to x8) into one [Rtot, width] slab."""
    parts, layout, r0 = [], {}, 0
    for name, mat in named:
        nr, nc = mat.shape
        nrp = -(-nr // 8) * 8
        buf = jnp.zeros((nrp, width), jnp.float32).at[:nr, :nc].set(mat)
        parts.append(buf)
        layout[name] = (r0, nr, nc)
        r0 += nrp
    return jnp.concatenate(parts, axis=0), layout


def _pack_bias(named, width):
    """Stack 1-D bias rows into one [Rpad, width] slab."""
    nrp = -(-len(named) // 8) * 8
    slab = jnp.zeros((nrp, width), jnp.float32)
    layout = {}
    for i, (name, b) in enumerate(named):
        b = jnp.ravel(b)
        slab = slab.at[i, :b.shape[0]].set(b)
        layout[name] = (i, int(b.shape[0]))
    return slab, layout


def make_cr_params(key, dim_x, dim_c):
    ks = jax.random.split(key, 16)
    p = {}
    p["c1w"] = 0.1 * jax.random.normal(ks[0], (4, 1, 5), jnp.float32)   # Conv1d(1,4,5)
    p["c1b"] = 0.01 * jax.random.normal(ks[1], (4,), jnp.float32)
    p["c2w"] = 0.1 * jax.random.normal(ks[2], (4, 4, 5), jnp.float32)   # Conv1d(4,4,5)
    p["c2b"] = 0.01 * jax.random.normal(ks[3], (4,), jnp.float32)
    p["c3w"] = 0.1 * jax.random.normal(ks[4], (4, 4, 5), jnp.float32)   # Conv1d(4,4,5)
    p["c3b"] = 0.01 * jax.random.normal(ks[5], (4,), jnp.float32)
    p["ew"], p["eb"] = _linear(ks[6], (dim_x - 12) * 4, 64)             # enc
    p["pw1"], p["pb1"] = _linear(ks[7], dim_c, 64)                      # pos_emb
    p["pw2"], p["pb2"] = _linear(ks[8], 64, 64)
    p["pw3"], p["pb3"] = _linear(ks[9], 64, 64)
    p["sw1"], p["sb1"] = _linear(ks[10], dim_c, 64)                     # scale_emb
    p["sw2"], p["sb2"] = _linear(ks[11], 64, 64)
    p["sw3"], p["sb3"] = _linear(ks[12], 64, 64)
    p["lnw"] = jnp.ones((64,), jnp.float32)                             # LayerNorm(64)
    p["lnb"] = jnp.zeros((64,), jnp.float32)
    p["qw1"], p["qb1"] = _linear(ks[13], 64, 64)                        # score head
    p["qw2"], p["qb2"] = _linear(ks[14], 64, 64)
    p["qw3"], p["qb3"] = _linear(ks[15], 64, 1)
    return p


def make_total_params(key, dim_c):
    k1, k2, k3 = jax.random.split(key, 3)
    w1, b1 = _linear(k1, dim_c + 1, 128)
    w2, b2 = _linear(k2, 128, 128)
    w3, b3 = _linear(k3, 128, 1)
    return {"w1": w1, "b1": b1, "w2": w2, "b2": b2, "w3": w3, "b3": b3}


def build_fused_params(cr_list, tot, dims):
    """Block-diagonalise the 3 CR_D_Nets + pack everything into 2 weight slabs + 1 bias slab."""
    t1s, t2s, t3s, ews = [], [], [], []
    b1s, b2s, b3s, ebs = [], [], [], []
    pw1, pw2, pw3, pb1, pb2, pb3 = [], [], [], [], [], []
    sw1, sw2, sw3, sb1, sb2, sb3 = [], [], [], [], [], []
    qw1s, qb1s, qw2s, qb2s, qw3s = [], [], [], [], []
    for p, d in zip(cr_list, dims):
        l1, l2 = d - 4, d - 8
        t1s.append(_conv_toeplitz(p["c1w"], d))
        t2s.append(_conv_toeplitz(p["c2w"], l1))
        t3s.append(_conv_toeplitz(p["c3w"], l2))
        b1s.append(jnp.repeat(p["c1b"], l1))            # channel-major bias rows
        b2s.append(jnp.repeat(p["c2b"], l2))
        b3s.append(jnp.repeat(p["c3b"], d - 12))
        ews.append(p["ew"])
        ebs.append(jnp.ravel(p["eb"]))
        pw1.append(p["pw1"]); pb1.append(jnp.ravel(p["pb1"]))
        pw2.append(p["pw2"]); pb2.append(jnp.ravel(p["pb2"]))
        pw3.append(p["pw3"]); pb3.append(jnp.ravel(p["pb3"]))
        sw1.append(p["sw1"]); sb1.append(jnp.ravel(p["sb1"]))
        sw2.append(p["sw2"]); sb2.append(jnp.ravel(p["sb2"]))
        sw3.append(p["sw3"]); sb3.append(jnp.ravel(p["sb3"]) + 1.0)     # fold (scale_emb + 1)
        qw1s.append(p["lnw"][:, None] * p["qw1"])                       # fold LayerNorm affine
        qb1s.append(jnp.ravel(p["lnb"][None, :] @ p["qw1"] + p["qb1"]))
        qw2s.append(p["qw2"]); qb2s.append(jnp.ravel(p["qb2"]))
        qw3s.append(p["qw3"][:, 0])
        # per-net output bias qb3 cancels exactly in the WGAN (true - fake) diff -> dropped

    mavg = _block_diag([jnp.full((64, 64), 1.0 / 64.0)] * 3)            # per-net LN mean

    w192 = [("t1", _block_diag(t1s)), ("t2", _block_diag(t2s)), ("t3", _block_diag(t3s)),
            ("ew", _block_diag(ews)), ("mavg", mavg),
            ("qw1", _block_diag(qw1s)), ("qw2", _block_diag(qw2s)),
            ("tw1c", tot["w1"][1:, :]), ("tw2", tot["w2"])]
    w384 = [("cw1", jnp.concatenate(pw1 + sw1, axis=1)),
            ("cw2", _block_diag(pw2 + sw2)),
            ("cw3", _block_diag(pw3 + sw3))]
    biases = [("b1", jnp.concatenate(b1s)), ("b2", jnp.concatenate(b2s)),
              ("b3", jnp.concatenate(b3s)), ("eb", jnp.concatenate(ebs)),
              ("cb1", jnp.concatenate(pb1 + sb1)),
              ("cb2", jnp.concatenate(pb2 + sb2)),
              ("cb3", jnp.concatenate(pb3 + sb3)),
              ("qb1", jnp.concatenate(qb1s)), ("qb2", jnp.concatenate(qb2s)),
              ("qw3", jnp.concatenate(qw3s)),
              ("tw1x", tot["w1"][0, :]), ("tb1", jnp.ravel(tot["b1"])),
              ("tb2", jnp.ravel(tot["b2"])), ("tw3", tot["w3"][:, 0])]
              # total-net output bias b3 also cancels in the diff

    slab192, lay192 = _pack_rows(w192, 192)
    slab384, lay384 = _pack_rows(w384, 384)
    bias_slab, b_layout = _pack_bias(biases, 384)
    w_layout = {k: (0,) + v for k, v in lay192.items()}
    w_layout.update({k: (1,) + v for k, v in lay384.items()})
    return slab192, slab384, bias_slab, w_layout, b_layout, sum(dims)


# ---------------------------------------------------------------------------
# GAN.forward(X, gan_step='d_step') with gan_model='wgan', cr_gan=1
# ---------------------------------------------------------------------------
if __name__ == "__main__":
    N, R, A, V, C = 2, 16, 16, 16, 4       # batch, dim_r, dim_a, dim_v, dim_c

    key = jax.random.PRNGKey(0)
    k_xt, k_xf, k_c, k_p0, k_p1, k_p2, k_pt = jax.random.split(key, 7)

    x_true = jax.random.uniform(k_xt, (N, R, A, V), jnp.float32, 0.1, 1.0)
    # TODO(synk): x_fake should be self.model.decoding(prior(nb), cond_var); the generator is
    # external to the provided source, so a deterministic synthetic sample is used.
    x_fake = jax.random.uniform(k_xf, (N, R, A, V), jnp.float32, 0.1, 1.0)
    c = jax.random.normal(k_c, (N, C), jnp.float32)

    cr = [make_cr_params(k_p0, R, C), make_cr_params(k_p1, A, C), make_cr_params(k_p2, V, C)]
    tot = make_total_params(k_pt, C)
    w192, w384, bias, w_layout, b_layout, dsum = build_fused_params(cr, tot, (R, A, V))
    fold = make_fold_matrix(R, A, V)
    seg = make_seg_matrix(R, A, V)

    d_step = make_gan_d_step(N, dsum, w_layout, b_layout, moment=1)
    d_score = d_step(x_true, x_fake, c, fold, seg, w192, w384, bias)
    d_score = jax.block_until_ready(d_score)
    assert bool(jnp.isfinite(d_score))
    print("KERNEL_OK")
</pallas_src>

<mosaic_0001>
module attributes {stable_mosaic.version = 11 : i64} {
  func.func @gan_dstep_kernel(%arg0: memref<4x4096xf32, #tpu.memory_space<vmem>>, %arg1: memref<4x4xf32, #tpu.memory_space<vmem>>, %arg2: memref<4096x64xf32, #tpu.memory_space<vmem>>, %arg3: memref<64x64xf32, #tpu.memory_space<vmem>>, %arg4: memref<1048x192xf32, #tpu.memory_space<vmem>>, %arg5: memref<776x384xf32, #tpu.memory_space<vmem>>, %arg6: memref<16x384xf32, #tpu.memory_space<vmem>>, %arg7: memref<1x128xf32, #tpu.memory_space<vmem>>) attributes {dimension_semantics = [], scalar_prefetch = 0 : i64, scratch_operands = 0 : i64, tpu.core_type = #tpu.core_type<tc>} {
    %c0 = arith.constant 0 : index
    %c0_0 = arith.constant 0 : index
    %0 = vector.load %arg0[%c0, %c0_0] : memref<4x4096xf32, #tpu.memory_space<vmem>>, vector<4x4096xf32>
    %c0_1 = arith.constant 0 : index
    %c0_2 = arith.constant 0 : index
    %1 = vector.load %arg1[%c0_1, %c0_2] : memref<4x4xf32, #tpu.memory_space<vmem>>, vector<4x4xf32>
    %c0_3 = arith.constant 0 : index
    %c0_4 = arith.constant 0 : index
    %2 = vector.load %arg2[%c0_3, %c0_4] : memref<4096x64xf32, #tpu.memory_space<vmem>>, vector<4096x64xf32>
    %cst = arith.constant dense<0.000000e+00> : vector<4x64xf32>
    %3 = tpu.matmul %0, %2, %cst {dimension_numbers = #tpu.dot_dimension_numbers<[1], [0], [0], [1], [0, 0, 1, 1], [], []>} : vector<4x4096xf32>, vector<4096x64xf32>, vector<4x64xf32> -> vector<4x64xf32>
    %4 = vector.extract_strided_slice %3 {offsets = [0, 0], sizes = [2, 64], strides = [1, 1]} : vector<4x64xf32> to vector<2x64xf32>
    %cst_5 = arith.constant dense<0.000000e+00> : vector<64xf32>
    %5 = vector.multi_reduction <add>, %4, %cst_5 [0] : vector<2x64xf32> to vector<64xf32>
    %6 = vector.shape_cast %5 : vector<64xf32> to vector<1x64xf32>
    %cst_6 = arith.constant 5.000000e-01 : f32
    %7 = vector.broadcast %cst_6 : f32 to vector<1x64xf32>
    %8 = arith.mulf %6, %7 : vector<1x64xf32>
    %c0_7 = arith.constant 0 : index
    %c0_8 = arith.constant 0 : index
    %9 = vector.load %arg3[%c0_7, %c0_8] : memref<64x64xf32, #tpu.memory_space<vmem>>, vector<64x64xf32>
    %cst_9 = arith.constant dense<0.000000e+00> : vector<1x64xf32>
    %10 = tpu.matmul %8, %9, %cst_9 {dimension_numbers = #tpu.dot_dimension_numbers<[1], [0], [0], [1], [0, 0, 1, 1], [], []>} : vector<1x64xf32>, vector<64x64xf32>, vector<1x64xf32> -> vector<1x64xf32>
    %cst_10 = arith.constant 0.000000e+00 : f32
    %11 = vector.broadcast %cst_10 : f32 to vector<1x64xf32>
    %12 = arith.cmpf oeq, %10, %11 : vector<1x64xf32>
    %cst_11 = arith.constant 1.000000e+00 : f32
    %13 = vector.broadcast %cst_11 : f32 to vector<1x64xf32>
    %14 = arith.select %12, %13, %10 : vector<1x64xi1>, vector<1x64xf32>
    %cst_12 = arith.constant 0.000000e+00 : f32
    %15 = vector.broadcast %cst_12 : f32 to vector<1x64xf32>
    %16 = arith.cmpf oeq, %10, %15 : vector<1x64xf32>
    %cst_13 = arith.constant 1.000000e+00 : f32
    %17 = vector.broadcast %cst_13 : f32 to vector<1x64xf32>
    %18 = arith.divf %17, %14 : vector<1x64xf32>
    %cst_14 = arith.constant 0.000000e+00 : f32
    %19 = vector.broadcast %cst_14 : f32 to vector<1x64xf32>
    %20 = arith.select %16, %19, %18 : vector<1x64xi1>, vector<1x64xf32>
    %21 = vector.broadcast %20 : vector<1x64xf32> to vector<4x64xf32>
    %22 = arith.mulf %3, %21 : vector<4x64xf32>
    %23 = vector.extract_strided_slice %22 {offsets = [0, 0], sizes = [4, 48], strides = [1, 1]} : vector<4x64xf32> to vector<4x48xf32>
    %24 = vector.extract_strided_slice %22 {offsets = [0, 48], sizes = [4, 1], strides = [1, 1]} : vector<4x64xf32> to vector<4x1xf32>
    %c0_15 = arith.constant 0 : index
    %c0_16 = arith.constant 0 : index
    %25 = vector.load %arg4[%c0_15, %c0_16] : memref<1048x192xf32, #tpu.memory_space<vmem>>, vector<48x144xf32>
    %cst_17 = arith.constant dense<0.000000e+00> : vector<4x144xf32>
    %26 = tpu.matmul %23, %25, %cst_17 {dimension_numbers = #tpu.dot_dimension_numbers<[1], [0], [0], [1], [0, 0, 1, 1], [], []>} : vector<4x48xf32>, vector<48x144xf32>, vector<4x144xf32> -> vector<4x144xf32>
    %c0_18 = arith.constant 0 : index
    %c0_19 = arith.constant 0 : index
    %27 = vector.load %arg6[%c0_18, %c0_19] : memref<16x384xf32, #tpu.memory_space<vmem>>, vector<1x144xf32>
    %28 = vector.broadcast %27 : vector<1x144xf32> to vector<4x144xf32>
    %29 = arith.addf %26, %28 : vector<4x144xf32>
    %cst_20 = arith.constant 0.000000e+00 : f32
    %30 = vector.broadcast %cst_20 : f32 to vector<4x144xf32>
    %31 = arith.subf %30, %29 : vector<4x144xf32>
    %32 = math.exp %31 : vector<4x144xf32>
    %cst_21 = arith.constant 1.000000e+00 : f32
    %33 = vector.broadcast %cst_21 : f32 to vector<4x144xf32>
    %34 = arith.addf %33, %32 : vector<4x144xf32>
    %35 = tpu.reciprocal %34 {approx = true} : vector<4x144xf32> -> vector<4x144xf32>
    %36 = arith.mulf %29, %35 : vector<4x144xf32>
    %c48 = arith.constant 48 : index
    %c0_22 = arith.constant 0 : index
    %37 = vector.load %arg4[%c48, %c0_22] : memref<1048x192xf32, #tpu.memory_space<vmem>>, vector<144x96xf32>
    %cst_23 = arith.constant dense<0.000000e+00> : vector<4x96xf32>
    %38 = tpu.matmul %36, %37, %cst_23 {dimension_numbers = #tpu.dot_dimension_numbers<[1], [0], [0], [1], [0, 0, 1, 1], [], []>} : vector<4x144xf32>, vector<144x96xf32>, vector<4x96xf32> -> vector<4x96xf32>
    %c1 = arith.constant 1 : index
    %c0_24 = arith.constant 0 : index
    %39 = vector.load %arg6[%c1, %c0_24] : memref<16x384xf32, #tpu.memory_space<vmem>>, vector<1x96xf32>
    %40 = vector.broadcast %39 : vector<1x96xf32> to vector<4x96xf32>
    %41 = arith.addf %38, %40 : vector<4x96xf32>
    %cst_25 = arith.constant 0.000000e+00 : f32
    %42 = vector.broadcast %cst_25 : f32 to vector<4x96xf32>
    %43 = arith.subf %42, %41 : vector<4x96xf32>
    %44 = math.exp %43 : vector<4x96xf32>
    %cst_26 = arith.constant 1.000000e+00 : f32
    %45 = vector.broadcast %cst_26 : f32 to vector<4x96xf32>
    %46 = arith.addf %45, %44 : vector<4x96xf32>
    %47 = tpu.reciprocal %46 {approx = true} : vector<4x96xf32> -> vector<4x96xf32>
    %48 = arith.mulf %41, %47 : vector<4x96xf32>
    %c192 = arith.constant 192 : index
    %c0_27 = arith.constant 0 : index
    %49 = vector.load %arg4[%c192, %c0_27] : memref<1048x192xf32, #tpu.memory_space<vmem>>, vector<96x48xf32>
    %cst_28 = arith.constant dense<0.000000e+00> : vector<4x48xf32>
    %50 = tpu.matmul %48, %49, %cst_28 {dimension_numbers = #tpu.dot_dimension_numbers<[1], [0], [0], [1], [0, 0, 1, 1], [], []>} : vector<4x96xf32>, vector<96x48xf32>, vector<4x48xf32> -> vector<4x48xf32>
    %c2 = arith.constant 2 : index
    %c0_29 = arith.constant 0 : index
    %51 = vector.load %arg6[%c2, %c0_29] : memref<16x384xf32, #tpu.memory_space<vmem>>, vector<1x48xf32>
    %52 = vector.broadcast %51 : vector<1x48xf32> to vector<4x48xf32>
    %53 = arith.addf %50, %52 : vector<4x48xf32>
    %cst_30 = arith.constant 0.000000e+00 : f32
    %54 = vector.broadcast %cst_30 : f32 to vector<4x48xf32>
    %55 = arith.subf %54, %53 : vector<4x48xf32>
    %56 = math.exp %55 : vector<4x48xf32>
    %cst_31 = arith.constant 1.000000e+00 : f32
    %57 = vector.broadcast %cst_31 : f32 to vector<4x48xf32>
    %58 = arith.addf %57, %56 : vector<4x48xf32>
    %59 = tpu.reciprocal %58 {approx = true} : vector<4x48xf32> -> vector<4x48xf32>
    %60 = arith.mulf %53, %59 : vector<4x48xf32>
    %c288 = arith.constant 288 : index
    %c0_32 = arith.constant 0 : index
    %61 = vector.load %arg4[%c288, %c0_32] : memref<1048x192xf32, #tpu.memory_space<vmem>>, vector<48x192xf32>
    %cst_33 = arith.constant dense<0.000000e+00> : vector<4x192xf32>
    %62 = tpu.matmul %60, %61, %cst_33 {dimension_numbers = #tpu.dot_dimension_numbers<[1], [0], [0], [1], [0, 0, 1, 1], [], []>} : vector<4x48xf32>, vector<48x192xf32>, vector<4x192xf32> -> vector<4x192xf32>
    %c3 = arith.constant 3 : index
    %c0_34 = arith.constant 0 : index
    %63 = vector.load %arg6[%c3, %c0_34] : memref<16x384xf32, #tpu.memory_space<vmem>>, vector<1x192xf32>
    %64 = vector.broadcast %63 : vector<1x192xf32> to vector<4x192xf32>
    %65 = arith.addf %62, %64 : vector<4x192xf32>
    %c0_35 = arith.constant 0 : index
    %c0_36 = arith.constant 0 : index
    %66 = vector.load %arg5[%c0_35, %c0_36] : memref<776x384xf32, #tpu.memory_space<vmem>>, vector<4x384xf32>
    %cst_37 = arith.constant dense<0.000000e+00> : vector<4x384xf32>
    %67 = tpu.matmul %1, %66, %cst_37 {dimension_numbers = #tpu.dot_dimension_numbers<[1], [0], [0], [1], [0, 0, 1, 1], [], []>} : vector<4x4xf32>, vector<4x384xf32>, vector<4x384xf32> -> vector<4x384xf32>
    %c4 = arith.constant 4 : index
    %c0_38 = arith.constant 0 : index
    %68 = vector.load %arg6[%c4, %c0_38] : memref<16x384xf32, #tpu.memory_space<vmem>>, vector<1x384xf32>
    %69 = vector.broadcast %68 : vector<1x384xf32> to vector<4x384xf32>
    %70 = arith.addf %67, %69 : vector<4x384xf32>
    %cst_39 = arith.constant 0.000000e+00 : f32
    %71 = vector.broadcast %cst_39 : f32 to vector<4x384xf32>
    %72 = arith.subf %71, %70 : vector<4x384xf32>
    %73 = math.exp %72 : vector<4x384xf32>
    %cst_40 = arith.constant 1.000000e+00 : f32
    %74 = vector.broadcast %cst_40 : f32 to vector<4x384xf32>
    %75 = arith.addf %74, %73 : vector<4x384xf32>
    %76 = tpu.reciprocal %75 {approx = true} : vector<4x384xf32> -> vector<4x384xf32>
    %77 = arith.mulf %70, %76 : vector<4x384xf32>
    %c8 = arith.constant 8 : index
    %c0_41 = arith.constant 0 : index
    %78 = vector.load %arg5[%c8, %c0_41] : memref<776x384xf32, #tpu.memory_space<vmem>>, vector<384x384xf32>
    %cst_42 = arith.constant dense<0.000000e+00> : vector<4x384xf32>
    %79 = tpu.matmul %77, %78, %cst_42 {dimension_numbers = #tpu.dot_dimension_numbers<[1], [0], [0], [1], [0, 0, 1, 1], [], []>} : vector<4x384xf32>, vector<384x384xf32>, vector<4x384xf32> -> vector<4x384xf32>
    %c5 = arith.constant 5 : index
    %c0_43 = arith.constant 0 : index
    %80 = vector.load %arg6[%c5, %c0_43] : memref<16x384xf32, #tpu.memory_space<vmem>>, vector<1x384xf32>
    %81 = vector.broadcast %80 : vector<1x384xf32> to vector<4x384xf32>
    %82 = arith.addf %79, %81 : vector<4x384xf32>
    %cst_44 = arith.constant 0.000000e+00 : f32
    %83 = vector.broadcast %cst_44 : f32 to vector<4x384xf32>
    %84 = arith.subf %83, %82 : vector<4x384xf32>
    %85 = math.exp %84 : vector<4x384xf32>
    %cst_45 = arith.constant 1.000000e+00 : f32
    %86 = vector.broadcast %cst_45 : f32 to vector<4x384xf32>
    %87 = arith.addf %86, %85 : vector<4x384xf32>
    %88 = tpu.reciprocal %87 {approx = true} : vector<4x384xf32> -> vector<4x384xf32>
    %89 = arith.mulf %82, %88 : vector<4x384xf32>
    %c392 = arith.constant 392 : index
    %c0_46 = arith.constant 0 : index
    %90 = vector.load %arg5[%c392, %c0_46] : memref<776x384xf32, #tpu.memory_space<vmem>>, vector<384x384xf32>
    %cst_47 = arith.constant dense<0.000000e+00> : vector<4x384xf32>
    %91 = tpu.matmul %89, %90, %cst_47 {dimension_numbers = #tpu.dot_dimension_numbers<[1], [0], [0], [1], [0, 0, 1, 1], [], []>} : vector<4x384xf32>, vector<384x384xf32>, vector<4x384xf32> -> vector<4x384xf32>
    %c6 = arith.constant 6 : index
    %c0_48 = arith.constant 0 : index
    %92 = vector.load %arg6[%c6, %c0_48] : memref<16x384xf32, #tpu.memory_space<vmem>>, vector<1x384xf32>
    %93 = vector.broadcast %92 : vector<1x384xf32> to vector<4x384xf32>
    %94 = arith.addf %91, %93 : vector<4x384xf32>
    %95 = vector.extract_strided_slice %94 {offsets = [0, 0], sizes = [4, 192], strides = [1, 1]} : vector<4x384xf32> to vector<4x192xf32>
    %96 = vector.extract_strided_slice %94 {offsets = [0, 192], sizes = [4, 192], strides = [1, 1]} : vector<4x384xf32> to vector<4x192xf32>
    %97 = arith.mulf %65, %96 : vector<4x192xf32>
    %98 = arith.addf %95, %97 : vector<4x192xf32>
    %c336 = arith.constant 336 : index
    %c0_49 = arith.constant 0 : index
    %99 = vector.load %arg4[%c336, %c0_49] : memref<1048x192xf32, #tpu.memory_space<vmem>>, vector<192x192xf32>
    %cst_50 = arith.constant dense<0.000000e+00> : vector<4x192xf32>
    %100 = tpu.matmul %98, %99, %cst_50 {dimension_numbers = #tpu.dot_dimension_numbers<[1], [0], [0], [1], [0, 0, 1, 1], [], []>} : vector<4x192xf32>, vector<192x192xf32>, vector<4x192xf32> -> vector<4x192xf32>
    %101 = arith.subf %98, %100 : vector<4x192xf32>
    %102 = arith.mulf %101, %101 : vector<4x192xf32>
    %c336_51 = arith.constant 336 : index
    %c0_52 = arith.constant 0 : index
    %103 = vector.load %arg4[%c336_51, %c0_52] : memref<1048x192xf32, #tpu.memory_space<vmem>>, vector<192x192xf32>
    %cst_53 = arith.constant dense<0.000000e+00> : vector<4x192xf32>
    %104 = tpu.matmul %102, %103, %cst_53 {dimension_numbers = #tpu.dot_dimension_numbers<[1], [0], [0], [1], [0, 0, 1, 1], [], []>} : vector<4x192xf32>, vector<192x192xf32>, vector<4x192xf32> -> vector<4x192xf32>
    %cst_54 = arith.constant 9.99999974E-6 : f32
    %105 = vector.broadcast %cst_54 : f32 to vector<4x192xf32>
    %106 = arith.addf %104, %105 : vector<4x192xf32>
    %107 = math.rsqrt %106 : vector<4x192xf32>
    %108 = arith.mulf %101, %107 : vector<4x192xf32>
    %c528 = arith.constant 528 : index
    %c0_55 = arith.constant 0 : index
    %109 = vector.load %arg4[%c528, %c0_55] : memref<1048x192xf32, #tpu.memory_space<vmem>>, vector<192x192xf32>
    %cst_56 = arith.constant dense<0.000000e+00> : vector<4x192xf32>
    %110 = tpu.matmul %108, %109, %cst_56 {dimension_numbers = #tpu.dot_dimension_numbers<[1], [0], [0], [1], [0, 0, 1, 1], [], []>} : vector<4x192xf32>, vector<192x192xf32>, vector<4x192xf32> -> vector<4x192xf32>
    %c7 = arith.constant 7 : index
    %c0_57 = arith.constant 0 : index
    %111 = vector.load %arg6[%c7, %c0_57] : memref<16x384xf32, #tpu.memory_space<vmem>>, vector<1x192xf32>
    %112 = vector.broadcast %111 : vector<1x192xf32> to vector<4x192xf32>
    %113 = arith.addf %110, %112 : vector<4x192xf32>
    %cst_58 = arith.constant 0.000000e+00 : f32
    %114 = vector.broadcast %cst_58 : f32 to vector<4x192xf32>
    %115 = arith.subf %114, %113 : vector<4x192xf32>
    %116 = math.exp %115 : vector<4x192xf32>
    %cst_59 = arith.constant 1.000000e+00 : f32
    %117 = vector.broadcast %cst_59 : f32 to vector<4x192xf32>
    %118 = arith.addf %117, %116 : vector<4x192xf32>
    %119 = tpu.reciprocal %118 {approx = true} : vector<4x192xf32> -> vector<4x192xf32>
    %120 = arith.mulf %113, %119 : vector<4x192xf32>
    %c720 = arith.constant 720 : index
    %c0_60 = arith.constant 0 : index
    %121 = vector.load %arg4[%c720, %c0_60] : memref<1048x192xf32, #tpu.memory_space<vmem>>, vector<192x192xf32>
    %cst_61 = arith.constant dense<0.000000e+00> : vector<4x192xf32>
    %122 = tpu.matmul %120, %121, %cst_61 {dimension_numbers = #tpu.dot_dimension_numbers<[1], [0], [0], [1], [0, 0, 1, 1], [], []>} : vector<4x192xf32>, vector<192x192xf32>, vector<4x192xf32> -> vector<4x192xf32>
    %c8_62 = arith.constant 8 : index
    %c0_63 = arith.constant 0 : index
    %123 = vector.load %arg6[%c8_62, %c0_63] : memref<16x384xf32, #tpu.memory_space<vmem>>, vector<1x192xf32>
    %124 = vector.broadcast %123 : vector<1x192xf32> to vector<4x192xf32>
    %125 = arith.addf %122, %124 : vector<4x192xf32>
    %cst_64 = arith.constant 0.000000e+00 : f32
    %126 = vector.broadcast %cst_64 : f32 to vector<4x192xf32>
    %127 = arith.subf %126, %125 : vector<4x192xf32>
    %128 = math.exp %127 : vector<4x192xf32>
    %cst_65 = arith.constant 1.000000e+00 : f32
    %129 = vector.broadcast %cst_65 : f32 to vector<4x192xf32>
    %130 = arith.addf %129, %128 : vector<4x192xf32>
    %131 = tpu.reciprocal %130 {approx = true} : vector<4x192xf32> -> vector<4x192xf32>
    %132 = arith.mulf %125, %131 : vector<4x192xf32>
    %c9 = arith.constant 9 : index
    %c0_66 = arith.constant 0 : index
    %133 = vector.load %arg6[%c9, %c0_66] : memref<16x384xf32, #tpu.memory_space<vmem>>, vector<1x192xf32>
    %134 = vector.broadcast %133 : vector<1x192xf32> to vector<4x192xf32>
    %135 = arith.mulf %132, %134 : vector<4x192xf32>
    %cst_67 = arith.constant dense<0.000000e+00> : vector<4xf32>
    %136 = vector.multi_reduction <add>, %135, %cst_67 [1] : vector<4x192xf32> to vector<4xf32>
    %137 = vector.shape_cast %136 : vector<4xf32> to vector<4x1xf32>
    %c10 = arith.constant 10 : index
    %c0_68 = arith.constant 0 : index
    %138 = vector.load %arg6[%c10, %c0_68] : memref<16x384xf32, #tpu.memory_space<vmem>>, vector<1x128xf32>
    %139 = vector.broadcast %24 : vector<4x1xf32> to vector<4x128xf32>
    %140 = vector.broadcast %138 : vector<1x128xf32> to vector<4x128xf32>
    %141 = arith.mulf %139, %140 : vector<4x128xf32>
    %c912 = arith.constant 912 : index
    %c0_69 = arith.constant 0 : index
    %142 = vector.load %arg4[%c912, %c0_69] : memref<1048x192xf32, #tpu.memory_space<vmem>>, vector<4x128xf32>
    %cst_70 = arith.constant dense<0.000000e+00> : vector<4x128xf32>
    %143 = tpu.matmul %1, %142, %cst_70 {dimension_numbers = #tpu.dot_dimension_numbers<[1], [0], [0], [1], [0, 0, 1, 1], [], []>} : vector<4x4xf32>, vector<4x128xf32>, vector<4x128xf32> -> vector<4x128xf32>
    %144 = arith.addf %141, %143 : vector<4x128xf32>
    %c11 = arith.constant 11 : index
    %c0_71 = arith.constant 0 : index
    %145 = vector.load %arg6[%c11, %c0_71] : memref<16x384xf32, #tpu.memory_space<vmem>>, vector<1x128xf32>
    %146 = vector.broadcast %145 : vector<1x128xf32> to vector<4x128xf32>
    %147 = arith.addf %144, %146 : vector<4x128xf32>
    %cst_72 = arith.constant 0.000000e+00 : f32
    %148 = vector.broadcast %cst_72 : f32 to vector<4x128xf32>
    %149 = arith.subf %148, %147 : vector<4x128xf32>
    %150 = math.exp %149 : vector<4x128xf32>
    %cst_73 = arith.constant 1.000000e+00 : f32
    %151 = vector.broadcast %cst_73 : f32 to vector<4x128xf32>
    %152 = arith.addf %151, %150 : vector<4x128xf32>
    %153 = tpu.reciprocal %152 {approx = true} : vector<4x128xf32> -> vector<4x128xf32>
    %154 = arith.mulf %147, %153 : vector<4x128xf32>
    %c920 = arith.constant 920 : index
    %c0_74 = arith.constant 0 : index
    %155 = vector.load %arg4[%c920, %c0_74] : memref<1048x192xf32, #tpu.memory_space<vmem>>, vector<128x128xf32>
    %cst_75 = arith.constant dense<0.000000e+00> : vector<4x128xf32>
    %156 = tpu.matmul %154, %155, %cst_75 {dimension_numbers = #tpu.dot_dimension_numbers<[1], [0], [0], [1], [0, 0, 1, 1], [], []>} : vector<4x128xf32>, vector<128x128xf32>, vector<4x128xf32> -> vector<4x128xf32>
    %c12 = arith.constant 12 : index
    %c0_76 = arith.constant 0 : index
    %157 = vector.load %arg6[%c12, %c0_76] : memref<16x384xf32, #tpu.memory_space<vmem>>, vector<1x128xf32>
    %158 = vector.broadcast %157 : vector<1x128xf32> to vector<4x128xf32>
    %159 = arith.addf %156, %158 : vector<4x128xf32>
    %cst_77 = arith.constant 0.000000e+00 : f32
    %160 = vector.broadcast %cst_77 : f32 to vector<4x128xf32>
    %161 = arith.subf %160, %159 : vector<4x128xf32>
    %162 = math.exp %161 : vector<4x128xf32>
    %cst_78 = arith.constant 1.000000e+00 : f32
    %163 = vector.broadcast %cst_78 : f32 to vector<4x128xf32>
    %164 = arith.addf %163, %162 : vector<4x128xf32>
    %165 = tpu.reciprocal %164 {approx = true} : vector<4x128xf32> -> vector<4x128xf32>
    %166 = arith.mulf %159, %165 : vector<4x128xf32>
    %c13 = arith.constant 13 : index
    %c0_79 = arith.constant 0 : index
    %167 = vector.load %arg6[%c13, %c0_79] : memref<16x384xf32, #tpu.memory_space<vmem>>, vector<1x128xf32>
    %168 = vector.broadcast %167 : vector<1x128xf32> to vector<4x128xf32>
    %169 = arith.mulf %166, %168 : vector<4x128xf32>
    %cst_80 = arith.constant dense<0.000000e+00> : vector<4xf32>
    %170 = vector.multi_reduction <add>, %169, %cst_80 [1] : vector<4x128xf32> to vector<4xf32>
    %171 = vector.shape_cast %170 : vector<4xf32> to vector<4x1xf32>
    %172 = tpu.iota {dimensions = array<i32: 0>} : vector<4x1xi32>
    %c2_i32 = arith.constant 2 : i32
    %173 = vector.broadcast %c2_i32 : i32 to vector<4x1xi32>
    %174 = arith.cmpi slt, %172, %173 : vector<4x1xi32>
    %cst_81 = arith.constant 1.000000e+00 : f32
    %cst_82 = arith.constant -1.000000e+00 : f32
    %175 = vector.broadcast %cst_81 : f32 to vector<4x1xf32>
    %176 = vector.broadcast %cst_82 : f32 to vector<4x1xf32>
    %177 = arith.select %174, %175, %176 : vector<4x1xi1>, vector<4x1xf32>
    %178 = arith.addf %137, %171 : vector<4x1xf32>
    %179 = arith.mulf %177, %178 : vector<4x1xf32>
    %180 = vector.shape_cast %179 : vector<4x1xf32> to vector<1x4x1xf32>
    %cst_83 = arith.constant dense<0.000000e+00> : vector<1xf32>
    %181 = vector.multi_reduction <add>, %180, %cst_83 [1, 2] : vector<1x4x1xf32> to vector<1xf32>
    %182 = vector.shape_cast %181 : vector<1xf32> to vector<1x1x1xf32>
    %183 = vector.extract %182[0, 0, 0] : f32 from vector<1x1x1xf32>
    %cst_84 = arith.constant 0.000000e+00 : f32
    %184 = arith.subf %cst_84, %183 : f32
    %cst_85 = arith.constant 8.000000e+00 : f32
    %185 = arith.divf %184, %cst_85 : f32
    %186 = vector.broadcast %185 : f32 to vector<1x128xf32>
    %c0_86 = arith.constant 0 : index
    %c0_87 = arith.constant 0 : index
    %187 = vector.load %arg7[%c0_86, %c0_87] : memref<1x128xf32, #tpu.memory_space<vmem>>, vector<1x128xf32>
    tpu.vector_store %arg7[%c0_86, %c0_87], %186 {strides = array<i32>} : memref<1x128xf32, #tpu.memory_space<vmem>>, vector<1x128xf32>,
    return
  }
}

</mosaic_0001>

<llo_original>
// kernel: step.1
$region0: #{step.1}
  #allocation0 [shape = 'u32[]', space=smem, size = 0x4, offset = 0x4, fixed_abs, tag = 'smem constant byte address 0x4 - core index']
  #allocation1 [shape = 'u32[144,128]{1,0:T(1,128)}', space=vmem, size = 0x12000, scoped, tag = 'internal scratch']
  %s0 = inlined_call_operand.vmem [shape: f32[4,4096], index: 0, kind: input, shape index: {}]
  %s1 = inlined_call_operand.vmem [shape: f32[4,4], index: 1, kind: input, shape index: {}]
  %s2 = inlined_call_operand.vmem [shape: f32[4096,64], index: 2, kind: input, shape index: {}]
  %s3 = inlined_call_operand.vmem [shape: f32[64,64], index: 3, kind: input, shape index: {}]
  %s4 = inlined_call_operand.vmem [shape: f32[1048,192], index: 4, kind: input, shape index: {}]
  %s5 = inlined_call_operand.vmem [shape: f32[776,384], index: 5, kind: input, shape index: {}]
  %s6 = inlined_call_operand.vmem [shape: f32[16,384], index: 6, kind: input, shape index: {}]
  %s7 = inlined_call_operand.hbm [shape: f32[1,128], index: 7, kind: output, shape index: {}]
  %s8 = sld [smem:[#allocation0]]
  $region38: #{step.1} parent=0
    _
  %s10 = ssub.s32 1, %s8
  %s11 = scalar_select 0, %s10, %s8
  $region1: #{step.1} parent=0
    #allocation2 [shape = 'u8[512]{0}', space=vmem, size = 0x400, scoped, tag = 'output window, operand 0, single buffered']
    #allocation3 [shape = 's32[1]{0}', space=sflag, size = 0x4, scoped, tag = 'scoped memory for step.1']
    %12 = vsyncpa [#allocation3], 0
    // Predicated region
    $region2: #{step.1} parent=1 // pred_check
      _
    $region3: #{step.1} parent=1 // pred_check_branch
      %14 = sbr.rel (0) target = $region5
    $region4: #{step.1} parent=1 // pred_region
      _
    $region5: #{step.1} parent=1 // pred_fallthru
      _
    // Predicated region
    $region6: #{step.1} parent=1 // pred_check
      _
    $region7: #{step.1} parent=1 // pred_check_branch
      %16 = sbr.rel (0) target = $region9
    $region8: #{step.1} parent=1 // pred_region
      _
    $region9: #{step.1} parent=1 // pred_fallthru
      _
    // Predicated region
    $region10: #{step.1} parent=1 // pred_check
      _
    $region11: #{step.1} parent=1 // pred_check_branch
      %18 = sbr.rel (0) target = $region13
    $region12: #{step.1} parent=1 // pred_region
      _
    $region13: #{step.1} parent=1 // pred_fallthru
      _
    // Predicated region
    $region14: #{step.1} parent=1 // pred_check
      _
    $region15: #{step.1} parent=1 // pred_check_branch
      %20 = sbr.rel (0) target = $region17
    $region16: #{step.1} parent=1 // pred_region
      _
    $region17: #{step.1} parent=1 // pred_fallthru
      _
    // Predicated region
    $region18: #{step.1} parent=1 // pred_check
      _
    $region19: #{step.1} parent=1 // pred_check_branch
      %22 = sbr.rel (0) target = $region21
    $region20: #{step.1} parent=1 // pred_region
      _
    $region21: #{step.1} parent=1 // pred_fallthru
      _
    // Predicated region
    $region22: #{step.1} parent=1 // pred_check
      _
    $region23: #{step.1} parent=1 // pred_check_branch
      %24 = sbr.rel (0) target = $region25
    $region24: #{step.1} parent=1 // pred_region
      _
    $region25: #{step.1} parent=1 // pred_fallthru
      _
    // Predicated region
    $region26: #{step.1} parent=1 // pred_check
      _
    $region27: #{step.1} parent=1 // pred_check_branch
      %26 = sbr.rel (0) target = $region29
    $region28: #{step.1} parent=1 // pred_region
      _
    $region29: #{step.1} parent=1 // pred_fallthru
      _
    %v27 = vld [vmem:[%s0] sm:$0xff]
    %v28 = vld [vmem:[%s0 + $0x8] sm:$0xff]
    %v29 = vld [vmem:[%s0 + $0x10] sm:$0xff]
    %v30 = vld [vmem:[%s0 + $0x18] sm:$0xff]
    %v31 = vld [vmem:[%s0 + $0x20] sm:$0xff]
    %v32 = vld [vmem:[%s0 + $0x28] sm:$0xff]
    %v33 = vld [vmem:[%s0 + $0x30] sm:$0xff]
    %v34 = vld [vmem:[%s0 + $0x38] sm:$0xff]
    %v35 = vld [vmem:[%s0 + $0x40] sm:$0xff]
    %v36 = vld [vmem:[%s0 + $0x48] sm:$0xff]
    %v37 = vld [vmem:[%s0 + $0x50] sm:$0xff]
    %v38 = vld [vmem:[%s0 + $0x58] sm:$0xff]
    %v39 = vld [vmem:[%s0 + $0x60] sm:$0xff]
    %v40 = vld [vmem:[%s0 + $0x68] sm:$0xff]
    %v41 = vld [vmem:[%s0 + $0x70] sm:$0xff]
    %v42 = vld [vmem:[%s0 + $0x78] sm:$0xff]
    %v43 = vld [vmem:[%s1] sm:$0xf]
    %v44 = vld [vmem:[%s2] sm:$0xff]
    %v45 = vld [vmem:[%s2 + $0x8] sm:$0xff]
    %v46 = vld [vmem:[%s2 + $0x10] sm:$0xff]
    %v47 = vld [vmem:[%s2 + $0x18] sm:$0xff]
    %v48 = vld [vmem:[%s2 + $0x20] sm:$0xff]
    %v49 = vld [vmem:[%s2 + $0x28] sm:$0xff]
    %v50 = vld [vmem:[%s2 + $0x30] sm:$0xff]
    %v51 = vld [vmem:[%s2 + $0x38] sm:$0xff]
    %v52 = vld [vmem:[%s2 + $0x40] sm:$0xff]
    %v53 = vld [vmem:[%s2 + $0x48] sm:$0xff]
    %v54 = vld [vmem:[%s2 + $0x50] sm:$0xff]
    %v55 = vld [vmem:[%s2 + $0x58] sm:$0xff]
    %v56 = vld [vmem:[%s2 + $0x60] sm:$0xff]
    %v57 = vld [vmem:[%s2 + $0x68] sm:$0xff]
    %v58 = vld [vmem:[%s2 + $0x70] sm:$0xff]
    %v59 = vld [vmem:[%s2 + $0x78] sm:$0xff]
    %v60 = vld [vmem:[%s2 + $0x80] sm:$0xff]
    %v61 = vld [vmem:[%s2 + $0x88] sm:$0xff]
    %v62 = vld [vmem:[%s2 + $0x90] sm:$0xff]
    %v63 = vld [vmem:[%s2 + $0x98] sm:$0xff]
    %v64 = vld [vmem:[%s2 + $0xa0] sm:$0xff]
    %v65 = vld [vmem:[%s2 + $0xa8] sm:$0xff]
    %v66 = vld [vmem:[%s2 + $0xb0] sm:$0xff]
    %v67 = vld [vmem:[%s2 + $0xb8] sm:$0xff]
    %v68 = vld [vmem:[%s2 + $0xc0] sm:$0xff]
    %v69 = vld [vmem:[%s2 + $0xc8] sm:$0xff]
    %v70 = vld [vmem:[%s2 + $0xd0] sm:$0xff]
    %v71 = vld [vmem:[%s2 + $0xd8] sm:$0xff]
    %v72 = vld [vmem:[%s2 + $0xe0] sm:$0xff]
    %v73 = vld [vmem:[%s2 + $0xe8] sm:$0xff]
    %v74 = vld [vmem:[%s2 + $0xf0] sm:$0xff]
    %v75 = vld [vmem:[%s2 + $0xf8] sm:$0xff]
    %v76 = vld [vmem:[%s2 + $0x100] sm:$0xff]
    %v77 = vld [vmem:[%s2 + $0x108] sm:$0xff]
    %v78 = vld [vmem:[%s2 + $0x110] sm:$0xff]
    %v79 = vld [vmem:[%s2 + $0x118] sm:$0xff]
    %v80 = vld [vmem:[%s2 + $0x120] sm:$0xff]
    %v81 = vld [vmem:[%s2 + $0x128] sm:$0xff]
    %v82 = vld [vmem:[%s2 + $0x130] sm:$0xff]
    %v83 = vld [vmem:[%s2 + $0x138] sm:$0xff]
    %v84 = vld [vmem:[%s2 + $0x140] sm:$0xff]
    %v85 = vld [vmem:[%s2 + $0x148] sm:$0xff]
    %v86 = vld [vmem:[%s2 + $0x150] sm:$0xff]
    %v87 = vld [vmem:[%s2 + $0x158] sm:$0xff]
    %v88 = vld [vmem:[%s2 + $0x160] sm:$0xff]
    %v89 = vld [vmem:[%s2 + $0x168] sm:$0xff]
    %v90 = vld [vmem:[%s2 + $0x170] sm:$0xff]
    %v91 = vld [vmem:[%s2 + $0x178] sm:$0xff]
    %v92 = vld [vmem:[%s2 + $0x180] sm:$0xff]
    %v93 = vld [vmem:[%s2 + $0x188] sm:$0xff]
    %v94 = vld [vmem:[%s2 + $0x190] sm:$0xff]
    %v95 = vld [vmem:[%s2 + $0x198] sm:$0xff]
    %v96 = vld [vmem:[%s2 + $0x1a0] sm:$0xff]
    %v97 = vld [vmem:[%s2 + $0x1a8] sm:$0xff]
    %v98 = vld [vmem:[%s2 + $0x1b0] sm:$0xff]
    %v99 = vld [vmem:[%s2 + $0x1b8] sm:$0xff]
    %v100 = vld [vmem:[%s2 + $0x1c0] sm:$0xff]
    %v101 = vld [vmem:[%s2 + $0x1c8] sm:$0xff]
    %v102 = vld [vmem:[%s2 + $0x1d0] sm:$0xff]
    %v103 = vld [vmem:[%s2 + $0x1d8] sm:$0xff]
    %v104 = vld [vmem:[%s2 + $0x1e0] sm:$0xff]
    %v105 = vld [vmem:[%s2 + $0x1e8] sm:$0xff]
    %v106 = vld [vmem:[%s2 + $0x1f0] sm:$0xff]
    %v107 = vld [vmem:[%s2 + $0x1f8] sm:$0xff]
    %v108 = vld [vmem:[%s2 + $0x200] sm:$0xff]
    %v109 = vld [vmem:[%s2 + $0x208] sm:$0xff]
    %v110 = vld [vmem:[%s2 + $0x210] sm:$0xff]
    %v111 = vld [vmem:[%s2 + $0x218] sm:$0xff]
    %v112 = vld [vmem:[%s2 + $0x220] sm:$0xff]
    %v113 = vld [vmem:[%s2 + $0x228] sm:$0xff]
    %v114 = vld [vmem:[%s2 + $0x230] sm:$0xff]
    %v115 = vld [vmem:[%s2 + $0x238] sm:$0xff]
    %v116 = vld [vmem:[%s2 + $0x240] sm:$0xff]
    %v117 = vld [vmem:[%s2 + $0x248] sm:$0xff]
    %v118 = vld [vmem:[%s2 + $0x250] sm:$0xff]
    %v119 = vld [vmem:[%s2 + $0x258] sm:$0xff]
    %v120 = vld [vmem:[%s2 + $0x260] sm:$0xff]
    %v121 = vld [vmem:[%s2 + $0x268] sm:$0xff]
    %v122 = vld [vmem:[%s2 + $0x270] sm:$0xff]
    %v123 = vld [vmem:[%s2 + $0x278] sm:$0xff]
    %v124 = vld [vmem:[%s2 + $0x280] sm:$0xff]
    %v125 = vld [vmem:[%s2 + $0x288] sm:$0xff]
    %v126 = vld [vmem:[%s2 + $0x290] sm:$0xff]
    %v127 = vld [vmem:[%s2 + $0x298] sm:$0xff]
    %v128 = vld [vmem:[%s2 + $0x2a0] sm:$0xff]
    %v129 = vld [vmem:[%s2 + $0x2a8] sm:$0xff]
    %v130 = vld [vmem:[%s2 + $0x2b0] sm:$0xff]
    %v131 = vld [vmem:[%s2 + $0x2b8] sm:$0xff]
    %v132 = vld [vmem:[%s2 + $0x2c0] sm:$0xff]
    %v133 = vld [vmem:[%s2 + $0x2c8] sm:$0xff]
    %v134 = vld [vmem:[%s2 + $0x2d0] sm:$0xff]
    %v135 = vld [vmem:[%s2 + $0x2d8] sm:$0xff]
    %v136 = vld [vmem:[%s2 + $0x2e0] sm:$0xff]
    %v137 = vld [vmem:[%s2 + $0x2e8] sm:$0xff]
    %v138 = vld [vmem:[%s2 + $0x2f0] sm:$0xff]
    %v139 = vld [vmem:[%s2 + $0x2f8] sm:$0xff]
    %v140 = vld [vmem:[%s2 + $0x300] sm:$0xff]
    %v141 = vld [vmem:[%s2 + $0x308] sm:$0xff]
    %v142 = vld [vmem:[%s2 + $0x310] sm:$0xff]
    %v143 = vld [vmem:[%s2 + $0x318] sm:$0xff]
    %v144 = vld [vmem:[%s2 + $0x320] sm:$0xff]
    %v145 = vld [vmem:[%s2 + $0x328] sm:$0xff]
    %v146 = vld [vmem:[%s2 + $0x330] sm:$0xff]
    %v147 = vld [vmem:[%s2 + $0x338] sm:$0xff]
    %v148 = vld [vmem:[%s2 + $0x340] sm:$0xff]
    %v149 = vld [vmem:[%s2 + $0x348] sm:$0xff]
    %v150 = vld [vmem:[%s2 + $0x350] sm:$0xff]
    %v151 = vld [vmem:[%s2 + $0x358] sm:$0xff]
    %v152 = vld [vmem:[%s2 + $0x360] sm:$0xff]
    %v153 = vld [vmem:[%s2 + $0x368] sm:$0xff]
    %v154 = vld [vmem:[%s2 + $0x370] sm:$0xff]
    %v155 = vld [vmem:[%s2 + $0x378] sm:$0xff]
    %v156 = vld [vmem:[%s2 + $0x380] sm:$0xff]
    %v157 = vld [vmem:[%s2 + $0x388] sm:$0xff]
    %v158 = vld [vmem:[%s2 + $0x390] sm:$0xff]
    %v159 = vld [vmem:[%s2 + $0x398] sm:$0xff]
    %v160 = vld [vmem:[%s2 + $0x3a0] sm:$0xff]
    %v161 = vld [vmem:[%s2 + $0x3a8] sm:$0xff]
    %v162 = vld [vmem:[%s2 + $0x3b0] sm:$0xff]
    %v163 = vld [vmem:[%s2 + $0x3b8] sm:$0xff]
    %v164 = vld [vmem:[%s2 + $0x3c0] sm:$0xff]
    %v165 = vld [vmem:[%s2 + $0x3c8] sm:$0xff]
    %v166 = vld [vmem:[%s2 + $0x3d0] sm:$0xff]
    %v167 = vld [vmem:[%s2 + $0x3d8] sm:$0xff]
    %v168 = vld [vmem:[%s2 + $0x3e0] sm:$0xff]
    %v169 = vld [vmem:[%s2 + $0x3e8] sm:$0xff]
    %v170 = vld [vmem:[%s2 + $0x3f0] sm:$0xff]
    %v171 = vld [vmem:[%s2 + $0x3f8] sm:$0xff]
    %v172 = vld [vmem:[%s2 + $0x400] sm:$0xff]
    %v173 = vld [vmem:[%s2 + $0x408] sm:$0xff]
    %v174 = vld [vmem:[%s2 + $0x410] sm:$0xff]
    %v175 = vld [vmem:[%s2 + $0x418] sm:$0xff]
    %v176 = vld [vmem:[%s2 + $0x420] sm:$0xff]
    %v177 = vld [vmem:[%s2 + $0x428] sm:$0xff]
    %v178 = vld [vmem:[%s2 + $0x430] sm:$0xff]
    %v179 = vld [vmem:[%s2 + $0x438] sm:$0xff]
    %v180 = vld [vmem:[%s2 + $0x440] sm:$0xff]
    %v181 = vld [vmem:[%s2 + $0x448] sm:$0xff]
    %v182 = vld [vmem:[%s2 + $0x450] sm:$0xff]
    %v183 = vld [vmem:[%s2 + $0x458] sm:$0xff]
    %v184 = vld [vmem:[%s2 + $0x460] sm:$0xff]
    %v185 = vld [vmem:[%s2 + $0x468] sm:$0xff]
    %v186 = vld [vmem:[%s2 + $0x470] sm:$0xff]
    %v187 = vld [vmem:[%s2 + $0x478] sm:$0xff]
    %v188 = vld [vmem:[%s2 + $0x480] sm:$0xff]
    %v189 = vld [vmem:[%s2 + $0x488] sm:$0xff]
    %v190 = vld [vmem:[%s2 + $0x490] sm:$0xff]
    %v191 = vld [vmem:[%s2 + $0x498] sm:$0xff]
    %v192 = vld [vmem:[%s2 + $0x4a0] sm:$0xff]
    %v193 = vld [vmem:[%s2 + $0x4a8] sm:$0xff]
    %v194 = vld [vmem:[%s2 + $0x4b0] sm:$0xff]
    %v195 = vld [vmem:[%s2 + $0x4b8] sm:$0xff]
    %v196 = vld [vmem:[%s2 + $0x4c0] sm:$0xff]
    %v197 = vld [vmem:[%s2 + $0x4c8] sm:$0xff]
    %v198 = vld [vmem:[%s2 + $0x4d0] sm:$0xff]
    %v199 = vld [vmem:[%s2 + $0x4d8] sm:$0xff]
    %v200 = vld [vmem:[%s2 + $0x4e0] sm:$0xff]
    %v201 = vld [vmem:[%s2 + $0x4e8] sm:$0xff]
    %v202 = vld [vmem:[%s2 + $0x4f0] sm:$0xff]
    %v203 = vld [vmem:[%s2 + $0x4f8] sm:$0xff]
    %v204 = vld [vmem:[%s2 + $0x500] sm:$0xff]
    %v205 = vld [vmem:[%s2 + $0x508] sm:$0xff]
    %v206 = vld [vmem:[%s2 + $0x510] sm:$0xff]
    %v207 = vld [vmem:[%s2 + $0x518] sm:$0xff]
    %v208 = vld [vmem:[%s2 + $0x520] sm:$0xff]
    %v209 = vld [vmem:[%s2 + $0x528] sm:$0xff]
    %v210 = vld [vmem:[%s2 + $0x530] sm:$0xff]
    %v211 = vld [vmem:[%s2 + $0x538] sm:$0xff]
    %v212 = vld [vmem:[%s2 + $0x540] sm:$0xff]
    %v213 = vld [vmem:[%s2 + $0x548] sm:$0xff]
    %v214 = vld [vmem:[%s2 + $0x550] sm:$0xff]
    %v215 = vld [vmem:[%s2 + $0x558] sm:$0xff]
    %v216 = vld [vmem:[%s2 + $0x560] sm:$0xff]
    %v217 = vld [vmem:[%s2 + $0x568] sm:$0xff]
    %v218 = vld [vmem:[%s2 + $0x570] sm:$0xff]
    %v219 = vld [vmem:[%s2 + $0x578] sm:$0xff]
    %v220 = vld [vmem:[%s2 + $0x580] sm:$0xff]
    %v221 = vld [vmem:[%s2 + $0x588] sm:$0xff]
    %v222 = vld [vmem:[%s2 + $0x590] sm:$0xff]
    %v223 = vld [vmem:[%s2 + $0x598] sm:$0xff]
    %v224 = vld [vmem:[%s2 + $0x5a0] sm:$0xff]
    %v225 = vld [vmem:[%s2 + $0x5a8] sm:$0xff]
    %v226 = vld [vmem:[%s2 + $0x5b0] sm:$0xff]
    %v227 = vld [vmem:[%s2 + $0x5b8] sm:$0xff]
    %v228 = vld [vmem:[%s2 + $0x5c0] sm:$0xff]
    %v229 = vld [vmem:[%s2 + $0x5c8] sm:$0xff]
    %v230 = vld [vmem:[%s2 + $0x5d0] sm:$0xff]
    %v231 = vld [vmem:[%s2 + $0x5d8] sm:$0xff]
    %v232 = vld [vmem:[%s2 + $0x5e0] sm:$0xff]
    %v233 = vld [vmem:[%s2 + $0x5e8] sm:$0xff]
    %v234 = vld [vmem:[%s2 + $0x5f0] sm:$0xff]
    %v235 = vld [vmem:[%s2 + $0x5f8] sm:$0xff]
    %v236 = vld [vmem:[%s2 + $0x600] sm:$0xff]
    %v237 = vld [vmem:[%s2 + $0x608] sm:$0xff]
    %v238 = vld [vmem:[%s2 + $0x610] sm:$0xff]
    %v239 = vld [vmem:[%s2 + $0x618] sm:$0xff]
    %v240 = vld [vmem:[%s2 + $0x620] sm:$0xff]
    %v241 = vld [vmem:[%s2 + $0x628] sm:$0xff]
    %v242 = vld [vmem:[%s2 + $0x630] sm:$0xff]
    %v243 = vld [vmem:[%s2 + $0x638] sm:$0xff]
    %v244 = vld [vmem:[%s2 + $0x640] sm:$0xff]
    %v245 = vld [vmem:[%s2 + $0x648] sm:$0xff]
    %v246 = vld [vmem:[%s2 + $0x650] sm:$0xff]
    %v247 = vld [vmem:[%s2 + $0x658] sm:$0xff]
    %v248 = vld [vmem:[%s2 + $0x660] sm:$0xff]
    %v249 = vld [vmem:[%s2 + $0x668] sm:$0xff]
    %v250 = vld [vmem:[%s2 + $0x670] sm:$0xff]
    %v251 = vld [vmem:[%s2 + $0x678] sm:$0xff]
    %v252 = vld [vmem:[%s2 + $0x680] sm:$0xff]
    %v253 = vld [vmem:[%s2 + $0x688] sm:$0xff]
    %v254 = vld [vmem:[%s2 + $0x690] sm:$0xff]
    %v255 = vld [vmem:[%s2 + $0x698] sm:$0xff]
    %v256 = vld [vmem:[%s2 + $0x6a0] sm:$0xff]
    %v257 = vld [vmem:[%s2 + $0x6a8] sm:$0xff]
    %v258 = vld [vmem:[%s2 + $0x6b0] sm:$0xff]
    %v259 = vld [vmem:[%s2 + $0x6b8] sm:$0xff]
    %v260 = vld [vmem:[%s2 + $0x6c0] sm:$0xff]
    %v261 = vld [vmem:[%s2 + $0x6c8] sm:$0xff]
    %v262 = vld [vmem:[%s2 + $0x6d0] sm:$0xff]
    %v263 = vld [vmem:[%s2 + $0x6d8] sm:$0xff]
    %v264 = vld [vmem:[%s2 + $0x6e0] sm:$0xff]
    %v265 = vld [vmem:[%s2 + $0x6e8] sm:$0xff]
    %v266 = vld [vmem:[%s2 + $0x6f0] sm:$0xff]
    %v267 = vld [vmem:[%s2 + $0x6f8] sm:$0xff]
    %v268 = vld [vmem:[%s2 + $0x700] sm:$0xff]
    %v269 = vld [vmem:[%s2 + $0x708] sm:$0xff]
    %v270 = vld [vmem:[%s2 + $0x710] sm:$0xff]
    %v271 = vld [vmem:[%s2 + $0x718] sm:$0xff]
    %v272 = vld [vmem:[%s2 + $0x720] sm:$0xff]
    %v273 = vld [vmem:[%s2 + $0x728] sm:$0xff]
    %v274 = vld [vmem:[%s2 + $0x730] sm:$0xff]
    %v275 = vld [vmem:[%s2 + $0x738] sm:$0xff]
    %v276 = vld [vmem:[%s2 + $0x740] sm:$0xff]
    %v277 = vld [vmem:[%s2 + $0x748] sm:$0xff]
    %v278 = vld [vmem:[%s2 + $0x750] sm:$0xff]
    %v279 = vld [vmem:[%s2 + $0x758] sm:$0xff]
    %v280 = vld [vmem:[%s2 + $0x760] sm:$0xff]
    %v281 = vld [vmem:[%s2 + $0x768] sm:$0xff]
    %v282 = vld [vmem:[%s2 + $0x770] sm:$0xff]
    %v283 = vld [vmem:[%s2 + $0x778] sm:$0xff]
    %v284 = vld [vmem:[%s2 + $0x780] sm:$0xff]
    %v285 = vld [vmem:[%s2 + $0x788] sm:$0xff]
    %v286 = vld [vmem:[%s2 + $0x790] sm:$0xff]
    %v287 = vld [vmem:[%s2 + $0x798] sm:$0xff]
    %v288 = vld [vmem:[%s2 + $0x7a0] sm:$0xff]
    %v289 = vld [vmem:[%s2 + $0x7a8] sm:$0xff]
    %v290 = vld [vmem:[%s2 + $0x7b0] sm:$0xff]
    %v291 = vld [vmem:[%s2 + $0x7b8] sm:$0xff]
    %v292 = vld [vmem:[%s2 + $0x7c0] sm:$0xff]
    %v293 = vld [vmem:[%s2 + $0x7c8] sm:$0xff]
    %v294 = vld [vmem:[%s2 + $0x7d0] sm:$0xff]
    %v295 = vld [vmem:[%s2 + $0x7d8] sm:$0xff]
    %v296 = vld [vmem:[%s2 + $0x7e0] sm:$0xff]
    %v297 = vld [vmem:[%s2 + $0x7e8] sm:$0xff]
    %v298 = vld [vmem:[%s2 + $0x7f0] sm:$0xff]
    %v299 = vld [vmem:[%s2 + $0x7f8] sm:$0xff]
    %v300 = vld [vmem:[%s2 + $0x800] sm:$0xff]
    %v301 = vld [vmem:[%s2 + $0x808] sm:$0xff]
    %v302 = vld [vmem:[%s2 + $0x810] sm:$0xff]
    %v303 = vld [vmem:[%s2 + $0x818] sm:$0xff]
    %v304 = vld [vmem:[%s2 + $0x820] sm:$0xff]
    %v305 = vld [vmem:[%s2 + $0x828] sm:$0xff]
    %v306 = vld [vmem:[%s2 + $0x830] sm:$0xff]
    %v307 = vld [vmem:[%s2 + $0x838] sm:$0xff]
    %v308 = vld [vmem:[%s2 + $0x840] sm:$0xff]
    %v309 = vld [vmem:[%s2 + $0x848] sm:$0xff]
    %v310 = vld [vmem:[%s2 + $0x850] sm:$0xff]
    %v311 = vld [vmem:[%s2 + $0x858] sm:$0xff]
    %v312 = vld [vmem:[%s2 + $0x860] sm:$0xff]
    %v313 = vld [vmem:[%s2 + $0x868] sm:$0xff]
    %v314 = vld [vmem:[%s2 + $0x870] sm:$0xff]
    %v315 = vld [vmem:[%s2 + $0x878] sm:$0xff]
    %v316 = vld [vmem:[%s2 + $0x880] sm:$0xff]
    %v317 = vld [vmem:[%s2 + $0x888] sm:$0xff]
    %v318 = vld [vmem:[%s2 + $0x890] sm:$0xff]
    %v319 = vld [vmem:[%s2 + $0x898] sm:$0xff]
    %v320 = vld [vmem:[%s2 + $0x8a0] sm:$0xff]
    %v321 = vld [vmem:[%s2 + $0x8a8] sm:$0xff]
    %v322 = vld [vmem:[%s2 + $0x8b0] sm:$0xff]
    %v323 = vld [vmem:[%s2 + $0x8b8] sm:$0xff]
    %v324 = vld [vmem:[%s2 + $0x8c0] sm:$0xff]
    %v325 = vld [vmem:[%s2 + $0x8c8] sm:$0xff]
    %v326 = vld [vmem:[%s2 + $0x8d0] sm:$0xff]
    %v327 = vld [vmem:[%s2 + $0x8d8] sm:$0xff]
    %v328 = vld [vmem:[%s2 + $0x8e0] sm:$0xff]
    %v329 = vld [vmem:[%s2 + $0x8e8] sm:$0xff]
    %v330 = vld [vmem:[%s2 + $0x8f0] sm:$0xff]
    %v331 = vld [vmem:[%s2 + $0x8f8] sm:$0xff]
    %v332 = vld [vmem:[%s2 + $0x900] sm:$0xff]
    %v333 = vld [vmem:[%s2 + $0x908] sm:$0xff]
    %v334 = vld [vmem:[%s2 + $0x910] sm:$0xff]
    %v335 = vld [vmem:[%s2 + $0x918] sm:$0xff]
    %v336 = vld [vmem:[%s2 + $0x920] sm:$0xff]
    %v337 = vld [vmem:[%s2 + $0x928] sm:$0xff]
    %v338 = vld [vmem:[%s2 + $0x930] sm:$0xff]
    %v339 = vld [vmem:[%s2 + $0x938] sm:$0xff]
    %v340 = vld [vmem:[%s2 + $0x940] sm:$0xff]
    %v341 = vld [vmem:[%s2 + $0x948] sm:$0xff]
    %v342 = vld [vmem:[%s2 + $0x950] sm:$0xff]
    %v343 = vld [vmem:[%s2 + $0x958] sm:$0xff]
    %v344 = vld [vmem:[%s2 + $0x960] sm:$0xff]
    %v345 = vld [vmem:[%s2 + $0x968] sm:$0xff]
    %v346 = vld [vmem:[%s2 + $0x970] sm:$0xff]
    %v347 = vld [vmem:[%s2 + $0x978] sm:$0xff]
    %v348 = vld [vmem:[%s2 + $0x980] sm:$0xff]
    %v349 = vld [vmem:[%s2 + $0x988] sm:$0xff]
    %v350 = vld [vmem:[%s2 + $0x990] sm:$0xff]
    %v351 = vld [vmem:[%s2 + $0x998] sm:$0xff]
    %v352 = vld [vmem:[%s2 + $0x9a0] sm:$0xff]
    %v353 = vld [vmem:[%s2 + $0x9a8] sm:$0xff]
    %v354 = vld [vmem:[%s2 + $0x9b0] sm:$0xff]
    %v355 = vld [vmem:[%s2 + $0x9b8] sm:$0xff]
    %v356 = vld [vmem:[%s2 + $0x9c0] sm:$0xff]
    %v357 = vld [vmem:[%s2 + $0x9c8] sm:$0xff]
    %v358 = vld [vmem:[%s2 + $0x9d0] sm:$0xff]
    %v359 = vld [vmem:[%s2 + $0x9d8] sm:$0xff]
    %v360 = vld [vmem:[%s2 + $0x9e0] sm:$0xff]
    %v361 = vld [vmem:[%s2 + $0x9e8] sm:$0xff]
    %v362 = vld [vmem:[%s2 + $0x9f0] sm:$0xff]
    %v363 = vld [vmem:[%s2 + $0x9f8] sm:$0xff]
    %v364 = vld [vmem:[%s2 + $0xa00] sm:$0xff]
    %v365 = vld [vmem:[%s2 + $0xa08] sm:$0xff]
    %v366 = vld [vmem:[%s2 + $0xa10] sm:$0xff]
    %v367 = vld [vmem:[%s2 + $0xa18] sm:$0xff]
    %v368 = vld [vmem:[%s2 + $0xa20] sm:$0xff]
    %v369 = vld [vmem:[%s2 + $0xa28] sm:$0xff]
    %v370 = vld [vmem:[%s2 + $0xa30] sm:$0xff]
    %v371 = vld [vmem:[%s2 + $0xa38] sm:$0xff]
    %v372 = vld [vmem:[%s2 + $0xa40] sm:$0xff]
    %v373 = vld [vmem:[%s2 + $0xa48] sm:$0xff]
    %v374 = vld [vmem:[%s2 + $0xa50] sm:$0xff]
    %v375 = vld [vmem:[%s2 + $0xa58] sm:$0xff]
    %v376 = vld [vmem:[%s2 + $0xa60] sm:$0xff]
    %v377 = vld [vmem:[%s2 + $0xa68] sm:$0xff]
    %v378 = vld [vmem:[%s2 + $0xa70] sm:$0xff]
    %v379 = vld [vmem:[%s2 + $0xa78] sm:$0xff]
    %v380 = vld [vmem:[%s2 + $0xa80] sm:$0xff]
    %v381 = vld [vmem:[%s2 + $0xa88] sm:$0xff]
    %v382 = vld [vmem:[%s2 + $0xa90] sm:$0xff]
    %v383 = vld [vmem:[%s2 + $0xa98] sm:$0xff]
    %v384 = vld [vmem:[%s2 + $0xaa0] sm:$0xff]
    %v385 = vld [vmem:[%s2 + $0xaa8] sm:$0xff]
    %v386 = vld [vmem:[%s2 + $0xab0] sm:$0xff]
    %v387 = vld [vmem:[%s2 + $0xab8] sm:$0xff]
    %v388 = vld [vmem:[%s2 + $0xac0] sm:$0xff]
    %v389 = vld [vmem:[%s2 + $0xac8] sm:$0xff]
    %v390 = vld [vmem:[%s2 + $0xad0] sm:$0xff]
    %v391 = vld [vmem:[%s2 + $0xad8] sm:$0xff]
    %v392 = vld [vmem:[%s2 + $0xae0] sm:$0xff]
    %v393 = vld [vmem:[%s2 + $0xae8] sm:$0xff]
    %v394 = vld [vmem:[%s2 + $0xaf0] sm:$0xff]
    %v395 = vld [vmem:[%s2 + $0xaf8] sm:$0xff]
    %v396 = vld [vmem:[%s2 + $0xb00] sm:$0xff]
    %v397 = vld [vmem:[%s2 + $0xb08] sm:$0xff]
    %v398 = vld [vmem:[%s2 + $0xb10] sm:$0xff]
    %v399 = vld [vmem:[%s2 + $0xb18] sm:$0xff]
    %v400 = vld [vmem:[%s2 + $0xb20] sm:$0xff]
    %v401 = vld [vmem:[%s2 + $0xb28] sm:$0xff]
    %v402 = vld [vmem:[%s2 + $0xb30] sm:$0xff]
    %v403 = vld [vmem:[%s2 + $0xb38] sm:$0xff]
    %v404 = vld [vmem:[%s2 + $0xb40] sm:$0xff]
    %v405 = vld [vmem:[%s2 + $0xb48] sm:$0xff]
    %v406 = vld [vmem:[%s2 + $0xb50] sm:$0xff]
    %v407 = vld [vmem:[%s2 + $0xb58] sm:$0xff]
    %v408 = vld [vmem:[%s2 + $0xb60] sm:$0xff]
    %v409 = vld [vmem:[%s2 + $0xb68] sm:$0xff]
    %v410 = vld [vmem:[%s2 + $0xb70] sm:$0xff]
    %v411 = vld [vmem:[%s2 + $0xb78] sm:$0xff]
    %v412 = vld [vmem:[%s2 + $0xb80] sm:$0xff]
    %v413 = vld [vmem:[%s2 + $0xb88] sm:$0xff]
    %v414 = vld [vmem:[%s2 + $0xb90] sm:$0xff]
    %v415 = vld [vmem:[%s2 + $0xb98] sm:$0xff]
    %v416 = vld [vmem:[%s2 + $0xba0] sm:$0xff]
    %v417 = vld [vmem:[%s2 + $0xba8] sm:$0xff]
    %v418 = vld [vmem:[%s2 + $0xbb0] sm:$0xff]
    %v419 = vld [vmem:[%s2 + $0xbb8] sm:$0xff]
    %v420 = vld [vmem:[%s2 + $0xbc0] sm:$0xff]
    %v421 = vld [vmem:[%s2 + $0xbc8] sm:$0xff]
    %v422 = vld [vmem:[%s2 + $0xbd0] sm:$0xff]
    %v423 = vld [vmem:[%s2 + $0xbd8] sm:$0xff]
    %v424 = vld [vmem:[%s2 + $0xbe0] sm:$0xff]
    %v425 = vld [vmem:[%s2 + $0xbe8] sm:$0xff]
    %v426 = vld [vmem:[%s2 + $0xbf0] sm:$0xff]
    %v427 = vld [vmem:[%s2 + $0xbf8] sm:$0xff]
    %v428 = vld [vmem:[%s2 + $0xc00] sm:$0xff]
    %v429 = vld [vmem:[%s2 + $0xc08] sm:$0xff]
    %v430 = vld [vmem:[%s2 + $0xc10] sm:$0xff]
    %v431 = vld [vmem:[%s2 + $0xc18] sm:$0xff]
    %v432 = vld [vmem:[%s2 + $0xc20] sm:$0xff]
    %v433 = vld [vmem:[%s2 + $0xc28] sm:$0xff]
    %v434 = vld [vmem:[%s2 + $0xc30] sm:$0xff]
    %v435 = vld [vmem:[%s2 + $0xc38] sm:$0xff]
    %v436 = vld [vmem:[%s2 + $0xc40] sm:$0xff]
    %v437 = vld [vmem:[%s2 + $0xc48] sm:$0xff]
    %v438 = vld [vmem:[%s2 + $0xc50] sm:$0xff]
    %v439 = vld [vmem:[%s2 + $0xc58] sm:$0xff]
    %v440 = vld [vmem:[%s2 + $0xc60] sm:$0xff]
    %v441 = vld [vmem:[%s2 + $0xc68] sm:$0xff]
    %v442 = vld [vmem:[%s2 + $0xc70] sm:$0xff]
    %v443 = vld [vmem:[%s2 + $0xc78] sm:$0xff]
    %v444 = vld [vmem:[%s2 + $0xc80] sm:$0xff]
    %v445 = vld [vmem:[%s2 + $0xc88] sm:$0xff]
    %v446 = vld [vmem:[%s2 + $0xc90] sm:$0xff]
    %v447 = vld [vmem:[%s2 + $0xc98] sm:$0xff]
    %v448 = vld [vmem:[%s2 + $0xca0] sm:$0xff]
    %v449 = vld [vmem:[%s2 + $0xca8] sm:$0xff]
    %v450 = vld [vmem:[%s2 + $0xcb0] sm:$0xff]
    %v451 = vld [vmem:[%s2 + $0xcb8] sm:$0xff]
    %v452 = vld [vmem:[%s2 + $0xcc0] sm:$0xff]
    %v453 = vld [vmem:[%s2 + $0xcc8] sm:$0xff]
    %v454 = vld [vmem:[%s2 + $0xcd0] sm:$0xff]
    %v455 = vld [vmem:[%s2 + $0xcd8] sm:$0xff]
    %v456 = vld [vmem:[%s2 + $0xce0] sm:$0xff]
    %v457 = vld [vmem:[%s2 + $0xce8] sm:$0xff]
    %v458 = vld [vmem:[%s2 + $0xcf0] sm:$0xff]
    %v459 = vld [vmem:[%s2 + $0xcf8] sm:$0xff]
    %v460 = vld [vmem:[%s2 + $0xd00] sm:$0xff]
    %v461 = vld [vmem:[%s2 + $0xd08] sm:$0xff]
    %v462 = vld [vmem:[%s2 + $0xd10] sm:$0xff]
    %v463 = vld [vmem:[%s2 + $0xd18] sm:$0xff]
    %v464 = vld [vmem:[%s2 + $0xd20] sm:$0xff]
    %v465 = vld [vmem:[%s2 + $0xd28] sm:$0xff]
    %v466 = vld [vmem:[%s2 + $0xd30] sm:$0xff]
    %v467 = vld [vmem:[%s2 + $0xd38] sm:$0xff]
    %v468 = vld [vmem:[%s2 + $0xd40] sm:$0xff]
    %v469 = vld [vmem:[%s2 + $0xd48] sm:$0xff]
    %v470 = vld [vmem:[%s2 + $0xd50] sm:$0xff]
    %v471 = vld [vmem:[%s2 + $0xd58] sm:$0xff]
    %v472 = vld [vmem:[%s2 + $0xd60] sm:$0xff]
    %v473 = vld [vmem:[%s2 + $0xd68] sm:$0xff]
    %v474 = vld [vmem:[%s2 + $0xd70] sm:$0xff]
    %v475 = vld [vmem:[%s2 + $0xd78] sm:$0xff]
    %v476 = vld [vmem:[%s2 + $0xd80] sm:$0xff]
    %v477 = vld [vmem:[%s2 + $0xd88] sm:$0xff]
    %v478 = vld [vmem:[%s2 + $0xd90] sm:$0xff]
    %v479 = vld [vmem:[%s2 + $0xd98] sm:$0xff]
    %v480 = vld [vmem:[%s2 + $0xda0] sm:$0xff]
    %v481 = vld [vmem:[%s2 + $0xda8] sm:$0xff]
    %v482 = vld [vmem:[%s2 + $0xdb0] sm:$0xff]
    %v483 = vld [vmem:[%s2 + $0xdb8] sm:$0xff]
    %v484 = vld [vmem:[%s2 + $0xdc0] sm:$0xff]
    %v485 = vld [vmem:[%s2 + $0xdc8] sm:$0xff]
    %v486 = vld [vmem:[%s2 + $0xdd0] sm:$0xff]
    %v487 = vld [vmem:[%s2 + $0xdd8] sm:$0xff]
    %v488 = vld [vmem:[%s2 + $0xde0] sm:$0xff]
    %v489 = vld [vmem:[%s2 + $0xde8] sm:$0xff]
    %v490 = vld [vmem:[%s2 + $0xdf0] sm:$0xff]
    %v491 = vld [vmem:[%s2 + $0xdf8] sm:$0xff]
    %v492 = vld [vmem:[%s2 + $0xe00] sm:$0xff]
    %v493 = vld [vmem:[%s2 + $0xe08] sm:$0xff]
    %v494 = vld [vmem:[%s2 + $0xe10] sm:$0xff]
    %v495 = vld [vmem:[%s2 + $0xe18] sm:$0xff]
    %v496 = vld [vmem:[%s2 + $0xe20] sm:$0xff]
    %v497 = vld [vmem:[%s2 + $0xe28] sm:$0xff]
    %v498 = vld [vmem:[%s2 + $0xe30] sm:$0xff]
    %v499 = vld [vmem:[%s2 + $0xe38] sm:$0xff]
    %v500 = vld [vmem:[%s2 + $0xe40] sm:$0xff]
    %v501 = vld [vmem:[%s2 + $0xe48] sm:$0xff]
    %v502 = vld [vmem:[%s2 + $0xe50] sm:$0xff]
    %v503 = vld [vmem:[%s2 + $0xe58] sm:$0xff]
    %v504 = vld [vmem:[%s2 + $0xe60] sm:$0xff]
    %v505 = vld [vmem:[%s2 + $0xe68] sm:$0xff]
    %v506 = vld [vmem:[%s2 + $0xe70] sm:$0xff]
    %v507 = vld [vmem:[%s2 + $0xe78] sm:$0xff]
    %v508 = vld [vmem:[%s2 + $0xe80] sm:$0xff]
    %v509 = vld [vmem:[%s2 + $0xe88] sm:$0xff]
    %v510 = vld [vmem:[%s2 + $0xe90] sm:$0xff]
    %v511 = vld [vmem:[%s2 + $0xe98] sm:$0xff]
    %v512 = vld [vmem:[%s2 + $0xea0] sm:$0xff]
    %v513 = vld [vmem:[%s2 + $0xea8] sm:$0xff]
    %v514 = vld [vmem:[%s2 + $0xeb0] sm:$0xff]
    %v515 = vld [vmem:[%s2 + $0xeb8] sm:$0xff]
    %v516 = vld [vmem:[%s2 + $0xec0] sm:$0xff]
    %v517 = vld [vmem:[%s2 + $0xec8] sm:$0xff]
    %v518 = vld [vmem:[%s2 + $0xed0] sm:$0xff]
    %v519 = vld [vmem:[%s2 + $0xed8] sm:$0xff]
    %v520 = vld [vmem:[%s2 + $0xee0] sm:$0xff]
    %v521 = vld [vmem:[%s2 + $0xee8] sm:$0xff]
    %v522 = vld [vmem:[%s2 + $0xef0] sm:$0xff]
    %v523 = vld [vmem:[%s2 + $0xef8] sm:$0xff]
    %v524 = vld [vmem:[%s2 + $0xf00] sm:$0xff]
    %v525 = vld [vmem:[%s2 + $0xf08] sm:$0xff]
    %v526 = vld [vmem:[%s2 + $0xf10] sm:$0xff]
    %v527 = vld [vmem:[%s2 + $0xf18] sm:$0xff]
    %v528 = vld [vmem:[%s2 + $0xf20] sm:$0xff]
    %v529 = vld [vmem:[%s2 + $0xf28] sm:$0xff]
    %v530 = vld [vmem:[%s2 + $0xf30] sm:$0xff]
    %v531 = vld [vmem:[%s2 + $0xf38] sm:$0xff]
    %v532 = vld [vmem:[%s2 + $0xf40] sm:$0xff]
    %v533 = vld [vmem:[%s2 + $0xf48] sm:$0xff]
    %v534 = vld [vmem:[%s2 + $0xf50] sm:$0xff]
    %v535 = vld [vmem:[%s2 + $0xf58] sm:$0xff]
    %v536 = vld [vmem:[%s2 + $0xf60] sm:$0xff]
    %v537 = vld [vmem:[%s2 + $0xf68] sm:$0xff]
    %v538 = vld [vmem:[%s2 + $0xf70] sm:$0xff]
    %v539 = vld [vmem:[%s2 + $0xf78] sm:$0xff]
    %v540 = vld [vmem:[%s2 + $0xf80] sm:$0xff]
    %v541 = vld [vmem:[%s2 + $0xf88] sm:$0xff]
    %v542 = vld [vmem:[%s2 + $0xf90] sm:$0xff]
    %v543 = vld [vmem:[%s2 + $0xf98] sm:$0xff]
    %v544 = vld [vmem:[%s2 + $0xfa0] sm:$0xff]
    %v545 = vld [vmem:[%s2 + $0xfa8] sm:$0xff]
    %v546 = vld [vmem:[%s2 + $0xfb0] sm:$0xff]
    %v547 = vld [vmem:[%s2 + $0xfb8] sm:$0xff]
    %v548 = vld [vmem:[%s2 + $0xfc0] sm:$0xff]
    %v549 = vld [vmem:[%s2 + $0xfc8] sm:$0xff]
    %v550 = vld [vmem:[%s2 + $0xfd0] sm:$0xff]
    %v551 = vld [vmem:[%s2 + $0xfd8] sm:$0xff]
    %v552 = vld [vmem:[%s2 + $0xfe0] sm:$0xff]
    %v553 = vld [vmem:[%s2 + $0xfe8] sm:$0xff]
    %v554 = vld [vmem:[%s2 + $0xff0] sm:$0xff]
    %v555 = vld [vmem:[%s2 + $0xff8] sm:$0xff]
    %v572 = vcombine.high %v27, %v27
    %v573 = vcombine.high %v28, %v28
    %v574 = vcombine.high %v29, %v29
    %v575 = vcombine.high %v30, %v30
    %v576 = vcombine.high %v31, %v31
    %v577 = vcombine.high %v32, %v32
    %v578 = vcombine.high %v33, %v33
    %v579 = vcombine.high %v34, %v34
    %v580 = vcombine.high %v35, %v35
    %v581 = vcombine.high %v36, %v36
    %v582 = vcombine.high %v37, %v37
    %v583 = vcombine.high %v38, %v38
    %v584 = vcombine.high %v39, %v39
    %v585 = vcombine.high %v40, %v40
    %v586 = vcombine.high %v41, %v41
    %v587 = vcombine.high %v42, %v42
    %604 = vmatprep.subr.mxu0 0.0
    %605 = vmatpush1.msra.mxu0 %v59
    %606 = vmatprep.subr.mxu0 0.0
    %607 = vmatpush1.msra.mxu0 %v58
    %608 = vmatprep.subr.mxu0 0.0
    %609 = vmatpush1.msra.mxu0 %v57
    %610 = vmatprep.subr.mxu0 0.0
    %611 = vmatpush1.msra.mxu0 %v56
    %612 = vmatprep.subr.mxu0 0.0
    %613 = vmatpush1.msra.mxu0 %v55
    %614 = vmatprep.subr.mxu0 0.0
    %615 = vmatpush1.msra.mxu0 %v54
    %616 = vmatprep.subr.mxu0 0.0
    %617 = vmatpush1.msra.mxu0 %v53
    %618 = vmatprep.subr.mxu0 0.0
    %619 = vmatpush1.msra.mxu0 %v52
    %620 = vmatprep.subr.mxu0 0.0
    %621 = vmatpush1.msra.mxu0 %v51
    %622 = vmatprep.subr.mxu0 0.0
    %623 = vmatpush1.msra.mxu0 %v50
    %624 = vmatprep.subr.mxu0 0.0
    %625 = vmatpush1.msra.mxu0 %v49
    %626 = vmatprep.subr.mxu0 0.0
    %627 = vmatpush1.msra.mxu0 %v48
    %628 = vmatprep.subr.mxu0 0.0
    %629 = vmatpush1.msra.mxu0 %v47
    %630 = vmatprep.subr.mxu0 0.0
    %631 = vmatpush1.msra.mxu0 %v46
    %632 = vmatprep.subr.mxu0 0.0
    %633 = vmatpush1.msra.mxu0 %v45
    %634 = vmatprep.subr.mxu0 0.0
    %635 = vmatpush1.msra.mxu0 %v44
    %636 = vmatprep.subr.mxu0 0.0
    %637 = vmatpush2.msra.mxu0 %v75
    %638 = vmatprep.subr.mxu0 0.0
    %639 = vmatpush2.msra.mxu0 %v74
    %640 = vmatprep.subr.mxu0 0.0
    %641 = vmatpush2.msra.mxu0 %v73
    %642 = vmatprep.subr.mxu0 0.0
    %643 = vmatpush2.msra.mxu0 %v72
    %644 = vmatprep.subr.mxu0 0.0
    %645 = vmatpush2.msra.mxu0 %v71
    %646 = vmatprep.subr.mxu0 0.0
    %647 = vmatpush2.msra.mxu0 %v70
    %648 = vmatprep.subr.mxu0 0.0
    %649 = vmatpush2.msra.mxu0 %v69
    %650 = vmatprep.subr.mxu0 0.0
    %651 = vmatpush2.msra.mxu0 %v68
    %652 = vmatprep.subr.mxu0 0.0
    %653 = vmatpush2.msra.mxu0 %v67
    %654 = vmatprep.subr.mxu0 0.0
    %655 = vmatpush2.msra.mxu0 %v66
    %656 = vmatprep.subr.mxu0 0.0
    %657 = vmatpush2.msra.mxu0 %v65
    %658 = vmatprep.subr.mxu0 0.0
    %659 = vmatpush2.msra.mxu0 %v64
    %660 = vmatprep.subr.mxu0 0.0
    %661 = vmatpush2.msra.mxu0 %v63
    %662 = vmatprep.subr.mxu0 0.0
    %663 = vmatpush2.msra.mxu0 %v62
    %664 = vmatprep.subr.mxu0 0.0
    %665 = vmatpush2.msra.mxu0 %v61
    %666 = vmatprep.subr.mxu0 0.0
    %667 = vmatpush2.msra.mxu0 %v60
    %668 = vmatprep.mubr.f32.mxu0 %v572
    %669 = vmatmul.mubr.f32.gmra.mxu0 %v27
    %v670 = vpop.f32.mrf.mxu0
    %v671 = vadd.f32 0.0, %v670
    %v672 = vpop.f32.mrf.mxu0
    %673 = vdwg.mxu0
    %674 = vmatprep.subr.mxu0 0.0
    %675 = vmatpush1.msra.mxu0 %v91
    %676 = vmatprep.subr.mxu0 0.0
    %677 = vmatpush1.msra.mxu0 %v90
    %678 = vmatprep.subr.mxu0 0.0
    %679 = vmatpush1.msra.mxu0 %v89
    %680 = vmatprep.subr.mxu0 0.0
    %681 = vmatpush1.msra.mxu0 %v88
    %682 = vmatprep.subr.mxu0 0.0
    %683 = vmatpush1.msra.mxu0 %v87
    %684 = vmatprep.subr.mxu0 0.0
    %685 = vmatpush1.msra.mxu0 %v86
    %686 = vmatprep.subr.mxu0 0.0
    %687 = vmatpush1.msra.mxu0 %v85
    %688 = vmatprep.subr.mxu0 0.0
    %689 = vmatpush1.msra.mxu0 %v84
    %690 = vmatprep.subr.mxu0 0.0
    %691 = vmatpush1.msra.mxu0 %v83
    %692 = vmatprep.subr.mxu0 0.0
    %693 = vmatpush1.msra.mxu0 %v82
    %694 = vmatprep.subr.mxu0 0.0
    %695 = vmatpush1.msra.mxu0 %v81
    %696 = vmatprep.subr.mxu0 0.0
    %697 = vmatpush1.msra.mxu0 %v80
    %698 = vmatprep.subr.mxu0 0.0
    %699 = vmatpush1.msra.mxu0 %v79
    %700 = vmatprep.subr.mxu0 0.0
    %701 = vmatpush1.msra.mxu0 %v78
    %702 = vmatprep.subr.mxu0 0.0
    %703 = vmatpush1.msra.mxu0 %v77
    %704 = vmatprep.subr.mxu0 0.0
    %705 = vmatpush1.msra.mxu0 %v76
    %706 = vmatprep.subr.mxu0 0.0
    %707 = vmatpush2.msra.mxu0 %v107
    %708 = vmatprep.subr.mxu0 0.0
    %709 = vmatpush2.msra.mxu0 %v106
    %710 = vmatprep.subr.mxu0 0.0
    %711 = vmatpush2.msra.mxu0 %v105
    %712 = vmatprep.subr.mxu0 0.0
    %713 = vmatpush2.msra.mxu0 %v104
    %714 = vmatprep.subr.mxu0 0.0
    %715 = vmatpush2.msra.mxu0 %v103
    %716 = vmatprep.subr.mxu0 0.0
    %717 = vmatpush2.msra.mxu0 %v102
    %718 = vmatprep.subr.mxu0 0.0
    %719 = vmatpush2.msra.mxu0 %v101
    %720 = vmatprep.subr.mxu0 0.0
    %721 = vmatpush2.msra.mxu0 %v100
    %722 = vmatprep.subr.mxu0 0.0
    %723 = vmatpush2.msra.mxu0 %v99
    %724 = vmatprep.subr.mxu0 0.0
    %725 = vmatpush2.msra.mxu0 %v98
    %726 = vmatprep.subr.mxu0 0.0
    %727 = vmatpush2.msra.mxu0 %v97
    %728 = vmatprep.subr.mxu0 0.0
    %729 = vmatpush2.msra.mxu0 %v96
    %730 = vmatprep.subr.mxu0 0.0
    %731 = vmatpush2.msra.mxu0 %v95
    %732 = vmatprep.subr.mxu0 0.0
    %733 = vmatpush2.msra.mxu0 %v94
    %734 = vmatprep.subr.mxu0 0.0
    %735 = vmatpush2.msra.mxu0 %v93
    %736 = vmatprep.subr.mxu0 0.0
    %737 = vmatpush2.msra.mxu0 %v92
    %738 = vmatprep.mubr.f32.mxu0 %v573
    %739 = vmatmul.mubr.f32.gmra.mxu0 %v28
    %v740 = vpop.f32.mrf.mxu0
    %v741 = vadd.f32 %v671, %v740
    %v742 = vpop.f32.mrf.mxu0
    %743 = vdwg.mxu0
    %744 = vmatprep.subr.mxu0 0.0
    %745 = vmatpush1.msra.mxu0 %v123
    %746 = vmatprep.subr.mxu0 0.0
    %747 = vmatpush1.msra.mxu0 %v122
    %748 = vmatprep.subr.mxu0 0.0
    %749 = vmatpush1.msra.mxu0 %v121
    %750 = vmatprep.subr.mxu0 0.0
    %751 = vmatpush1.msra.mxu0 %v120
    %752 = vmatprep.subr.mxu0 0.0
    %753 = vmatpush1.msra.mxu0 %v119
    %754 = vmatprep.subr.mxu0 0.0
    %755 = vmatpush1.msra.mxu0 %v118
    %756 = vmatprep.subr.mxu0 0.0
    %757 = vmatpush1.msra.mxu0 %v117
    %758 = vmatprep.subr.mxu0 0.0
    %759 = vmatpush1.msra.mxu0 %v116
    %760 = vmatprep.subr.mxu0 0.0
    %761 = vmatpush1.msra.mxu0 %v115
    %762 = vmatprep.subr.mxu0 0.0
    %763 = vmatpush1.msra.mxu0 %v114
    %764 = vmatprep.subr.mxu0 0.0
    %765 = vmatpush1.msra.mxu0 %v113
    %766 = vmatprep.subr.mxu0 0.0
    %767 = vmatpush1.msra.mxu0 %v112
    %768 = vmatprep.subr.mxu0 0.0
    %769 = vmatpush1.msra.mxu0 %v111
    %770 = vmatprep.subr.mxu0 0.0
    %771 = vmatpush1.msra.mxu0 %v110
    %772 = vmatprep.subr.mxu0 0.0
    %773 = vmatpush1.msra.mxu0 %v109
    %774 = vmatprep.subr.mxu0 0.0
    %775 = vmatpush1.msra.mxu0 %v108
    %776 = vmatprep.subr.mxu0 0.0
    %777 = vmatpush2.msra.mxu0 %v139
    %778 = vmatprep.subr.mxu0 0.0
    %779 = vmatpush2.msra.mxu0 %v138
    %780 = vmatprep.subr.mxu0 0.0
    %781 = vmatpush2.msra.mxu0 %v137
    %782 = vmatprep.subr.mxu0 0.0
    %783 = vmatpush2.msra.mxu0 %v136
    %784 = vmatprep.subr.mxu0 0.0
    %785 = vmatpush2.msra.mxu0 %v135
    %786 = vmatprep.subr.mxu0 0.0
    %787 = vmatpush2.msra.mxu0 %v134
    %788 = vmatprep.subr.mxu0 0.0
    %789 = vmatpush2.msra.mxu0 %v133
    %790 = vmatprep.subr.mxu0 0.0
    %791 = vmatpush2.msra.mxu0 %v132
    %792 = vmatprep.subr.mxu0 0.0
    %793 = vmatpush2.msra.mxu0 %v131
    %794 = vmatprep.subr.mxu0 0.0
    %795 = vmatpush2.msra.mxu0 %v130
    %796 = vmatprep.subr.mxu0 0.0
    %797 = vmatpush2.msra.mxu0 %v129
    %798 = vmatprep.subr.mxu0 0.0
    %799 = vmatpush2.msra.mxu0 %v128
    %800 = vmatprep.subr.mxu0 0.0
    %801 = vmatpush2.msra.mxu0 %v127
    %802 = vmatprep.subr.mxu0 0.0
    %803 = vmatpush2.msra.mxu0 %v126
    %804 = vmatprep.subr.mxu0 0.0
    %805 = vmatpush2.msra.mxu0 %v125
    %806 = vmatprep.subr.mxu0 0.0
    %807 = vmatpush2.msra.mxu0 %v124
    %808 = vmatprep.mubr.f32.mxu0 %v574
    %809 = vmatmul.mubr.f32.gmra.mxu0 %v29
    %v810 = vpop.f32.mrf.mxu0
    %v811 = vadd.f32 %v741, %v810
    %v812 = vpop.f32.mrf.mxu0
    %813 = vdwg.mxu0
    %814 = vmatprep.subr.mxu0 0.0
    %815 = vmatpush1.msra.mxu0 %v155
    %816 = vmatprep.subr.mxu0 0.0
    %817 = vmatpush1.msra.mxu0 %v154
    %818 = vmatprep.subr.mxu0 0.0
    %819 = vmatpush1.msra.mxu0 %v153
    %820 = vmatprep.subr.mxu0 0.0
    %821 = vmatpush1.msra.mxu0 %v152
    %822 = vmatprep.subr.mxu0 0.0
    %823 = vmatpush1.msra.mxu0 %v151
    %824 = vmatprep.subr.mxu0 0.0
    %825 = vmatpush1.msra.mxu0 %v150
    %826 = vmatprep.subr.mxu0 0.0
    %827 = vmatpush1.msra.mxu0 %v149
    %828 = vmatprep.subr.mxu0 0.0
    %829 = vmatpush1.msra.mxu0 %v148
    %830 = vmatprep.subr.mxu0 0.0
    %831 = vmatpush1.msra.mxu0 %v147
    %832 = vmatprep.subr.mxu0 0.0
    %833 = vmatpush1.msra.mxu0 %v146
    %834 = vmatprep.subr.mxu0 0.0
    %835 = vmatpush1.msra.mxu0 %v145
    %836 = vmatprep.subr.mxu0 0.0
    %837 = vmatpush1.msra.mxu0 %v144
    %838 = vmatprep.subr.mxu0 0.0
    %839 = vmatpush1.msra.mxu0 %v143
    %840 = vmatprep.subr.mxu0 0.0
    %841 = vmatpush1.msra.mxu0 %v142
    %842 = vmatprep.subr.mxu0 0.0
    %843 = vmatpush1.msra.mxu0 %v141
    %844 = vmatprep.subr.mxu0 0.0
    %845 = vmatpush1.msra.mxu0 %v140
    %846 = vmatprep.subr.mxu0 0.0
    %847 = vmatpush2.msra.mxu0 %v171
    %848 = vmatprep.subr.mxu0 0.0
    %849 = vmatpush2.msra.mxu0 %v170
    %850 = vmatprep.subr.mxu0 0.0
    %851 = vmatpush2.msra.mxu0 %v169
    %852 = vmatprep.subr.mxu0 0.0
    %853 = vmatpush2.msra.mxu0 %v168
    %854 = vmatprep.subr.mxu0 0.0
    %855 = vmatpush2.msra.mxu0 %v167
    %856 = vmatprep.subr.mxu0 0.0
    %857 = vmatpush2.msra.mxu0 %v166
    %858 = vmatprep.subr.mxu0 0.0
    %859 = vmatpush2.msra.mxu0 %v165
    %860 = vmatprep.subr.mxu0 0.0
    %861 = vmatpush2.msra.mxu0 %v164
    %862 = vmatprep.subr.mxu0 0.0
    %863 = vmatpush2.msra.mxu0 %v163
    %864 = vmatprep.subr.mxu0 0.0
    %865 = vmatpush2.msra.mxu0 %v162
    %866 = vmatprep.subr.mxu0 0.0
    %867 = vmatpush2.msra.mxu0 %v161
    %868 = vmatprep.subr.mxu0 0.0
    %869 = vmatpush2.msra.mxu0 %v160
    %870 = vmatprep.subr.mxu0 0.0
    %871 = vmatpush2.msra.mxu0 %v159
    %872 = vmatprep.subr.mxu0 0.0
    %873 = vmatpush2.msra.mxu0 %v158
    %874 = vmatprep.subr.mxu0 0.0
    %875 = vmatpush2.msra.mxu0 %v157
    %876 = vmatprep.subr.mxu0 0.0
    %877 = vmatpush2.msra.mxu0 %v156
    %878 = vmatprep.mubr.f32.mxu0 %v575
    %879 = vmatmul.mubr.f32.gmra.mxu0 %v30
    %v880 = vpop.f32.mrf.mxu0
    %v881 = vadd.f32 %v811, %v880
    %v882 = vpop.f32.mrf.mxu0
    %883 = vdwg.mxu0
    %884 = vmatprep.subr.mxu0 0.0
    %885 = vmatpush1.msra.mxu0 %v187
    %886 = vmatprep.subr.mxu0 0.0
    %887 = vmatpush1.msra.mxu0 %v186
    %888 = vmatprep.subr.mxu0 0.0
    %889 = vmatpush1.msra.mxu0 %v185
    %890 = vmatprep.subr.mxu0 0.0
    %891 = vmatpush1.msra.mxu0 %v184
    %892 = vmatprep.subr.mxu0 0.0
    %893 = vmatpush1.msra.mxu0 %v183
    %894 = vmatprep.subr.mxu0 0.0
    %895 = vmatpush1.msra.mxu0 %v182
    %896 = vmatprep.subr.mxu0 0.0
    %897 = vmatpush1.msra.mxu0 %v181
    %898 = vmatprep.subr.mxu0 0.0
    %899 = vmatpush1.msra.mxu0 %v180
    %900 = vmatprep.subr.mxu0 0.0
    %901 = vmatpush1.msra.mxu0 %v179
    %902 = vmatprep.subr.mxu0 0.0
    %903 = vmatpush1.msra.mxu0 %v178
    %904 = vmatprep.subr.mxu0 0.0
    %905 = vmatpush1.msra.mxu0 %v177
    %906 = vmatprep.subr.mxu0 0.0
    %907 = vmatpush1.msra.mxu0 %v176
    %908 = vmatprep.subr.mxu0 0.0
    %909 = vmatpush1.msra.mxu0 %v175
    %910 = vmatprep.subr.mxu0 0.0
    %911 = vmatpush1.msra.mxu0 %v174
    %912 = vmatprep.subr.mxu0 0.0
    %913 = vmatpush1.msra.mxu0 %v173
    %914 = vmatprep.subr.mxu0 0.0
    %915 = vmatpush1.msra.mxu0 %v172
    %916 = vmatprep.subr.mxu0 0.0
    %917 = vmatpush2.msra.mxu0 %v203
    %918 = vmatprep.subr.mxu0 0.0
    %919 = vmatpush2.msra.mxu0 %v202
    %920 = vmatprep.subr.mxu0 0.0
    %921 = vmatpush2.msra.mxu0 %v201
    %922 = vmatprep.subr.mxu0 0.0
    %923 = vmatpush2.msra.mxu0 %v200
    %924 = vmatprep.subr.mxu0 0.0
    %925 = vmatpush2.msra.mxu0 %v199
    %926 = vmatprep.subr.mxu0 0.0
    %927 = vmatpush2.msra.mxu0 %v198
    %928 = vmatprep.subr.mxu0 0.0
    %929 = vmatpush2.msra.mxu0 %v197
    %930 = vmatprep.subr.mxu0 0.0
    %931 = vmatpush2.msra.mxu0 %v196
    %932 = vmatprep.subr.mxu0 0.0
    %933 = vmatpush2.msra.mxu0 %v195
    %934 = vmatprep.subr.mxu0 0.0
    %935 = vmatpush2.msra.mxu0 %v194
    %936 = vmatprep.subr.mxu0 0.0
    %937 = vmatpush2.msra.mxu0 %v193
    %938 = vmatprep.subr.mxu0 0.0
    %939 = vmatpush2.msra.mxu0 %v192
    %940 = vmatprep.subr.mxu0 0.0
    %941 = vmatpush2.msra.mxu0 %v191
    %942 = vmatprep.subr.mxu0 0.0
    %943 = vmatpush2.msra.mxu0 %v190
    %944 = vmatprep.subr.mxu0 0.0
    %945 = vmatpush2.msra.mxu0 %v189
    %946 = vmatprep.subr.mxu0 0.0
    %947 = vmatpush2.msra.mxu0 %v188
    %948 = vmatprep.mubr.f32.mxu0 %v576
    %949 = vmatmul.mubr.f32.gmra.mxu0 %v31
    %v950 = vpop.f32.mrf.mxu0
    %v951 = vadd.f32 %v881, %v950
    %v952 = vpop.f32.mrf.mxu0
    %953 = vdwg.mxu0
    %954 = vmatprep.subr.mxu0 0.0
    %955 = vmatpush1.msra.mxu0 %v219
    %956 = vmatprep.subr.mxu0 0.0
    %957 = vmatpush1.msra.mxu0 %v218
    %958 = vmatprep.subr.mxu0 0.0
    %959 = vmatpush1.msra.mxu0 %v217
    %960 = vmatprep.subr.mxu0 0.0
    %961 = vmatpush1.msra.mxu0 %v216
    %962 = vmatprep.subr.mxu0 0.0
    %963 = vmatpush1.msra.mxu0 %v215
    %964 = vmatprep.subr.mxu0 0.0
    %965 = vmatpush1.msra.mxu0 %v214
    %966 = vmatprep.subr.mxu0 0.0
    %967 = vmatpush1.msra.mxu0 %v213
    %968 = vmatprep.subr.mxu0 0.0
    %969 = vmatpush1.msra.mxu0 %v212
    %970 = vmatprep.subr.mxu0 0.0
    %971 = vmatpush1.msra.mxu0 %v211
    %972 = vmatprep.subr.mxu0 0.0
    %973 = vmatpush1.msra.mxu0 %v210
    %974 = vmatprep.subr.mxu0 0.0
    %975 = vmatpush1.msra.mxu0 %v209
    %976 = vmatprep.subr.mxu0 0.0
    %977 = vmatpush1.msra.mxu0 %v208
    %978 = vmatprep.subr.mxu0 0.0
    %979 = vmatpush1.msra.mxu0 %v207
    %980 = vmatprep.subr.mxu0 0.0
    %981 = vmatpush1.msra.mxu0 %v206
    %982 = vmatprep.subr.mxu0 0.0
    %983 = vmatpush1.msra.mxu0 %v205
    %984 = vmatprep.subr.mxu0 0.0
    %985 = vmatpush1.msra.mxu0 %v204
    %986 = vmatprep.subr.mxu0 0.0
    %987 = vmatpush2.msra.mxu0 %v235
    %988 = vmatprep.subr.mxu0 0.0
    %989 = vmatpush2.msra.mxu0 %v234
    %990 = vmatprep.subr.mxu0 0.0
    %991 = vmatpush2.msra.mxu0 %v233
    %992 = vmatprep.subr.mxu0 0.0
    %993 = vmatpush2.msra.mxu0 %v232
    %994 = vmatprep.subr.mxu0 0.0
    %995 = vmatpush2.msra.mxu0 %v231
    %996 = vmatprep.subr.mxu0 0.0
    %997 = vmatpush2.msra.mxu0 %v230
    %998 = vmatprep.subr.mxu0 0.0
    %999 = vmatpush2.msra.mxu0 %v229
    %1000 = vmatprep.subr.mxu0 0.0
    %1001 = vmatpush2.msra.mxu0 %v228
    %1002 = vmatprep.subr.mxu0 0.0
    %1003 = vmatpush2.msra.mxu0 %v227
    %1004 = vmatprep.subr.mxu0 0.0
    %1005 = vmatpush2.msra.mxu0 %v226
    %1006 = vmatprep.subr.mxu0 0.0
    %1007 = vmatpush2.msra.mxu0 %v225
    %1008 = vmatprep.subr.mxu0 0.0
    %1009 = vmatpush2.msra.mxu0 %v224
    %1010 = vmatprep.subr.mxu0 0.0
    %1011 = vmatpush2.msra.mxu0 %v223
    %1012 = vmatprep.subr.mxu0 0.0
    %1013 = vmatpush2.msra.mxu0 %v222
    %1014 = vmatprep.subr.mxu0 0.0
    %1015 = vmatpush2.msra.mxu0 %v221
    %1016 = vmatprep.subr.mxu0 0.0
    %1017 = vmatpush2.msra.mxu0 %v220
    %1018 = vmatprep.mubr.f32.mxu0 %v577
    %1019 = vmatmul.mubr.f32.gmra.mxu0 %v32
    %v1020 = vpop.f32.mrf.mxu0
    %v1021 = vadd.f32 %v951, %v1020
    %v1022 = vpop.f32.mrf.mxu0
    %1023 = vdwg.mxu0
    %1024 = vmatprep.subr.mxu0 0.0
    %1025 = vmatpush1.msra.mxu0 %v251
    %1026 = vmatprep.subr.mxu0 0.0
    %1027 = vmatpush1.msra.mxu0 %v250
    %1028 = vmatprep.subr.mxu0 0.0
    %1029 = vmatpush1.msra.mxu0 %v249
    %1030 = vmatprep.subr.mxu0 0.0
    %1031 = vmatpush1.msra.mxu0 %v248
    %1032 = vmatprep.subr.mxu0 0.0
    %1033 = vmatpush1.msra.mxu0 %v247
    %1034 = vmatprep.subr.mxu0 0.0
    %1035 = vmatpush1.msra.mxu0 %v246
    %1036 = vmatprep.subr.mxu0 0.0
    %1037 = vmatpush1.msra.mxu0 %v245
    %1038 = vmatprep.subr.mxu0 0.0
    %1039 = vmatpush1.msra.mxu0 %v244
    %1040 = vmatprep.subr.mxu0 0.0
    %1041 = vmatpush1.msra.mxu0 %v243
    %1042 = vmatprep.subr.mxu0 0.0
    %1043 = vmatpush1.msra.mxu0 %v242
    %1044 = vmatprep.subr.mxu0 0.0
    %1045 = vmatpush1.msra.mxu0 %v241
    %1046 = vmatprep.subr.mxu0 0.0
    %1047 = vmatpush1.msra.mxu0 %v240
    %1048 = vmatprep.subr.mxu0 0.0
    %1049 = vmatpush1.msra.mxu0 %v239
    %1050 = vmatprep.subr.mxu0 0.0
    %1051 = vmatpush1.msra.mxu0 %v238
    %1052 = vmatprep.subr.mxu0 0.0
    %1053 = vmatpush1.msra.mxu0 %v237
    %1054 = vmatprep.subr.mxu0 0.0
    %1055 = vmatpush1.msra.mxu0 %v236
    %1056 = vmatprep.subr.mxu0 0.0
    %1057 = vmatpush2.msra.mxu0 %v267
    %1058 = vmatprep.subr.mxu0 0.0
    %1059 = vmatpush2.msra.mxu0 %v266
    %1060 = vmatprep.subr.mxu0 0.0
    %1061 = vmatpush2.msra.mxu0 %v265
    %1062 = vmatprep.subr.mxu0 0.0
    %1063 = vmatpush2.msra.mxu0 %v264
    %1064 = vmatprep.subr.mxu0 0.0
    %1065 = vmatpush2.msra.mxu0 %v263
    %1066 = vmatprep.subr.mxu0 0.0
    %1067 = vmatpush2.msra.mxu0 %v262
    %1068 = vmatprep.subr.mxu0 0.0
    %1069 = vmatpush2.msra.mxu0 %v261
    %1070 = vmatprep.subr.mxu0 0.0
    %1071 = vmatpush2.msra.mxu0 %v260
    %1072 = vmatprep.subr.mxu0 0.0
    %1073 = vmatpush2.msra.mxu0 %v259
    %1074 = vmatprep.subr.mxu0 0.0
    %1075 = vmatpush2.msra.mxu0 %v258
    %1076 = vmatprep.subr.mxu0 0.0
    %1077 = vmatpush2.msra.mxu0 %v257
    %1078 = vmatprep.subr.mxu0 0.0
    %1079 = vmatpush2.msra.mxu0 %v256
    %1080 = vmatprep.subr.mxu0 0.0
    %1081 = vmatpush2.msra.mxu0 %v255
    %1082 = vmatprep.subr.mxu0 0.0
    %1083 = vmatpush2.msra.mxu0 %v254
    %1084 = vmatprep.subr.mxu0 0.0
    %1085 = vmatpush2.msra.mxu0 %v253
    %1086 = vmatprep.subr.mxu0 0.0
    %1087 = vmatpush2.msra.mxu0 %v252
    %1088 = vmatprep.mubr.f32.mxu0 %v578
    %1089 = vmatmul.mubr.f32.gmra.mxu0 %v33
    %v1090 = vpop.f32.mrf.mxu0
    %v1091 = vadd.f32 %v1021, %v1090
    %v1092 = vpop.f32.mrf.mxu0
    %1093 = vdwg.mxu0
    %1094 = vmatprep.subr.mxu0 0.0
    %1095 = vmatpush1.msra.mxu0 %v283
    %1096 = vmatprep.subr.mxu0 0.0
    %1097 = vmatpush1.msra.mxu0 %v282
    %1098 = vmatprep.subr.mxu0 0.0
    %1099 = vmatpush1.msra.mxu0 %v281
    %1100 = vmatprep.subr.mxu0 0.0
    %1101 = vmatpush1.msra.mxu0 %v280
    %1102 = vmatprep.subr.mxu0 0.0
    %1103 = vmatpush1.msra.mxu0 %v279
    %1104 = vmatprep.subr.mxu0 0.0
    %1105 = vmatpush1.msra.mxu0 %v278
    %1106 = vmatprep.subr.mxu0 0.0
    %1107 = vmatpush1.msra.mxu0 %v277
    %1108 = vmatprep.subr.mxu0 0.0
    %1109 = vmatpush1.msra.mxu0 %v276
    %1110 = vmatprep.subr.mxu0 0.0
    %1111 = vmatpush1.msra.mxu0 %v275
    %1112 = vmatprep.subr.mxu0 0.0
    %1113 = vmatpush1.msra.mxu0 %v274
    %1114 = vmatprep.subr.mxu0 0.0
    %1115 = vmatpush1.msra.mxu0 %v273
    %1116 = vmatprep.subr.mxu0 0.0
    %1117 = vmatpush1.msra.mxu0 %v272
    %1118 = vmatprep.subr.mxu0 0.0
    %1119 = vmatpush1.msra.mxu0 %v271
    %1120 = vmatprep.subr.mxu0 0.0
    %1121 = vmatpush1.msra.mxu0 %v270
    %1122 = vmatprep.subr.mxu0 0.0
    %1123 = vmatpush1.msra.mxu0 %v269
    %1124 = vmatprep.subr.mxu0 0.0
    %1125 = vmatpush1.msra.mxu0 %v268
    %1126 = vmatprep.subr.mxu0 0.0
    %1127 = vmatpush2.msra.mxu0 %v299
    %1128 = vmatprep.subr.mxu0 0.0
    %1129 = vmatpush2.msra.mxu0 %v298
    %1130 = vmatprep.subr.mxu0 0.0
    %1131 = vmatpush2.msra.mxu0 %v297
    %1132 = vmatprep.subr.mxu0 0.0
    %1133 = vmatpush2.msra.mxu0 %v296
    %1134 = vmatprep.subr.mxu0 0.0
    %1135 = vmatpush2.msra.mxu0 %v295
    %1136 = vmatprep.subr.mxu0 0.0
    %1137 = vmatpush2.msra.mxu0 %v294
    %1138 = vmatprep.subr.mxu0 0.0
    %1139 = vmatpush2.msra.mxu0 %v293
    %1140 = vmatprep.subr.mxu0 0.0
    %1141 = vmatpush2.msra.mxu0 %v292
    %1142 = vmatprep.subr.mxu0 0.0
    %1143 = vmatpush2.msra.mxu0 %v291
    %1144 = vmatprep.subr.mxu0 0.0
    %1145 = vmatpush2.msra.mxu0 %v290
    %1146 = vmatprep.subr.mxu0 0.0
    %1147 = vmatpush2.msra.mxu0 %v289
    %1148 = vmatprep.subr.mxu0 0.0
    %1149 = vmatpush2.msra.mxu0 %v288
    %1150 = vmatprep.subr.mxu0 0.0
    %1151 = vmatpush2.msra.mxu0 %v287
    %1152 = vmatprep.subr.mxu0 0.0
    %1153 = vmatpush2.msra.mxu0 %v286
    %1154 = vmatprep.subr.mxu0 0.0
    %1155 = vmatpush2.msra.mxu0 %v285
    %1156 = vmatprep.subr.mxu0 0.0
    %1157 = vmatpush2.msra.mxu0 %v284
    %1158 = vmatprep.mubr.f32.mxu0 %v579
    %1159 = vmatmul.mubr.f32.gmra.mxu0 %v34
    %v1160 = vpop.f32.mrf.mxu0
    %v1161 = vadd.f32 %v1091, %v1160
    %v1162 = vpop.f32.mrf.mxu0
    %1163 = vdwg.mxu0
    %1164 = vmatprep.subr.mxu0 0.0
    %1165 = vmatpush1.msra.mxu0 %v315
    %1166 = vmatprep.subr.mxu0 0.0
    %1167 = vmatpush1.msra.mxu0 %v314
    %1168 = vmatprep.subr.mxu0 0.0
    %1169 = vmatpush1.msra.mxu0 %v313
    %1170 = vmatprep.subr.mxu0 0.0
    %1171 = vmatpush1.msra.mxu0 %v312
    %1172 = vmatprep.subr.mxu0 0.0
    %1173 = vmatpush1.msra.mxu0 %v311
    %1174 = vmatprep.subr.mxu0 0.0
    %1175 = vmatpush1.msra.mxu0 %v310
    %1176 = vmatprep.subr.mxu0 0.0
    %1177 = vmatpush1.msra.mxu0 %v309
    %1178 = vmatprep.subr.mxu0 0.0
    %1179 = vmatpush1.msra.mxu0 %v308
    %1180 = vmatprep.subr.mxu0 0.0
    %1181 = vmatpush1.msra.mxu0 %v307
    %1182 = vmatprep.subr.mxu0 0.0
    %1183 = vmatpush1.msra.mxu0 %v306
    %1184 = vmatprep.subr.mxu0 0.0
    %1185 = vmatpush1.msra.mxu0 %v305
    %1186 = vmatprep.subr.mxu0 0.0
    %1187 = vmatpush1.msra.mxu0 %v304
    %1188 = vmatprep.subr.mxu0 0.0
    %1189 = vmatpush1.msra.mxu0 %v303
    %1190 = vmatprep.subr.mxu0 0.0
    %1191 = vmatpush1.msra.mxu0 %v302
    %1192 = vmatprep.subr.mxu0 0.0
    %1193 = vmatpush1.msra.mxu0 %v301
    %1194 = vmatprep.subr.mxu0 0.0
    %1195 = vmatpush1.msra.mxu0 %v300
    %1196 = vmatprep.subr.mxu0 0.0
    %1197 = vmatpush2.msra.mxu0 %v331
    %1198 = vmatprep.subr.mxu0 0.0
    %1199 = vmatpush2.msra.mxu0 %v330
    %1200 = vmatprep.subr.mxu0 0.0
    %1201 = vmatpush2.msra.mxu0 %v329
    %1202 = vmatprep.subr.mxu0 0.0
    %1203 = vmatpush2.msra.mxu0 %v328
    %1204 = vmatprep.subr.mxu0 0.0
    %1205 = vmatpush2.msra.mxu0 %v327
    %1206 = vmatprep.subr.mxu0 0.0
    %1207 = vmatpush2.msra.mxu0 %v326
    %1208 = vmatprep.subr.mxu0 0.0
    %1209 = vmatpush2.msra.mxu0 %v325
    %1210 = vmatprep.subr.mxu0 0.0
    %1211 = vmatpush2.msra.mxu0 %v324
    %1212 = vmatprep.subr.mxu0 0.0
    %1213 = vmatpush2.msra.mxu0 %v323
    %1214 = vmatprep.subr.mxu0 0.0
    %1215 = vmatpush2.msra.mxu0 %v322
    %1216 = vmatprep.subr.mxu0 0.0
    %1217 = vmatpush2.msra.mxu0 %v321
    %1218 = vmatprep.subr.mxu0 0.0
    %1219 = vmatpush2.msra.mxu0 %v320
    %1220 = vmatprep.subr.mxu0 0.0
    %1221 = vmatpush2.msra.mxu0 %v319
    %1222 = vmatprep.subr.mxu0 0.0
    %1223 = vmatpush2.msra.mxu0 %v318
    %1224 = vmatprep.subr.mxu0 0.0
    %1225 = vmatpush2.msra.mxu0 %v317
    %1226 = vmatprep.subr.mxu0 0.0
    %1227 = vmatpush2.msra.mxu0 %v316
    %1228 = vmatprep.mubr.f32.mxu0 %v580
    %1229 = vmatmul.mubr.f32.gmra.mxu0 %v35
    %v1230 = vpop.f32.mrf.mxu0
    %v1231 = vadd.f32 %v1161, %v1230
    %v1232 = vpop.f32.mrf.mxu0
    %1233 = vdwg.mxu0
    %1234 = vmatprep.subr.mxu0 0.0
    %1235 = vmatpush1.msra.mxu0 %v347
    %1236 = vmatprep.subr.mxu0 0.0
    %1237 = vmatpush1.msra.mxu0 %v346
    %1238 = vmatprep.subr.mxu0 0.0
    %1239 = vmatpush1.msra.mxu0 %v345
    %1240 = vmatprep.subr.mxu0 0.0
    %1241 = vmatpush1.msra.mxu0 %v344
    %1242 = vmatprep.subr.mxu0 0.0
    %1243 = vmatpush1.msra.mxu0 %v343
    %1244 = vmatprep.subr.mxu0 0.0
    %1245 = vmatpush1.msra.mxu0 %v342
    %1246 = vmatprep.subr.mxu0 0.0
    %1247 = vmatpush1.msra.mxu0 %v341
    %1248 = vmatprep.subr.mxu0 0.0
    %1249 = vmatpush1.msra.mxu0 %v340
    %1250 = vmatprep.subr.mxu0 0.0
    %1251 = vmatpush1.msra.mxu0 %v339
    %1252 = vmatprep.subr.mxu0 0.0
    %1253 = vmatpush1.msra.mxu0 %v338
    %1254 = vmatprep.subr.mxu0 0.0
    %1255 = vmatpush1.msra.mxu0 %v337
    %1256 = vmatprep.subr.mxu0 0.0
    %1257 = vmatpush1.msra.mxu0 %v336
    %1258 = vmatprep.subr.mxu0 0.0
    %1259 = vmatpush1.msra.mxu0 %v335
    %1260 = vmatprep.subr.mxu0 0.0
    %1261 = vmatpush1.msra.mxu0 %v334
    %1262 = vmatprep.subr.mxu0 0.0
    %1263 = vmatpush1.msra.mxu0 %v333
    %1264 = vmatprep.subr.mxu0 0.0
    %1265 = vmatpush1.msra.mxu0 %v332
    %1266 = vmatprep.subr.mxu0 0.0
    %1267 = vmatpush2.msra.mxu0 %v363
    %1268 = vmatprep.subr.mxu0 0.0
    %1269 = vmatpush2.msra.mxu0 %v362
    %1270 = vmatprep.subr.mxu0 0.0
    %1271 = vmatpush2.msra.mxu0 %v361
    %1272 = vmatprep.subr.mxu0 0.0
    %1273 = vmatpush2.msra.mxu0 %v360
    %1274 = vmatprep.subr.mxu0 0.0
    %1275 = vmatpush2.msra.mxu0 %v359
    %1276 = vmatprep.subr.mxu0 0.0
    %1277 = vmatpush2.msra.mxu0 %v358
    %1278 = vmatprep.subr.mxu0 0.0
    %1279 = vmatpush2.msra.mxu0 %v357
    %1280 = vmatprep.subr.mxu0 0.0
    %1281 = vmatpush2.msra.mxu0 %v356
    %1282 = vmatprep.subr.mxu0 0.0
    %1283 = vmatpush2.msra.mxu0 %v355
    %1284 = vmatprep.subr.mxu0 0.0
    %1285 = vmatpush2.msra.mxu0 %v354
    %1286 = vmatprep.subr.mxu0 0.0
    %1287 = vmatpush2.msra.mxu0 %v353
    %1288 = vmatprep.subr.mxu0 0.0
    %1289 = vmatpush2.msra.mxu0 %v352
    %1290 = vmatprep.subr.mxu0 0.0
    %1291 = vmatpush2.msra.mxu0 %v351
    %1292 = vmatprep.subr.mxu0 0.0
    %1293 = vmatpush2.msra.mxu0 %v350
    %1294 = vmatprep.subr.mxu0 0.0
    %1295 = vmatpush2.msra.mxu0 %v349
    %1296 = vmatprep.subr.mxu0 0.0
    %1297 = vmatpush2.msra.mxu0 %v348
    %1298 = vmatprep.mubr.f32.mxu0 %v581
    %1299 = vmatmul.mubr.f32.gmra.mxu0 %v36
    %v1300 = vpop.f32.mrf.mxu0
    %v1301 = vadd.f32 %v1231, %v1300
    %v1302 = vpop.f32.mrf.mxu0
    %1303 = vdwg.mxu0
    %1304 = vmatprep.subr.mxu0 0.0
    %1305 = vmatpush1.msra.mxu0 %v379
    %1306 = vmatprep.subr.mxu0 0.0
    %1307 = vmatpush1.msra.mxu0 %v378
    %1308 = vmatprep.subr.mxu0 0.0
    %1309 = vmatpush1.msra.mxu0 %v377
    %1310 = vmatprep.subr.mxu0 0.0
    %1311 = vmatpush1.msra.mxu0 %v376
    %1312 = vmatprep.subr.mxu0 0.0
    %1313 = vmatpush1.msra.mxu0 %v375
    %1314 = vmatprep.subr.mxu0 0.0
    %1315 = vmatpush1.msra.mxu0 %v374
    %1316 = vmatprep.subr.mxu0 0.0
    %1317 = vmatpush1.msra.mxu0 %v373
    %1318 = vmatprep.subr.mxu0 0.0
    %1319 = vmatpush1.msra.mxu0 %v372
    %1320 = vmatprep.subr.mxu0 0.0
    %1321 = vmatpush1.msra.mxu0 %v371
    %1322 = vmatprep.subr.mxu0 0.0
    %1323 = vmatpush1.msra.mxu0 %v370
    %1324 = vmatprep.subr.mxu0 0.0
    %1325 = vmatpush1.msra.mxu0 %v369
    %1326 = vmatprep.subr.mxu0 0.0
    %1327 = vmatpush1.msra.mxu0 %v368
    %1328 = vmatprep.subr.mxu0 0.0
    %1329 = vmatpush1.msra.mxu0 %v367
    %1330 = vmatprep.subr.mxu0 0.0
    %1331 = vmatpush1.msra.mxu0 %v366
    %1332 = vmatprep.subr.mxu0 0.0
    %1333 = vmatpush1.msra.mxu0 %v365
    %1334 = vmatprep.subr.mxu0 0.0
    %1335 = vmatpush1.msra.mxu0 %v364
    %1336 = vmatprep.subr.mxu0 0.0
    %1337 = vmatpush2.msra.mxu0 %v395
    %1338 = vmatprep.subr.mxu0 0.0
    %1339 = vmatpush2.msra.mxu0 %v394
    %1340 = vmatprep.subr.mxu0 0.0
    %1341 = vmatpush2.msra.mxu0 %v393
    %1342 = vmatprep.subr.mxu0 0.0
    %1343 = vmatpush2.msra.mxu0 %v392
    %1344 = vmatprep.subr.mxu0 0.0
    %1345 = vmatpush2.msra.mxu0 %v391
    %1346 = vmatprep.subr.mxu0 0.0
    %1347 = vmatpush2.msra.mxu0 %v390
    %1348 = vmatprep.subr.mxu0 0.0
    %1349 = vmatpush2.msra.mxu0 %v389
    %1350 = vmatprep.subr.mxu0 0.0
    %1351 = vmatpush2.msra.mxu0 %v388
    %1352 = vmatprep.subr.mxu0 0.0
    %1353 = vmatpush2.msra.mxu0 %v387
    %1354 = vmatprep.subr.mxu0 0.0
    %1355 = vmatpush2.msra.mxu0 %v386
    %1356 = vmatprep.subr.mxu0 0.0
    %1357 = vmatpush2.msra.mxu0 %v385
    %1358 = vmatprep.subr.mxu0 0.0
    %1359 = vmatpush2.msra.mxu0 %v384
    %1360 = vmatprep.subr.mxu0 0.0
    %1361 = vmatpush2.msra.mxu0 %v383
    %1362 = vmatprep.subr.mxu0 0.0
    %1363 = vmatpush2.msra.mxu0 %v382
    %1364 = vmatprep.subr.mxu0 0.0
    %1365 = vmatpush2.msra.mxu0 %v381
    %1366 = vmatprep.subr.mxu0 0.0
    %1367 = vmatpush2.msra.mxu0 %v380
    %1368 = vmatprep.mubr.f32.mxu0 %v582
    %1369 = vmatmul.mubr.f32.gmra.mxu0 %v37
    %v1370 = vpop.f32.mrf.mxu0
    %v1371 = vadd.f32 %v1301, %v1370
    %v1372 = vpop.f32.mrf.mxu0
    %1373 = vdwg.mxu0
    %1374 = vmatprep.subr.mxu0 0.0
    %1375 = vmatpush1.msra.mxu0 %v411
    %1376 = vmatprep.subr.mxu0 0.0
    %1377 = vmatpush1.msra.mxu0 %v410
    %1378 = vmatprep.subr.mxu0 0.0
    %1379 = vmatpush1.msra.mxu0 %v409
    %1380 = vmatprep.subr.mxu0 0.0
    %1381 = vmatpush1.msra.mxu0 %v408
    %1382 = vmatprep.subr.mxu0 0.0
    %1383 = vmatpush1.msra.mxu0 %v407
    %1384 = vmatprep.subr.mxu0 0.0
    %1385 = vmatpush1.msra.mxu0 %v406
    %1386 = vmatprep.subr.mxu0 0.0
    %1387 = vmatpush1.msra.mxu0 %v405
    %1388 = vmatprep.subr.mxu0 0.0
    %1389 = vmatpush1.msra.mxu0 %v404
    %1390 = vmatprep.subr.mxu0 0.0
    %1391 = vmatpush1.msra.mxu0 %v403
    %1392 = vmatprep.subr.mxu0 0.0
    %1393 = vmatpush1.msra.mxu0 %v402
    %1394 = vmatprep.subr.mxu0 0.0
    %1395 = vmatpush1.msra.mxu0 %v401
    %1396 = vmatprep.subr.mxu0 0.0
    %1397 = vmatpush1.msra.mxu0 %v400
    %1398 = vmatprep.subr.mxu0 0.0
    %1399 = vmatpush1.msra.mxu0 %v399
    %1400 = vmatprep.subr.mxu0 0.0
    %1401 = vmatpush1.msra.mxu0 %v398
    %1402 = vmatprep.subr.mxu0 0.0
    %1403 = vmatpush1.msra.mxu0 %v397
    %1404 = vmatprep.subr.mxu0 0.0
    %1405 = vmatpush1.msra.mxu0 %v396
    %1406 = vmatprep.subr.mxu0 0.0
    %1407 = vmatpush2.msra.mxu0 %v427
    %1408 = vmatprep.subr.mxu0 0.0
    %1409 = vmatpush2.msra.mxu0 %v426
    %1410 = vmatprep.subr.mxu0 0.0
    %1411 = vmatpush2.msra.mxu0 %v425
    %1412 = vmatprep.subr.mxu0 0.0
    %1413 = vmatpush2.msra.mxu0 %v424
    %1414 = vmatprep.subr.mxu0 0.0
    %1415 = vmatpush2.msra.mxu0 %v423
    %1416 = vmatprep.subr.mxu0 0.0
    %1417 = vmatpush2.msra.mxu0 %v422
    %1418 = vmatprep.subr.mxu0 0.0
    %1419 = vmatpush2.msra.mxu0 %v421
    %1420 = vmatprep.subr.mxu0 0.0
    %1421 = vmatpush2.msra.mxu0 %v420
    %1422 = vmatprep.subr.mxu0 0.0
    %1423 = vmatpush2.msra.mxu0 %v419
    %1424 = vmatprep.subr.mxu0 0.0
    %1425 = vmatpush2.msra.mxu0 %v418
    %1426 = vmatprep.subr.mxu0 0.0
    %1427 = vmatpush2.msra.mxu0 %v417
    %1428 = vmatprep.subr.mxu0 0.0
    %1429 = vmatpush2.msra.mxu0 %v416
    %1430 = vmatprep.subr.mxu0 0.0
    %1431 = vmatpush2.msra.mxu0 %v415
    %1432 = vmatprep.subr.mxu0 0.0
    %1433 = vmatpush2.msra.mxu0 %v414
    %1434 = vmatprep.subr.mxu0 0.0
    %1435 = vmatpush2.msra.mxu0 %v413
    %1436 = vmatprep.subr.mxu0 0.0
    %1437 = vmatpush2.msra.mxu0 %v412
    %1438 = vmatprep.mubr.f32.mxu0 %v583
    %1439 = vmatmul.mubr.f32.gmra.mxu0 %v38
    %v1440 = vpop.f32.mrf.mxu0
    %v1441 = vadd.f32 %v1371, %v1440
    %v1442 = vpop.f32.mrf.mxu0
    %1443 = vdwg.mxu0
    %1444 = vmatprep.subr.mxu0 0.0
    %1445 = vmatpush1.msra.mxu0 %v443
    %1446 = vmatprep.subr.mxu0 0.0
    %1447 = vmatpush1.msra.mxu0 %v442
    %1448 = vmatprep.subr.mxu0 0.0
    %1449 = vmatpush1.msra.mxu0 %v441
    %1450 = vmatprep.subr.mxu0 0.0
    %1451 = vmatpush1.msra.mxu0 %v440
    %1452 = vmatprep.subr.mxu0 0.0
    %1453 = vmatpush1.msra.mxu0 %v439
    %1454 = vmatprep.subr.mxu0 0.0
    %1455 = vmatpush1.msra.mxu0 %v438
    %1456 = vmatprep.subr.mxu0 0.0
    %1457 = vmatpush1.msra.mxu0 %v437
    %1458 = vmatprep.subr.mxu0 0.0
    %1459 = vmatpush1.msra.mxu0 %v436
    %1460 = vmatprep.subr.mxu0 0.0
    %1461 = vmatpush1.msra.mxu0 %v435
    %1462 = vmatprep.subr.mxu0 0.0
    %1463 = vmatpush1.msra.mxu0 %v434
    %1464 = vmatprep.subr.mxu0 0.0
    %1465 = vmatpush1.msra.mxu0 %v433
    %1466 = vmatprep.subr.mxu0 0.0
    %1467 = vmatpush1.msra.mxu0 %v432
    %1468 = vmatprep.subr.mxu0 0.0
    %1469 = vmatpush1.msra.mxu0 %v431
    %1470 = vmatprep.subr.mxu0 0.0
    %1471 = vmatpush1.msra.mxu0 %v430
    %1472 = vmatprep.subr.mxu0 0.0
    %1473 = vmatpush1.msra.mxu0 %v429
    %1474 = vmatprep.subr.mxu0 0.0
    %1475 = vmatpush1.msra.mxu0 %v428
    %1476 = vmatprep.subr.mxu0 0.0
    %1477 = vmatpush2.msra.mxu0 %v459
    %1478 = vmatprep.subr.mxu0 0.0
    %1479 = vmatpush2.msra.mxu0 %v458
    %1480 = vmatprep.subr.mxu0 0.0
    %1481 = vmatpush2.msra.mxu0 %v457
    %1482 = vmatprep.subr.mxu0 0.0
    %1483 = vmatpush2.msra.mxu0 %v456
    %1484 = vmatprep.subr.mxu0 0.0
    %1485 = vmatpush2.msra.mxu0 %v455
    %1486 = vmatprep.subr.mxu0 0.0
    %1487 = vmatpush2.msra.mxu0 %v454
    %1488 = vmatprep.subr.mxu0 0.0
    %1489 = vmatpush2.msra.mxu0 %v453
    %1490 = vmatprep.subr.mxu0 0.0
    %1491 = vmatpush2.msra.mxu0 %v452
    %1492 = vmatprep.subr.mxu0 0.0
    %1493 = vmatpush2.msra.mxu0 %v451
    %1494 = vmatprep.subr.mxu0 0.0
    %1495 = vmatpush2.msra.mxu0 %v450
    %1496 = vmatprep.subr.mxu0 0.0
    %1497 = vmatpush2.msra.mxu0 %v449
    %1498 = vmatprep.subr.mxu0 0.0
    %1499 = vmatpush2.msra.mxu0 %v448
    %1500 = vmatprep.subr.mxu0 0.0
    %1501 = vmatpush2.msra.mxu0 %v447
    %1502 = vmatprep.subr.mxu0 0.0
    %1503 = vmatpush2.msra.mxu0 %v446
    %1504 = vmatprep.subr.mxu0 0.0
    %1505 = vmatpush2.msra.mxu0 %v445
    %1506 = vmatprep.subr.mxu0 0.0
    %1507 = vmatpush2.msra.mxu0 %v444
    %1508 = vmatprep.mubr.f32.mxu0 %v584
    %1509 = vmatmul.mubr.f32.gmra.mxu0 %v39
    %v1510 = vpop.f32.mrf.mxu0
    %v1511 = vadd.f32 %v1441, %v1510
    %v1512 = vpop.f32.mrf.mxu0
    %1513 = vdwg.mxu0
    %1514 = vmatprep.subr.mxu0 0.0
    %1515 = vmatpush1.msra.mxu0 %v475
    %1516 = vmatprep.subr.mxu0 0.0
    %1517 = vmatpush1.msra.mxu0 %v474
    %1518 = vmatprep.subr.mxu0 0.0
    %1519 = vmatpush1.msra.mxu0 %v473
    %1520 = vmatprep.subr.mxu0 0.0
    %1521 = vmatpush1.msra.mxu0 %v472
    %1522 = vmatprep.subr.mxu0 0.0
    %1523 = vmatpush1.msra.mxu0 %v471
    %1524 = vmatprep.subr.mxu0 0.0
    %1525 = vmatpush1.msra.mxu0 %v470
    %1526 = vmatprep.subr.mxu0 0.0
    %1527 = vmatpush1.msra.mxu0 %v469
    %1528 = vmatprep.subr.mxu0 0.0
    %1529 = vmatpush1.msra.mxu0 %v468
    %1530 = vmatprep.subr.mxu0 0.0
    %1531 = vmatpush1.msra.mxu0 %v467
    %1532 = vmatprep.subr.mxu0 0.0
    %1533 = vmatpush1.msra.mxu0 %v466
    %1534 = vmatprep.subr.mxu0 0.0
    %1535 = vmatpush1.msra.mxu0 %v465
    %1536 = vmatprep.subr.mxu0 0.0
    %1537 = vmatpush1.msra.mxu0 %v464
    %1538 = vmatprep.subr.mxu0 0.0
    %1539 = vmatpush1.msra.mxu0 %v463
    %1540 = vmatprep.subr.mxu0 0.0
    %1541 = vmatpush1.msra.mxu0 %v462
    %1542 = vmatprep.subr.mxu0 0.0
    %1543 = vmatpush1.msra.mxu0 %v461
    %1544 = vmatprep.subr.mxu0 0.0
    %1545 = vmatpush1.msra.mxu0 %v460
    %1546 = vmatprep.subr.mxu0 0.0
    %1547 = vmatpush2.msra.mxu0 %v491
    %1548 = vmatprep.subr.mxu0 0.0
    %1549 = vmatpush2.msra.mxu0 %v490
    %1550 = vmatprep.subr.mxu0 0.0
    %1551 = vmatpush2.msra.mxu0 %v489
    %1552 = vmatprep.subr.mxu0 0.0
    %1553 = vmatpush2.msra.mxu0 %v488
    %1554 = vmatprep.subr.mxu0 0.0
    %1555 = vmatpush2.msra.mxu0 %v487
    %1556 = vmatprep.subr.mxu0 0.0
    %1557 = vmatpush2.msra.mxu0 %v486
    %1558 = vmatprep.subr.mxu0 0.0
    %1559 = vmatpush2.msra.mxu0 %v485
    %1560 = vmatprep.subr.mxu0 0.0
    %1561 = vmatpush2.msra.mxu0 %v484
    %1562 = vmatprep.subr.mxu0 0.0
    %1563 = vmatpush2.msra.mxu0 %v483
    %1564 = vmatprep.subr.mxu0 0.0
    %1565 = vmatpush2.msra.mxu0 %v482
    %1566 = vmatprep.subr.mxu0 0.0
    %1567 = vmatpush2.msra.mxu0 %v481
    %1568 = vmatprep.subr.mxu0 0.0
    %1569 = vmatpush2.msra.mxu0 %v480
    %1570 = vmatprep.subr.mxu0 0.0
    %1571 = vmatpush2.msra.mxu0 %v479
    %1572 = vmatprep.subr.mxu0 0.0
    %1573 = vmatpush2.msra.mxu0 %v478
    %1574 = vmatprep.subr.mxu0 0.0
    %1575 = vmatpush2.msra.mxu0 %v477
    %1576 = vmatprep.subr.mxu0 0.0
    %1577 = vmatpush2.msra.mxu0 %v476
    %1578 = vmatprep.mubr.f32.mxu0 %v585
    %1579 = vmatmul.mubr.f32.gmra.mxu0 %v40
    %v1580 = vpop.f32.mrf.mxu0
    %v1581 = vadd.f32 %v1511, %v1580
    %v1582 = vpop.f32.mrf.mxu0
    %1583 = vdwg.mxu0
    %1584 = vmatprep.subr.mxu0 0.0
    %1585 = vmatpush1.msra.mxu0 %v507
    %1586 = vmatprep.subr.mxu0 0.0
    %1587 = vmatpush1.msra.mxu0 %v506
    %1588 = vmatprep.subr.mxu0 0.0
    %1589 = vmatpush1.msra.mxu0 %v505
    %1590 = vmatprep.subr.mxu0 0.0
    %1591 = vmatpush1.msra.mxu0 %v504
    %1592 = vmatprep.subr.mxu0 0.0
    %1593 = vmatpush1.msra.mxu0 %v503
    %1594 = vmatprep.subr.mxu0 0.0
    %1595 = vmatpush1.msra.mxu0 %v502
    %1596 = vmatprep.subr.mxu0 0.0
    %1597 = vmatpush1.msra.mxu0 %v501
    %1598 = vmatprep.subr.mxu0 0.0
    %1599 = vmatpush1.msra.mxu0 %v500
    %1600 = vmatprep.subr.mxu0 0.0
    %1601 = vmatpush1.msra.mxu0 %v499
    %1602 = vmatprep.subr.mxu0 0.0
    %1603 = vmatpush1.msra.mxu0 %v498
    %1604 = vmatprep.subr.mxu0 0.0
    %1605 = vmatpush1.msra.mxu0 %v497
    %1606 = vmatprep.subr.mxu0 0.0
    %1607 = vmatpush1.msra.mxu0 %v496
    %1608 = vmatprep.subr.mxu0 0.0
    %1609 = vmatpush1.msra.mxu0 %v495
    %1610 = vmatprep.subr.mxu0 0.0
    %1611 = vmatpush1.msra.mxu0 %v494
    %1612 = vmatprep.subr.mxu0 0.0
    %1613 = vmatpush1.msra.mxu0 %v493
    %1614 = vmatprep.subr.mxu0 0.0
    %1615 = vmatpush1.msra.mxu0 %v492
    %1616 = vmatprep.subr.mxu0 0.0
    %1617 = vmatpush2.msra.mxu0 %v523
    %1618 = vmatprep.subr.mxu0 0.0
    %1619 = vmatpush2.msra.mxu0 %v522
    %1620 = vmatprep.subr.mxu0 0.0
    %1621 = vmatpush2.msra.mxu0 %v521
    %1622 = vmatprep.subr.mxu0 0.0
    %1623 = vmatpush2.msra.mxu0 %v520
    %1624 = vmatprep.subr.mxu0 0.0
    %1625 = vmatpush2.msra.mxu0 %v519
    %1626 = vmatprep.subr.mxu0 0.0
    %1627 = vmatpush2.msra.mxu0 %v518
    %1628 = vmatprep.subr.mxu0 0.0
    %1629 = vmatpush2.msra.mxu0 %v517
    %1630 = vmatprep.subr.mxu0 0.0
    %1631 = vmatpush2.msra.mxu0 %v516
    %1632 = vmatprep.subr.mxu0 0.0
    %1633 = vmatpush2.msra.mxu0 %v515
    %1634 = vmatprep.subr.mxu0 0.0
    %1635 = vmatpush2.msra.mxu0 %v514
    %1636 = vmatprep.subr.mxu0 0.0
    %1637 = vmatpush2.msra.mxu0 %v513
    %1638 = vmatprep.subr.mxu0 0.0
    %1639 = vmatpush2.msra.mxu0 %v512
    %1640 = vmatprep.subr.mxu0 0.0
    %1641 = vmatpush2.msra.mxu0 %v511
    %1642 = vmatprep.subr.mxu0 0.0
    %1643 = vmatpush2.msra.mxu0 %v510
    %1644 = vmatprep.subr.mxu0 0.0
    %1645 = vmatpush2.msra.mxu0 %v509
    %1646 = vmatprep.subr.mxu0 0.0
    %1647 = vmatpush2.msra.mxu0 %v508
    %1648 = vmatprep.mubr.f32.mxu0 %v586
    %1649 = vmatmul.mubr.f32.gmra.mxu0 %v41
    %v1650 = vpop.f32.mrf.mxu0
    %v1651 = vadd.f32 %v1581, %v1650
    %v1652 = vpop.f32.mrf.mxu0
    %1653 = vdwg.mxu0
    %1654 = vmatprep.subr.mxu0 0.0
    %1655 = vmatpush1.msra.mxu0 %v539
    %1656 = vmatprep.subr.mxu0 0.0
    %1657 = vmatpush1.msra.mxu0 %v538
    %1658 = vmatprep.subr.mxu0 0.0
    %1659 = vmatpush1.msra.mxu0 %v537
    %1660 = vmatprep.subr.mxu0 0.0
    %1661 = vmatpush1.msra.mxu0 %v536
    %1662 = vmatprep.subr.mxu0 0.0
    %1663 = vmatpush1.msra.mxu0 %v535
    %1664 = vmatprep.subr.mxu0 0.0
    %1665 = vmatpush1.msra.mxu0 %v534
    %1666 = vmatprep.subr.mxu0 0.0
    %1667 = vmatpush1.msra.mxu0 %v533
    %1668 = vmatprep.subr.mxu0 0.0
    %1669 = vmatpush1.msra.mxu0 %v532
    %1670 = vmatprep.subr.mxu0 0.0
    %1671 = vmatpush1.msra.mxu0 %v531
    %1672 = vmatprep.subr.mxu0 0.0
    %1673 = vmatpush1.msra.mxu0 %v530
    %1674 = vmatprep.subr.mxu0 0.0
    %1675 = vmatpush1.msra.mxu0 %v529
    %1676 = vmatprep.subr.mxu0 0.0
    %1677 = vmatpush1.msra.mxu0 %v528
    %1678 = vmatprep.subr.mxu0 0.0
    %1679 = vmatpush1.msra.mxu0 %v527
    %1680 = vmatprep.subr.mxu0 0.0
    %1681 = vmatpush1.msra.mxu0 %v526
    %1682 = vmatprep.subr.mxu0 0.0
    %1683 = vmatpush1.msra.mxu0 %v525
    %1684 = vmatprep.subr.mxu0 0.0
    %1685 = vmatpush1.msra.mxu0 %v524
    %1686 = vmatprep.subr.mxu0 0.0
    %1687 = vmatpush2.msra.mxu0 %v555
    %1688 = vmatprep.subr.mxu0 0.0
    %1689 = vmatpush2.msra.mxu0 %v554
    %1690 = vmatprep.subr.mxu0 0.0
    %1691 = vmatpush2.msra.mxu0 %v553
    %1692 = vmatprep.subr.mxu0 0.0
    %1693 = vmatpush2.msra.mxu0 %v552
    %1694 = vmatprep.subr.mxu0 0.0
    %1695 = vmatpush2.msra.mxu0 %v551
    %1696 = vmatprep.subr.mxu0 0.0
    %1697 = vmatpush2.msra.mxu0 %v550
    %1698 = vmatprep.subr.mxu0 0.0
    %1699 = vmatpush2.msra.mxu0 %v549
    %1700 = vmatprep.subr.mxu0 0.0
    %1701 = vmatpush2.msra.mxu0 %v548
    %1702 = vmatprep.subr.mxu0 0.0
    %1703 = vmatpush2.msra.mxu0 %v547
    %1704 = vmatprep.subr.mxu0 0.0
    %1705 = vmatpush2.msra.mxu0 %v546
    %1706 = vmatprep.subr.mxu0 0.0
    %1707 = vmatpush2.msra.mxu0 %v545
    %1708 = vmatprep.subr.mxu0 0.0
    %1709 = vmatpush2.msra.mxu0 %v544
    %1710 = vmatprep.subr.mxu0 0.0
    %1711 = vmatpush2.msra.mxu0 %v543
    %1712 = vmatprep.subr.mxu0 0.0
    %1713 = vmatpush2.msra.mxu0 %v542
    %1714 = vmatprep.subr.mxu0 0.0
    %1715 = vmatpush2.msra.mxu0 %v541
    %1716 = vmatprep.subr.mxu0 0.0
    %1717 = vmatpush2.msra.mxu0 %v540
    %1718 = vmatprep.mubr.f32.mxu0 %v587
    %1719 = vmatmul.mubr.f32.gmra.mxu0 %v42
    %v1720 = vpop.f32.mrf.mxu0
    %v1721 = vadd.f32 %v1651, %v1720
    %v1722 = vpop.f32.mrf.mxu0
    %1723 = vdwg.mxu0
    %vm1724 = vcmask 517120
    %v1725 = vsel %vm1724, %v1721, 0.0
    %v1726 = vrot.slane %v1725, 4
    %v1727 = vadd.f32 %v1725, %v1726
    %v1728 = vrot.slane %v1727, 2
    %v1729 = vadd.f32 %v1727, %v1728
    %v1730 = vrot.slane %v1729, 1
    %v1731 = vadd.f32 %v1729, %v1730
    %v1732 = vmul.f32 %v1731, 0.5
    %v1733 = vld [vmem:[%s3] sm:$0xff]
    %v1734 = vld [vmem:[%s3 + $0x8] sm:$0xff]
    %v1735 = vld [vmem:[%s3 + $0x10] sm:$0xff]
    %v1736 = vld [vmem:[%s3 + $0x18] sm:$0xff]
    %v1737 = vld [vmem:[%s3 + $0x20] sm:$0xff]
    %v1738 = vld [vmem:[%s3 + $0x28] sm:$0xff]
    %v1739 = vld [vmem:[%s3 + $0x30] sm:$0xff]
    %v1740 = vld [vmem:[%s3 + $0x38] sm:$0xff]
    %vm1741 = vcmask 523264
    %v1743 = vsel %vm1741, %v1732, 0
    %1745 = vmatprep.subr.mxu0 0.0
    %1746 = vmatpush1.msra.mxu0 0.0
    %1747 = vmatprep.subr.mxu0 0.0
    %1748 = vmatpush1.msra.mxu0 0.0
    %1749 = vmatprep.subr.mxu0 0.0
    %1750 = vmatpush1.msra.mxu0 0.0
    %1751 = vmatprep.subr.mxu0 0.0
    %1752 = vmatpush1.msra.mxu0 0.0
    %1753 = vmatprep.subr.mxu0 0.0
    %1754 = vmatpush1.msra.mxu0 0.0
    %1755 = vmatprep.subr.mxu0 0.0
    %1756 = vmatpush1.msra.mxu0 0.0
    %1757 = vmatprep.subr.mxu0 0.0
    %1758 = vmatpush1.msra.mxu0 0.0
    %1759 = vmatprep.subr.mxu0 0.0
    %1760 = vmatpush1.msra.mxu0 0.0
    %1761 = vmatprep.subr.mxu0 0.0
    %1762 = vmatpush1.msra.mxu0 %v1740
    %1763 = vmatprep.subr.mxu0 0.0
    %1764 = vmatpush1.msra.mxu0 %v1739
    %1765 = vmatprep.subr.mxu0 0.0
    %1766 = vmatpush1.msra.mxu0 %v1738
    %1767 = vmatprep.subr.mxu0 0.0
    %1768 = vmatpush1.msra.mxu0 %v1737
    %1769 = vmatprep.subr.mxu0 0.0
    %1770 = vmatpush1.msra.mxu0 %v1736
    %1771 = vmatprep.subr.mxu0 0.0
    %1772 = vmatpush1.msra.mxu0 %v1735
    %1773 = vmatprep.subr.mxu0 0.0
    %1774 = vmatpush1.msra.mxu0 %v1734
    %1775 = vmatprep.subr.mxu0 0.0
    %1776 = vmatpush1.msra.mxu0 %v1733
    %1777 = vmatprep.subr.mxu0 0.0
    %1778 = vmatpush2.msra.mxu0 0.0
    %1779 = vmatprep.subr.mxu0 0.0
    %1780 = vmatpush2.msra.mxu0 0.0
    %1781 = vmatprep.subr.mxu0 0.0
    %1782 = vmatpush2.msra.mxu0 0.0
    %1783 = vmatprep.subr.mxu0 0.0
    %1784 = vmatpush2.msra.mxu0 0.0
    %1785 = vmatprep.subr.mxu0 0.0
    %1786 = vmatpush2.msra.mxu0 0.0
    %1787 = vmatprep.subr.mxu0 0.0
    %1788 = vmatpush2.msra.mxu0 0.0
    %1789 = vmatprep.subr.mxu0 0.0
    %1790 = vmatpush2.msra.mxu0 0.0
    %1791 = vmatprep.subr.mxu0 0.0
    %1792 = vmatpush2.msra.mxu0 0.0
    %1793 = vmatprep.subr.mxu0 0.0
    %1794 = vmatpush2.msra.mxu0 0.0
    %1795 = vmatprep.subr.mxu0 0.0
    %1796 = vmatpush2.msra.mxu0 0.0
    %1797 = vmatprep.subr.mxu0 0.0
    %1798 = vmatpush2.msra.mxu0 0.0
    %1799 = vmatprep.subr.mxu0 0.0
    %1800 = vmatpush2.msra.mxu0 0.0
    %1801 = vmatprep.subr.mxu0 0.0
    %1802 = vmatpush2.msra.mxu0 0.0
    %1803 = vmatprep.subr.mxu0 0.0
    %1804 = vmatpush2.msra.mxu0 0.0
    %1805 = vmatprep.subr.mxu0 0.0
    %1806 = vmatpush2.msra.mxu0 0.0
    %1807 = vmatprep.subr.mxu0 0.0
    %1808 = vmatpush2.msra.mxu0 0.0
    %1809 = vmatprep.mubr.f32.mxu0 0.0
    %1810 = vmatmul.mubr.f32.gmra.mxu0 %v1743
    %v1811 = vpop.f32.mrf.mxu0
    %v1812 = vadd.f32 0.0, %v1811
    %v1813 = vpop.f32.mrf.mxu0
    %1814 = vdwg.mxu0
    %vm1815 = vcmp.eq.f32.partialorder %v1812, 0.0
    %v1816 = vsel %vm1815, 1.0, %v1812
    %v1817 = vrcp.pop %v1816
    %v1818 = vmul.f32 1.0, %v1817
    %v1819 = vsel %vm1815, 0.0, %v1818
    %v1820 = vlaneseq
    %v1821 = vshrl.u32 %v1820, 7
    %v1822 = vsub.s32 0, %v1821
    %v1823 = vrot.slane %v1819, %v1822
    %v1824 = vmul.f32 %v1721, %v1823
    %v1825 = vld [vmem:[%s4] sm:$0xff]
    %v1826 = vld [vmem:[%s4 + $0x8] sm:$0xff]
    %v1827 = vld [vmem:[%s4 + $0x10] sm:$0xff]
    %v1828 = vld [vmem:[%s4 + $0x18] sm:$0xff]
    %v1829 = vld [vmem:[%s4 + $0x20] sm:$0xff]
    %v1830 = vld [vmem:[%s4 + $0x28] sm:$0xff]
    %v1831 = vld [vmem:[%s4 + $0x30] sm:$0xff]
    %v1832 = vld [vmem:[%s4 + $0x38] sm:$0xff]
    %v1833 = vld [vmem:[%s4 + $0x40] sm:$0xff]
    %v1834 = vld [vmem:[%s4 + $0x48] sm:$0xff]
    %v1835 = vld [vmem:[%s4 + $0x50] sm:$0xff]
    %v1836 = vld [vmem:[%s4 + $0x58] sm:$0xff]
    %v1837 = vld [vmem:[%s6] ss:$8 sm:$0x3]
    %v1839 = vlaneseq
    %v1840 = vshrl.u32 %v1839, 7
    %v1841 = vsub.s32 0, %v1840
    %v1842 = vrot.slane %v1837, %v1841
    %v1843 = vlaneseq
    %v1844 = vshrl.u32 %v1843, 7
    %v1845 = vsub.s32 1, %v1844
    %v1846 = vrot.slane %v1837, %v1845
    %vm1849 = vcmask 392192
    %v1851 = vsel %vm1849, %v1824, 0
    %1853 = vmatprep.subr.mxu0 0.0
    %1854 = vmatpush1.msra.mxu0 0.0
    %1855 = vmatprep.subr.mxu0 0.0
    %1856 = vmatpush1.msra.mxu0 0.0
    %1857 = vmatprep.subr.mxu0 0.0
    %1858 = vmatpush1.msra.mxu0 0.0
    %1859 = vmatprep.subr.mxu0 0.0
    %1860 = vmatpush1.msra.mxu0 0.0
    %1861 = vmatprep.subr.mxu0 0.0
    %1862 = vmatpush1.msra.mxu0 0.0
    %1863 = vmatprep.subr.mxu0 0.0
    %1864 = vmatpush1.msra.mxu0 0.0
    %1865 = vmatprep.subr.mxu0 0.0
    %1866 = vmatpush1.msra.mxu0 0.0
    %1867 = vmatprep.subr.mxu0 0.0
    %1868 = vmatpush1.msra.mxu0 0.0
    %1869 = vmatprep.subr.mxu0 0.0
    %1870 = vmatpush1.msra.mxu0 0.0
    %1871 = vmatprep.subr.mxu0 0.0
    %1872 = vmatpush1.msra.mxu0 0.0
    %1873 = vmatprep.subr.mxu0 %v1836
    %1874 = vmatpush1.msra.mxu0 %v1835
    %1875 = vmatprep.subr.mxu0 %v1834
    %1876 = vmatpush1.msra.mxu0 %v1833
    %1877 = vmatprep.subr.mxu0 %v1832
    %1878 = vmatpush1.msra.mxu0 %v1831
    %1879 = vmatprep.subr.mxu0 %v1830
    %1880 = vmatpush1.msra.mxu0 %v1829
    %1881 = vmatprep.subr.mxu0 %v1828
    %1882 = vmatpush1.msra.mxu0 %v1827
    %1883 = vmatprep.subr.mxu0 %v1826
    %1884 = vmatpush1.msra.mxu0 %v1825
    %1885 = vmatprep.subr.mxu0 0.0
    %1886 = vmatpush2.msra.mxu0 0.0
    %1887 = vmatprep.subr.mxu0 0.0
    %1888 = vmatpush2.msra.mxu0 0.0
    %1889 = vmatprep.subr.mxu0 0.0
    %1890 = vmatpush2.msra.mxu0 0.0
    %1891 = vmatprep.subr.mxu0 0.0
    %1892 = vmatpush2.msra.mxu0 0.0
    %1893 = vmatprep.subr.mxu0 0.0
    %1894 = vmatpush2.msra.mxu0 0.0
    %1895 = vmatprep.subr.mxu0 0.0
    %1896 = vmatpush2.msra.mxu0 0.0
    %1897 = vmatprep.subr.mxu0 0.0
    %1898 = vmatpush2.msra.mxu0 0.0
    %1899 = vmatprep.subr.mxu0 0.0
    %1900 = vmatpush2.msra.mxu0 0.0
    %1901 = vmatprep.subr.mxu0 0.0
    %1902 = vmatpush2.msra.mxu0 0.0
    %1903 = vmatprep.subr.mxu0 0.0
    %1904 = vmatpush2.msra.mxu0 0.0
    %1905 = vmatprep.subr.mxu0 0.0
    %1906 = vmatpush2.msra.mxu0 0.0
    %1907 = vmatprep.subr.mxu0 0.0
    %1908 = vmatpush2.msra.mxu0 0.0
    %1909 = vmatprep.subr.mxu0 0.0
    %1910 = vmatpush2.msra.mxu0 0.0
    %1911 = vmatprep.subr.mxu0 0.0
    %1912 = vmatpush2.msra.mxu0 0.0
    %1913 = vmatprep.subr.mxu0 0.0
    %1914 = vmatpush2.msra.mxu0 0.0
    %1915 = vmatprep.subr.mxu0 0.0
    %1916 = vmatpush2.msra.mxu0 0.0
    %1917 = vmatprep.mubr.f32.mxu0 0.0
    %1918 = vmatmul.mubr.f32.gmra.mxu0 %v1851
    %v1919 = vpop.f32.mrf.mxu0
    %v1920 = vadd.f32 %v1842, %v1919
    %v1921 = vpop.f32.mrf.mxu0
    %v1922 = vadd.f32 %v1846, %v1921
    %1923 = vdwg.mxu0
    %v1924 = vsub.f32 0.0, %v1920
    %v1925 = vsub.f32 0.0, %v1922
    %v1926 = vmul.f32 %v1924, 1.442695
    %v1927 = vpow.pop %v1926
    %v1928 = vmul.f32 %v1925, 1.442695
    %v1929 = vpow.pop %v1928
    %v1930 = vadd.f32 %v1927, 1.0
    %v1931 = vadd.f32 %v1929, 1.0
    %v1932 = vrcp.pop %v1930
    %v1933 = vrcp.pop %v1931
    %v1934 = vmul.f32 %v1920, %v1932
    %v1935 = vmul.f32 %v1922, %v1933
    %v1936 = vld [vmem:[%s4 + $0x60] sm:$0xff]
    %v1937 = vld [vmem:[%s4 + $0x70] sm:$0xff]
    %v1938 = vld [vmem:[%s4 + $0x80] sm:$0xff]
    %v1939 = vld [vmem:[%s4 + $0x90] sm:$0xff]
    %v1940 = vld [vmem:[%s4 + $0xa0] sm:$0xff]
    %v1941 = vld [vmem:[%s4 + $0xb0] sm:$0xff]
    %v1942 = vld [vmem:[%s4 + $0xc0] sm:$0xff]
    %v1943 = vld [vmem:[%s4 + $0xd0] sm:$0xff]
    %v1944 = vld [vmem:[%s4 + $0xe0] sm:$0xff]
    %v1945 = vld [vmem:[%s4 + $0xf0] sm:$0xff]
    %v1946 = vld [vmem:[%s4 + $0x100] sm:$0xff]
    %v1947 = vld [vmem:[%s4 + $0x110] sm:$0xff]
    %v1948 = vld [vmem:[%s4 + $0x120] sm:$0xff]
    %v1949 = vld [vmem:[%s4 + $0x130] sm:$0xff]
    %v1950 = vld [vmem:[%s4 + $0x140] sm:$0xff]
    %v1951 = vld [vmem:[%s4 + $0x150] sm:$0xff]
    %v1952 = vld [vmem:[%s4 + $0x160] sm:$0xff]
    %v1953 = vld [vmem:[%s4 + $0x170] sm:$0xff]
    %v1954 = vld [vmem:[%s6 + $0x1] ss:$0 sm:$0xff]
    %vm1955 = vcmask 130048
    %v1957 = vsel %vm1955, %v1935, 0
    %1959 = vmatprep.subr.mxu0 0.0
    %1960 = vmatpush1.msra.mxu0 %v1951
    %1961 = vmatprep.subr.mxu0 0.0
    %1962 = vmatpush1.msra.mxu0 %v1950
    %1963 = vmatprep.subr.mxu0 0.0
    %1964 = vmatpush1.msra.mxu0 %v1949
    %1965 = vmatprep.subr.mxu0 0.0
    %1966 = vmatpush1.msra.mxu0 %v1948
    %1967 = vmatprep.subr.mxu0 0.0
    %1968 = vmatpush1.msra.mxu0 %v1947
    %1969 = vmatprep.subr.mxu0 0.0
    %1970 = vmatpush1.msra.mxu0 %v1946
    %1971 = vmatprep.subr.mxu0 0.0
    %1972 = vmatpush1.msra.mxu0 %v1945
    %1973 = vmatprep.subr.mxu0 0.0
    %1974 = vmatpush1.msra.mxu0 %v1944
    %1975 = vmatprep.subr.mxu0 0.0
    %1976 = vmatpush1.msra.mxu0 %v1943
    %1977 = vmatprep.subr.mxu0 0.0
    %1978 = vmatpush1.msra.mxu0 %v1942
    %1979 = vmatprep.subr.mxu0 0.0
    %1980 = vmatpush1.msra.mxu0 %v1941
    %1981 = vmatprep.subr.mxu0 0.0
    %1982 = vmatpush1.msra.mxu0 %v1940
    %1983 = vmatprep.subr.mxu0 0.0
    %1984 = vmatpush1.msra.mxu0 %v1939
    %1985 = vmatprep.subr.mxu0 0.0
    %1986 = vmatpush1.msra.mxu0 %v1938
    %1987 = vmatprep.subr.mxu0 0.0
    %1988 = vmatpush1.msra.mxu0 %v1937
    %1989 = vmatprep.subr.mxu0 0.0
    %1990 = vmatpush1.msra.mxu0 %v1936
    %1991 = vmatprep.subr.mxu0 0.0
    %1992 = vmatpush2.msra.mxu0 0.0
    %1993 = vmatprep.subr.mxu0 0.0
    %1994 = vmatpush2.msra.mxu0 0.0
    %1995 = vmatprep.subr.mxu0 0.0
    %1996 = vmatpush2.msra.mxu0 0.0
    %1997 = vmatprep.subr.mxu0 0.0
    %1998 = vmatpush2.msra.mxu0 0.0
    %1999 = vmatprep.subr.mxu0 0.0
    %2000 = vmatpush2.msra.mxu0 0.0
    %2001 = vmatprep.subr.mxu0 0.0
    %2002 = vmatpush2.msra.mxu0 0.0
    %2003 = vmatprep.subr.mxu0 0.0
    %2004 = vmatpush2.msra.mxu0 0.0
    %2005 = vmatprep.subr.mxu0 0.0
    %2006 = vmatpush2.msra.mxu0 0.0
    %2007 = vmatprep.subr.mxu0 0.0
    %2008 = vmatpush2.msra.mxu0 0.0
    %2009 = vmatprep.subr.mxu0 0.0
    %2010 = vmatpush2.msra.mxu0 0.0
    %2011 = vmatprep.subr.mxu0 0.0
    %2012 = vmatpush2.msra.mxu0 0.0
    %2013 = vmatprep.subr.mxu0 0.0
    %2014 = vmatpush2.msra.mxu0 0.0
    %2015 = vmatprep.subr.mxu0 0.0
    %2016 = vmatpush2.msra.mxu0 0.0
    %2017 = vmatprep.subr.mxu0 0.0
    %2018 = vmatpush2.msra.mxu0 0.0
    %2019 = vmatprep.subr.mxu0 0.0
    %2020 = vmatpush2.msra.mxu0 %v1953
    %2021 = vmatprep.subr.mxu0 0.0
    %2022 = vmatpush2.msra.mxu0 %v1952
    %2023 = vmatprep.mubr.f32.mxu0 %v1957
    %2024 = vmatmul.mubr.f32.gmra.mxu0 %v1934
    %v2025 = vpop.f32.mrf.mxu0
    %v2026 = vadd.f32 %v1954, %v2025
    %v2027 = vpop.f32.mrf.mxu0
    %2028 = vdwg.mxu0
    %v2029 = vsub.f32 0.0, %v2026
    %v2030 = vmul.f32 %v2029, 1.442695
    %v2031 = vpow.pop %v2030
    %v2032 = vadd.f32 %v2031, 1.0
    %v2033 = vrcp.pop %v2032
    %v2034 = vmul.f32 %v2026, %v2033
    %v2035 = vld [vmem:[%s4 + $0x180] sm:$0xff]
    %v2036 = vld [vmem:[%s4 + $0x190] sm:$0xff]
    %v2037 = vld [vmem:[%s4 + $0x1a0] sm:$0xff]
    %v2038 = vld [vmem:[%s4 + $0x1b0] sm:$0xff]
    %v2039 = vld [vmem:[%s4 + $0x1c0] sm:$0xff]
    %v2040 = vld [vmem:[%s4 + $0x1d0] sm:$0xff]
    %v2041 = vld [vmem:[%s4 + $0x1e0] sm:$0xff]
    %v2042 = vld [vmem:[%s4 + $0x1f0] sm:$0xff]
    %v2043 = vld [vmem:[%s4 + $0x200] sm:$0xff]
    %v2044 = vld [vmem:[%s4 + $0x210] sm:$0xff]
    %v2045 = vld [vmem:[%s4 + $0x220] sm:$0xff]
    %v2046 = vld [vmem:[%s4 + $0x230] sm:$0xff]
    %v2047 = vld [vmem:[%s6 + $0x2] ss:$0 sm:$0xff]
    %vm2048 = vcmask 785408
    %v2050 = vsel %vm2048, %v2034, 0
    %2052 = vmatprep.subr.mxu0 0.0
    %2053 = vmatpush1.msra.mxu0 0.0
    %2054 = vmatprep.subr.mxu0 0.0
    %2055 = vmatpush1.msra.mxu0 0.0
    %2056 = vmatprep.subr.mxu0 0.0
    %2057 = vmatpush1.msra.mxu0 0.0
    %2058 = vmatprep.subr.mxu0 0.0
    %2059 = vmatpush1.msra.mxu0 0.0
    %2060 = vmatprep.subr.mxu0 0.0
    %2061 = vmatpush1.msra.mxu0 %v2046
    %2062 = vmatprep.subr.mxu0 0.0
    %2063 = vmatpush1.msra.mxu0 %v2045
    %2064 = vmatprep.subr.mxu0 0.0
    %2065 = vmatpush1.msra.mxu0 %v2044
    %2066 = vmatprep.subr.mxu0 0.0
    %2067 = vmatpush1.msra.mxu0 %v2043
    %2068 = vmatprep.subr.mxu0 0.0
    %2069 = vmatpush1.msra.mxu0 %v2042
    %2070 = vmatprep.subr.mxu0 0.0
    %2071 = vmatpush1.msra.mxu0 %v2041
    %2072 = vmatprep.subr.mxu0 0.0
    %2073 = vmatpush1.msra.mxu0 %v2040
    %2074 = vmatprep.subr.mxu0 0.0
    %2075 = vmatpush1.msra.mxu0 %v2039
    %2076 = vmatprep.subr.mxu0 0.0
    %2077 = vmatpush1.msra.mxu0 %v2038
    %2078 = vmatprep.subr.mxu0 0.0
    %2079 = vmatpush1.msra.mxu0 %v2037
    %2080 = vmatprep.subr.mxu0 0.0
    %2081 = vmatpush1.msra.mxu0 %v2036
    %2082 = vmatprep.subr.mxu0 0.0
    %2083 = vmatpush1.msra.mxu0 %v2035
    %2084 = vmatprep.subr.mxu0 0.0
    %2085 = vmatpush2.msra.mxu0 0.0
    %2086 = vmatprep.subr.mxu0 0.0
    %2087 = vmatpush2.msra.mxu0 0.0
    %2088 = vmatprep.subr.mxu0 0.0
    %2089 = vmatpush2.msra.mxu0 0.0
    %2090 = vmatprep.subr.mxu0 0.0
    %2091 = vmatpush2.msra.mxu0 0.0
    %2092 = vmatprep.subr.mxu0 0.0
    %2093 = vmatpush2.msra.mxu0 0.0
    %2094 = vmatprep.subr.mxu0 0.0
    %2095 = vmatpush2.msra.mxu0 0.0
    %2096 = vmatprep.subr.mxu0 0.0
    %2097 = vmatpush2.msra.mxu0 0.0
    %2098 = vmatprep.subr.mxu0 0.0
    %2099 = vmatpush2.msra.mxu0 0.0
    %2100 = vmatprep.subr.mxu0 0.0
    %2101 = vmatpush2.msra.mxu0 0.0
    %2102 = vmatprep.subr.mxu0 0.0
    %2103 = vmatpush2.msra.mxu0 0.0
    %2104 = vmatprep.subr.mxu0 0.0
    %2105 = vmatpush2.msra.mxu0 0.0
    %2106 = vmatprep.subr.mxu0 0.0
    %2107 = vmatpush2.msra.mxu0 0.0
    %2108 = vmatprep.subr.mxu0 0.0
    %2109 = vmatpush2.msra.mxu0 0.0
    %2110 = vmatprep.subr.mxu0 0.0
    %2111 = vmatpush2.msra.mxu0 0.0
    %2112 = vmatprep.subr.mxu0 0.0
    %2113 = vmatpush2.msra.mxu0 0.0
    %2114 = vmatprep.subr.mxu0 0.0
    %2115 = vmatpush2.msra.mxu0 0.0
    %2116 = vmatprep.mubr.f32.mxu0 0.0
    %2117 = vmatmul.mubr.f32.gmra.mxu0 %v2050
    %v2118 = vpop.f32.mrf.mxu0
    %v2119 = vadd.f32 %v2047, %v2118
    %v2120 = vpop.f32.mrf.mxu0
    %2121 = vdwg.mxu0
    %v2122 = vsub.f32 0.0, %v2119
    %v2123 = vmul.f32 %v2122, 1.442695
    %v2124 = vpow.pop %v2123
    %v2125 = vadd.f32 %v2124, 1.0
    %v2126 = vrcp.pop %v2125
    %v2127 = vmul.f32 %v2119, %v2126
    %v2128 = vld [vmem:[%s4 + $0x240] sm:$0xff]
    %v2129 = vld [vmem:[%s4 + $0x248] sm:$0xff]
    %v2130 = vld [vmem:[%s4 + $0x250] sm:$0xff]
    %v2131 = vld [vmem:[%s4 + $0x258] sm:$0xff]
    %v2132 = vld [vmem:[%s4 + $0x260] sm:$0xff]
    %v2133 = vld [vmem:[%s4 + $0x268] sm:$0xff]
    %v2134 = vld [vmem:[%s4 + $0x270] sm:$0xff]
    %v2135 = vld [vmem:[%s4 + $0x278] sm:$0xff]
    %v2136 = vld [vmem:[%s4 + $0x280] sm:$0xff]
    %v2137 = vld [vmem:[%s4 + $0x288] sm:$0xff]
    %v2138 = vld [vmem:[%s4 + $0x290] sm:$0xff]
    %v2139 = vld [vmem:[%s4 + $0x298] sm:$0xff]
    %s2140 = scalar_lea.vmem %s6, 3
    %v2141 = vld [vmem:[%s2140] ss:$8 sm:$0x3]
    %v2143 = vlaneseq
    %v2144 = vshrl.u32 %v2143, 7
    %v2145 = vsub.s32 0, %v2144
    %v2146 = vrot.slane %v2141, %v2145
    %v2147 = vlaneseq
    %v2148 = vshrl.u32 %v2147, 7
    %v2149 = vsub.s32 1, %v2148
    %v2150 = vrot.slane %v2141, %v2149
    %v2154 = vsel %vm1849, %v2127, 0
    %2156 = vmatprep.subr.mxu0 0.0
    %2157 = vmatpush1.msra.mxu0 0.0
    %2158 = vmatprep.subr.mxu0 0.0
    %2159 = vmatpush1.msra.mxu0 0.0
    %2160 = vmatprep.subr.mxu0 0.0
    %2161 = vmatpush1.msra.mxu0 0.0
    %2162 = vmatprep.subr.mxu0 0.0
    %2163 = vmatpush1.msra.mxu0 0.0
    %2164 = vmatprep.subr.mxu0 0.0
    %2165 = vmatpush1.msra.mxu0 0.0
    %2166 = vmatprep.subr.mxu0 0.0
    %2167 = vmatpush1.msra.mxu0 0.0
    %2168 = vmatprep.subr.mxu0 0.0
    %2169 = vmatpush1.msra.mxu0 0.0
    %2170 = vmatprep.subr.mxu0 0.0
    %2171 = vmatpush1.msra.mxu0 0.0
    %2172 = vmatprep.subr.mxu0 0.0
    %2173 = vmatpush1.msra.mxu0 0.0
    %2174 = vmatprep.subr.mxu0 0.0
    %2175 = vmatpush1.msra.mxu0 0.0
    %2176 = vmatprep.subr.mxu0 %v2139
    %2177 = vmatpush1.msra.mxu0 %v2138
    %2178 = vmatprep.subr.mxu0 %v2137
    %2179 = vmatpush1.msra.mxu0 %v2136
    %2180 = vmatprep.subr.mxu0 %v2135
    %2181 = vmatpush1.msra.mxu0 %v2134
    %2182 = vmatprep.subr.mxu0 %v2133
    %2183 = vmatpush1.msra.mxu0 %v2132
    %2184 = vmatprep.subr.mxu0 %v2131
    %2185 = vmatpush1.msra.mxu0 %v2130
    %2186 = vmatprep.subr.mxu0 %v2129
    %2187 = vmatpush1.msra.mxu0 %v2128
    %2188 = vmatprep.subr.mxu0 0.0
    %2189 = vmatpush2.msra.mxu0 0.0
    %2190 = vmatprep.subr.mxu0 0.0
    %2191 = vmatpush2.msra.mxu0 0.0
    %2192 = vmatprep.subr.mxu0 0.0
    %2193 = vmatpush2.msra.mxu0 0.0
    %2194 = vmatprep.subr.mxu0 0.0
    %2195 = vmatpush2.msra.mxu0 0.0
    %2196 = vmatprep.subr.mxu0 0.0
    %2197 = vmatpush2.msra.mxu0 0.0
    %2198 = vmatprep.subr.mxu0 0.0
    %2199 = vmatpush2.msra.mxu0 0.0
    %2200 = vmatprep.subr.mxu0 0.0
    %2201 = vmatpush2.msra.mxu0 0.0
    %2202 = vmatprep.subr.mxu0 0.0
    %2203 = vmatpush2.msra.mxu0 0.0
    %2204 = vmatprep.subr.mxu0 0.0
    %2205 = vmatpush2.msra.mxu0 0.0
    %2206 = vmatprep.subr.mxu0 0.0
    %2207 = vmatpush2.msra.mxu0 0.0
    %2208 = vmatprep.subr.mxu0 0.0
    %2209 = vmatpush2.msra.mxu0 0.0
    %2210 = vmatprep.subr.mxu0 0.0
    %2211 = vmatpush2.msra.mxu0 0.0
    %2212 = vmatprep.subr.mxu0 0.0
    %2213 = vmatpush2.msra.mxu0 0.0
    %2214 = vmatprep.subr.mxu0 0.0
    %2215 = vmatpush2.msra.mxu0 0.0
    %2216 = vmatprep.subr.mxu0 0.0
    %2217 = vmatpush2.msra.mxu0 0.0
    %2218 = vmatprep.subr.mxu0 0.0
    %2219 = vmatpush2.msra.mxu0 0.0
    %2220 = vmatprep.mubr.f32.mxu0 0.0
    %2221 = vmatmul.mubr.f32.gmra.mxu0 %v2154
    %v2222 = vpop.f32.mrf.mxu0
    %v2223 = vadd.f32 %v2146, %v2222
    %v2224 = vpop.f32.mrf.mxu0
    %v2225 = vadd.f32 %v2150, %v2224
    %2226 = vdwg.mxu0
    %v2227 = vld [vmem:[%s5] sm:$0xf]
    %v2228 = vld [vmem:[%s5 + $0x8] sm:$0xf]
    %v2229 = vld [vmem:[%s5 + $0x10] sm:$0xf]
    %s2230 = scalar_lea.vmem %s6, 4
    %v2231 = vld [vmem:[%s2230] ss:$8 sm:$0x7]
    %v2233 = vlaneseq
    %v2234 = vshrl.u32 %v2233, 7
    %v2235 = vsub.s32 0, %v2234
    %v2236 = vrot.slane %v2231, %v2235
    %v2237 = vlaneseq
    %v2238 = vshrl.u32 %v2237, 7
    %v2239 = vsub.s32 1, %v2238
    %v2240 = vrot.slane %v2231, %v2239
    %v2241 = vlaneseq
    %v2242 = vshrl.u32 %v2241, 7
    %v2243 = vsub.s32 2, %v2242
    %v2244 = vrot.slane %v2231, %v2243
    %vm2248 = vcmask 31744
    %v2250 = vsel %vm2248, %v43, 0
    %vm2252 = vcmask 1043456
    %v2254 = vsel %vm2252, %v2227, 0
    %v2257 = vsel %vm2252, %v2228, 0
    %v2260 = vsel %vm2252, %v2229, 0
    %2262 = vmatprep.subr.mxu0 0.0
    %2263 = vmatpush1.msra.mxu0 0.0
    %2264 = vmatprep.subr.mxu0 0.0
    %2265 = vmatpush1.msra.mxu0 0.0
    %2266 = vmatprep.subr.mxu0 0.0
    %2267 = vmatpush1.msra.mxu0 0.0
    %2268 = vmatprep.subr.mxu0 0.0
    %2269 = vmatpush1.msra.mxu0 0.0
    %2270 = vmatprep.subr.mxu0 0.0
    %2271 = vmatpush1.msra.mxu0 0.0
    %2272 = vmatprep.subr.mxu0 0.0
    %2273 = vmatpush1.msra.mxu0 0.0
    %2274 = vmatprep.subr.mxu0 0.0
    %2275 = vmatpush1.msra.mxu0 0.0
    %2276 = vmatprep.subr.mxu0 0.0
    %2277 = vmatpush1.msra.mxu0 0.0
    %2278 = vmatprep.subr.mxu0 0.0
    %2279 = vmatpush1.msra.mxu0 0.0
    %2280 = vmatprep.subr.mxu0 0.0
    %2281 = vmatpush1.msra.mxu0 0.0
    %2282 = vmatprep.subr.mxu0 0.0
    %2283 = vmatpush1.msra.mxu0 0.0
    %2284 = vmatprep.subr.mxu0 0.0
    %2285 = vmatpush1.msra.mxu0 0.0
    %2286 = vmatprep.subr.mxu0 0.0
    %2287 = vmatpush1.msra.mxu0 0.0
    %2288 = vmatprep.subr.mxu0 0.0
    %2289 = vmatpush1.msra.mxu0 0.0
    %2290 = vmatprep.subr.mxu0 0.0
    %2291 = vmatpush1.msra.mxu0 0.0
    %2292 = vmatprep.subr.mxu0 %v2257
    %2293 = vmatpush1.msra.mxu0 %v2254
    %2294 = vmatprep.subr.mxu0 0.0
    %2295 = vmatpush2.msra.mxu0 0.0
    %2296 = vmatprep.subr.mxu0 0.0
    %2297 = vmatpush2.msra.mxu0 0.0
    %2298 = vmatprep.subr.mxu0 0.0
    %2299 = vmatpush2.msra.mxu0 0.0
    %2300 = vmatprep.subr.mxu0 0.0
    %2301 = vmatpush2.msra.mxu0 0.0
    %2302 = vmatprep.subr.mxu0 0.0
    %2303 = vmatpush2.msra.mxu0 0.0
    %2304 = vmatprep.subr.mxu0 0.0
    %2305 = vmatpush2.msra.mxu0 0.0
    %2306 = vmatprep.subr.mxu0 0.0
    %2307 = vmatpush2.msra.mxu0 0.0
    %2308 = vmatprep.subr.mxu0 0.0
    %2309 = vmatpush2.msra.mxu0 0.0
    %2310 = vmatprep.subr.mxu0 0.0
    %2311 = vmatpush2.msra.mxu0 0.0
    %2312 = vmatprep.subr.mxu0 0.0
    %2313 = vmatpush2.msra.mxu0 0.0
    %2314 = vmatprep.subr.mxu0 0.0
    %2315 = vmatpush2.msra.mxu0 0.0
    %2316 = vmatprep.subr.mxu0 0.0
    %2317 = vmatpush2.msra.mxu0 0.0
    %2318 = vmatprep.subr.mxu0 0.0
    %2319 = vmatpush2.msra.mxu0 0.0
    %2320 = vmatprep.subr.mxu0 0.0
    %2321 = vmatpush2.msra.mxu0 0.0
    %2322 = vmatprep.subr.mxu0 0.0
    %2323 = vmatpush2.msra.mxu0 0.0
    %2324 = vmatprep.subr.mxu0 0.0
    %2325 = vmatpush2.msra.mxu0 0.0
    %2326 = vmatprep.mubr.f32.mxu0 0.0
    %2327 = vmatmul.mubr.f32.gmra.mxu0 %v2250
    %v2328 = vpop.f32.mrf.mxu0
    %v2329 = vadd.f32 %v2236, %v2328
    %v2330 = vpop.f32.mrf.mxu0
    %v2331 = vadd.f32 %v2240, %v2330
    %2332 = vdwg.mxu0
    %2333 = vmatprep.subr.mxu0 0.0
    %2334 = vmatpush1.msra.mxu0 0.0
    %2335 = vmatprep.subr.mxu0 0.0
    %2336 = vmatpush1.msra.mxu0 0.0
    %2337 = vmatprep.subr.mxu0 0.0
    %2338 = vmatpush1.msra.mxu0 0.0
    %2339 = vmatprep.subr.mxu0 0.0
    %2340 = vmatpush1.msra.mxu0 0.0
    %2341 = vmatprep.subr.mxu0 0.0
    %2342 = vmatpush1.msra.mxu0 0.0
    %2343 = vmatprep.subr.mxu0 0.0
    %2344 = vmatpush1.msra.mxu0 0.0
    %2345 = vmatprep.subr.mxu0 0.0
    %2346 = vmatpush1.msra.mxu0 0.0
    %2347 = vmatprep.subr.mxu0 0.0
    %2348 = vmatpush1.msra.mxu0 0.0
    %2349 = vmatprep.subr.mxu0 0.0
    %2350 = vmatpush1.msra.mxu0 0.0
    %2351 = vmatprep.subr.mxu0 0.0
    %2352 = vmatpush1.msra.mxu0 0.0
    %2353 = vmatprep.subr.mxu0 0.0
    %2354 = vmatpush1.msra.mxu0 0.0
    %2355 = vmatprep.subr.mxu0 0.0
    %2356 = vmatpush1.msra.mxu0 0.0
    %2357 = vmatprep.subr.mxu0 0.0
    %2358 = vmatpush1.msra.mxu0 0.0
    %2359 = vmatprep.subr.mxu0 0.0
    %2360 = vmatpush1.msra.mxu0 0.0
    %2361 = vmatprep.subr.mxu0 0.0
    %2362 = vmatpush1.msra.mxu0 0.0
    %2363 = vmatprep.subr.mxu0 0.0
    %2364 = vmatpush1.msra.mxu0 %v2260
    %2365 = vmatprep.subr.mxu0 0.0
    %2366 = vmatpush2.msra.mxu0 0.0
    %2367 = vmatprep.subr.mxu0 0.0
    %2368 = vmatpush2.msra.mxu0 0.0
    %2369 = vmatprep.subr.mxu0 0.0
    %2370 = vmatpush2.msra.mxu0 0.0
    %2371 = vmatprep.subr.mxu0 0.0
    %2372 = vmatpush2.msra.mxu0 0.0
    %2373 = vmatprep.subr.mxu0 0.0
    %2374 = vmatpush2.msra.mxu0 0.0
    %2375 = vmatprep.subr.mxu0 0.0
    %2376 = vmatpush2.msra.mxu0 0.0
    %2377 = vmatprep.subr.mxu0 0.0
    %2378 = vmatpush2.msra.mxu0 0.0
    %2379 = vmatprep.subr.mxu0 0.0
    %2380 = vmatpush2.msra.mxu0 0.0
    %2381 = vmatprep.subr.mxu0 0.0
    %2382 = vmatpush2.msra.mxu0 0.0
    %2383 = vmatprep.subr.mxu0 0.0
    %2384 = vmatpush2.msra.mxu0 0.0
    %2385 = vmatprep.subr.mxu0 0.0
    %2386 = vmatpush2.msra.mxu0 0.0
    %2387 = vmatprep.subr.mxu0 0.0
    %2388 = vmatpush2.msra.mxu0 0.0
    %2389 = vmatprep.subr.mxu0 0.0
    %2390 = vmatpush2.msra.mxu0 0.0
    %2391 = vmatprep.subr.mxu0 0.0
    %2392 = vmatpush2.msra.mxu0 0.0
    %2393 = vmatprep.subr.mxu0 0.0
    %2394 = vmatpush2.msra.mxu0 0.0
    %2395 = vmatprep.subr.mxu0 0.0
    %2396 = vmatpush2.msra.mxu0 0.0
    %2397 = vmatprep.mubr.f32.mxu0 0.0
    %2398 = vmatmul.mubr.f32.gmra.mxu0 %v2250
    %v2399 = vpop.f32.mrf.mxu0
    %v2400 = vadd.f32 %v2244, %v2399
    %v2401 = vpop.f32.mrf.mxu0
    %2402 = vdwg.mxu0
    %v2403 = vsub.f32 0.0, %v2329
    %v2404 = vsub.f32 0.0, %v2331
    %v2405 = vsub.f32 0.0, %v2400
    %v2406 = vmul.f32 %v2403, 1.442695
    %v2407 = vpow.pop %v2406
    %v2408 = vmul.f32 %v2404, 1.442695
    %v2409 = vpow.pop %v2408
    %v2410 = vmul.f32 %v2405, 1.442695
    %v2411 = vpow.pop %v2410
    %v2412 = vadd.f32 %v2407, 1.0
    %v2413 = vadd.f32 %v2409, 1.0
    %v2414 = vadd.f32 %v2411, 1.0
    %v2415 = vrcp.pop %v2412
    %v2416 = vrcp.pop %v2413
    %v2417 = vrcp.pop %v2414
    %v2418 = vmul.f32 %v2329, %v2415
    %v2419 = vmul.f32 %v2331, %v2416
    %v2420 = vmul.f32 %v2400, %v2417
    %v2421 = vld [vmem:[%s5 + $0x18] sm:$0xff]
    %v2422 = vld [vmem:[%s5 + $0x20] sm:$0xff]
    %v2423 = vld [vmem:[%s5 + $0x28] sm:$0xff]
    %v2424 = vld [vmem:[%s5 + $0x30] sm:$0xff]
    %v2425 = vld [vmem:[%s5 + $0x38] sm:$0xff]
    %v2426 = vld [vmem:[%s5 + $0x40] sm:$0xff]
    %v2427 = vld [vmem:[%s5 + $0x48] sm:$0xff]
    %v2428 = vld [vmem:[%s5 + $0x50] sm:$0xff]
    %v2429 = vld [vmem:[%s5 + $0x58] sm:$0xff]
    %v2430 = vld [vmem:[%s5 + $0x60] sm:$0xff]
    %v2431 = vld [vmem:[%s5 + $0x68] sm:$0xff]
    %v2432 = vld [vmem:[%s5 + $0x70] sm:$0xff]
    %v2433 = vld [vmem:[%s5 + $0x78] sm:$0xff]
    %v2434 = vld [vmem:[%s5 + $0x80] sm:$0xff]
    %v2435 = vld [vmem:[%s5 + $0x88] sm:$0xff]
    %v2436 = vld [vmem:[%s5 + $0x90] sm:$0xff]
    %v2437 = vld [vmem:[%s5 + $0x98] sm:$0xff]
    %v2438 = vld [vmem:[%s5 + $0xa0] sm:$0xff]
    %v2439 = vld [vmem:[%s5 + $0xa8] sm:$0xff]
    %v2440 = vld [vmem:[%s5 + $0xb0] sm:$0xff]
    %v2441 = vld [vmem:[%s5 + $0xb8] sm:$0xff]
    %v2442 = vld [vmem:[%s5 + $0xc0] sm:$0xff]
    %v2443 = vld [vmem:[%s5 + $0xc8] sm:$0xff]
    %v2444 = vld [vmem:[%s5 + $0xd0] sm:$0xff]
    %v2445 = vld [vmem:[%s5 + $0xd8] sm:$0xff]
    %v2446 = vld [vmem:[%s5 + $0xe0] sm:$0xff]
    %v2447 = vld [vmem:[%s5 + $0xe8] sm:$0xff]
    %v2448 = vld [vmem:[%s5 + $0xf0] sm:$0xff]
    %v2449 = vld [vmem:[%s5 + $0xf8] sm:$0xff]
    %v2450 = vld [vmem:[%s5 + $0x100] sm:$0xff]
    %v2451 = vld [vmem:[%s5 + $0x108] sm:$0xff]
    %v2452 = vld [vmem:[%s5 + $0x110] sm:$0xff]
    %v2453 = vld [vmem:[%s5 + $0x118] sm:$0xff]
    %v2454 = vld [vmem:[%s5 + $0x120] sm:$0xff]
    %v2455 = vld [vmem:[%s5 + $0x128] sm:$0xff]
    %v2456 = vld [vmem:[%s5 + $0x130] sm:$0xff]
    %v2457 = vld [vmem:[%s5 + $0x138] sm:$0xff]
    %v2458 = vld [vmem:[%s5 + $0x140] sm:$0xff]
    %v2459 = vld [vmem:[%s5 + $0x148] sm:$0xff]
    %v2460 = vld [vmem:[%s5 + $0x150] sm:$0xff]
    %v2461 = vld [vmem:[%s5 + $0x158] sm:$0xff]
    %v2462 = vld [vmem:[%s5 + $0x160] sm:$0xff]
    %v2463 = vld [vmem:[%s5 + $0x168] sm:$0xff]
    %v2464 = vld [vmem:[%s5 + $0x170] sm:$0xff]
    %v2465 = vld [vmem:[%s5 + $0x178] sm:$0xff]
    %v2466 = vld [vmem:[%s5 + $0x180] sm:$0xff]
    %v2467 = vld [vmem:[%s5 + $0x188] sm:$0xff]
    %v2468 = vld [vmem:[%s5 + $0x190] sm:$0xff]
    %v2469 = vld [vmem:[%s5 + $0x198] sm:$0xff]
    %v2470 = vld [vmem:[%s5 + $0x1a0] sm:$0xff]
    %v2471 = vld [vmem:[%s5 + $0x1a8] sm:$0xff]
    %v2472 = vld [vmem:[%s5 + $0x1b0] sm:$0xff]
    %v2473 = vld [vmem:[%s5 + $0x1b8] sm:$0xff]
    %v2474 = vld [vmem:[%s5 + $0x1c0] sm:$0xff]
    %v2475 = vld [vmem:[%s5 + $0x1c8] sm:$0xff]
    %v2476 = vld [vmem:[%s5 + $0x1d0] sm:$0xff]
    %v2477 = vld [vmem:[%s5 + $0x1d8] sm:$0xff]
    %v2478 = vld [vmem:[%s5 + $0x1e0] sm:$0xff]
    %v2479 = vld [vmem:[%s5 + $0x1e8] sm:$0xff]
    %v2480 = vld [vmem:[%s5 + $0x1f0] sm:$0xff]
    %v2481 = vld [vmem:[%s5 + $0x1f8] sm:$0xff]
    %v2482 = vld [vmem:[%s5 + $0x200] sm:$0xff]
    %v2483 = vld [vmem:[%s5 + $0x208] sm:$0xff]
    %v2484 = vld [vmem:[%s5 + $0x210] sm:$0xff]
    %v2485 = vld [vmem:[%s5 + $0x218] sm:$0xff]
    %v2486 = vld [vmem:[%s5 + $0x220] sm:$0xff]
    %v2487 = vld [vmem:[%s5 + $0x228] sm:$0xff]
    %v2488 = vld [vmem:[%s5 + $0x230] sm:$0xff]
    %v2489 = vld [vmem:[%s5 + $0x238] sm:$0xff]
    %v2490 = vld [vmem:[%s5 + $0x240] sm:$0xff]
    %v2491 = vld [vmem:[%s5 + $0x248] sm:$0xff]
    %v2492 = vld [vmem:[%s5 + $0x250] sm:$0xff]
    %v2493 = vld [vmem:[%s5 + $0x258] sm:$0xff]
    %v2494 = vld [vmem:[%s5 + $0x260] sm:$0xff]
    %v2495 = vld [vmem:[%s5 + $0x268] sm:$0xff]
    %v2496 = vld [vmem:[%s5 + $0x270] sm:$0xff]
    %v2497 = vld [vmem:[%s5 + $0x278] sm:$0xff]
    %v2498 = vld [vmem:[%s5 + $0x280] sm:$0xff]
    %v2499 = vld [vmem:[%s5 + $0x288] sm:$0xff]
    %v2500 = vld [vmem:[%s5 + $0x290] sm:$0xff]
    %v2501 = vld [vmem:[%s5 + $0x298] sm:$0xff]
    %v2502 = vld [vmem:[%s5 + $0x2a0] sm:$0xff]
    %v2503 = vld [vmem:[%s5 + $0x2a8] sm:$0xff]
    %v2504 = vld [vmem:[%s5 + $0x2b0] sm:$0xff]
    %v2505 = vld [vmem:[%s5 + $0x2b8] sm:$0xff]
    %v2506 = vld [vmem:[%s5 + $0x2c0] sm:$0xff]
    %v2507 = vld [vmem:[%s5 + $0x2c8] sm:$0xff]
    %v2508 = vld [vmem:[%s5 + $0x2d0] sm:$0xff]
    %v2509 = vld [vmem:[%s5 + $0x2d8] sm:$0xff]
    %v2510 = vld [vmem:[%s5 + $0x2e0] sm:$0xff]
    %v2511 = vld [vmem:[%s5 + $0x2e8] sm:$0xff]
    %v2512 = vld [vmem:[%s5 + $0x2f0] sm:$0xff]
    %v2513 = vld [vmem:[%s5 + $0x2f8] sm:$0xff]
    %v2514 = vld [vmem:[%s5 + $0x300] sm:$0xff]
    %v2515 = vld [vmem:[%s5 + $0x308] sm:$0xff]
    %v2516 = vld [vmem:[%s5 + $0x310] sm:$0xff]
    %v2517 = vld [vmem:[%s5 + $0x318] sm:$0xff]
    %v2518 = vld [vmem:[%s5 + $0x320] sm:$0xff]
    %v2519 = vld [vmem:[%s5 + $0x328] sm:$0xff]
    %v2520 = vld [vmem:[%s5 + $0x330] sm:$0xff]
    %v2521 = vld [vmem:[%s5 + $0x338] sm:$0xff]
    %v2522 = vld [vmem:[%s5 + $0x340] sm:$0xff]
    %v2523 = vld [vmem:[%s5 + $0x348] sm:$0xff]
    %v2524 = vld [vmem:[%s5 + $0x350] sm:$0xff]
    %v2525 = vld [vmem:[%s5 + $0x358] sm:$0xff]
    %v2526 = vld [vmem:[%s5 + $0x360] sm:$0xff]
    %v2527 = vld [vmem:[%s5 + $0x368] sm:$0xff]
    %v2528 = vld [vmem:[%s5 + $0x370] sm:$0xff]
    %v2529 = vld [vmem:[%s5 + $0x378] sm:$0xff]
    %v2530 = vld [vmem:[%s5 + $0x380] sm:$0xff]
    %v2531 = vld [vmem:[%s5 + $0x388] sm:$0xff]
    %v2532 = vld [vmem:[%s5 + $0x390] sm:$0xff]
    %v2533 = vld [vmem:[%s5 + $0x398] sm:$0xff]
    %v2534 = vld [vmem:[%s5 + $0x3a0] sm:$0xff]
    %v2535 = vld [vmem:[%s5 + $0x3a8] sm:$0xff]
    %v2536 = vld [vmem:[%s5 + $0x3b0] sm:$0xff]
    %v2537 = vld [vmem:[%s5 + $0x3b8] sm:$0xff]
    %v2538 = vld [vmem:[%s5 + $0x3c0] sm:$0xff]
    %v2539 = vld [vmem:[%s5 + $0x3c8] sm:$0xff]
    %v2540 = vld [vmem:[%s5 + $0x3d0] sm:$0xff]
    %v2541 = vld [vmem:[%s5 + $0x3d8] sm:$0xff]
    %v2542 = vld [vmem:[%s5 + $0x3e0] sm:$0xff]
    %v2543 = vld [vmem:[%s5 + $0x3e8] sm:$0xff]
    %v2544 = vld [vmem:[%s5 + $0x3f0] sm:$0xff]
    %v2545 = vld [vmem:[%s5 + $0x3f8] sm:$0xff]
    %v2546 = vld [vmem:[%s5 + $0x400] sm:$0xff]
    %v2547 = vld [vmem:[%s5 + $0x408] sm:$0xff]
    %v2548 = vld [vmem:[%s5 + $0x410] sm:$0xff]
    %v2549 = vld [vmem:[%s5 + $0x418] sm:$0xff]
    %v2550 = vld [vmem:[%s5 + $0x420] sm:$0xff]
    %v2551 = vld [vmem:[%s5 + $0x428] sm:$0xff]
    %v2552 = vld [vmem:[%s5 + $0x430] sm:$0xff]
    %v2553 = vld [vmem:[%s5 + $0x438] sm:$0xff]
    %v2554 = vld [vmem:[%s5 + $0x440] sm:$0xff]
    %v2555 = vld [vmem:[%s5 + $0x448] sm:$0xff]
    %v2556 = vld [vmem:[%s5 + $0x450] sm:$0xff]
    %v2557 = vld [vmem:[%s5 + $0x458] sm:$0xff]
    %v2558 = vld [vmem:[%s5 + $0x460] sm:$0xff]
    %v2559 = vld [vmem:[%s5 + $0x468] sm:$0xff]
    %v2560 = vld [vmem:[%s5 + $0x470] sm:$0xff]
    %v2561 = vld [vmem:[%s5 + $0x478] sm:$0xff]
    %v2562 = vld [vmem:[%s5 + $0x480] sm:$0xff]
    %v2563 = vld [vmem:[%s5 + $0x488] sm:$0xff]
    %v2564 = vld [vmem:[%s5 + $0x490] sm:$0xff]
    %s2565 = scalar_lea.vmem %s6, 5
    %v2566 = vld [vmem:[%s2565] ss:$8 sm:$0x7]
    %v2568 = vlaneseq
    %v2569 = vshrl.u32 %v2568, 7
    %v2570 = vsub.s32 0, %v2569
    %v2571 = vrot.slane %v2566, %v2570
    %v2572 = vlaneseq
    %v2573 = vshrl.u32 %v2572, 7
    %v2574 = vsub.s32 1, %v2573
    %v2575 = vrot.slane %v2566, %v2574
    %v2576 = vlaneseq
    %v2577 = vshrl.u32 %v2576, 7
    %v2578 = vsub.s32 2, %v2577
    %v2579 = vrot.slane %v2566, %v2578
    %2583 = vmatprep.subr.mxu0 %v2467
    %2584 = vmatpush1.msra.mxu0 %v2466
    %2585 = vmatprep.subr.mxu0 %v2464
    %2586 = vmatpush1.msra.mxu0 %v2463
    %2587 = vmatprep.subr.mxu0 %v2461
    %2588 = vmatpush1.msra.mxu0 %v2460
    %2589 = vmatprep.subr.mxu0 %v2458
    %2590 = vmatpush1.msra.mxu0 %v2457
    %2591 = vmatprep.subr.mxu0 %v2455
    %2592 = vmatpush1.msra.mxu0 %v2454
    %2593 = vmatprep.subr.mxu0 %v2452
    %2594 = vmatpush1.msra.mxu0 %v2451
    %2595 = vmatprep.subr.mxu0 %v2449
    %2596 = vmatpush1.msra.mxu0 %v2448
    %2597 = vmatprep.subr.mxu0 %v2446
    %2598 = vmatpush1.msra.mxu0 %v2445
    %2599 = vmatprep.subr.mxu0 %v2443
    %2600 = vmatpush1.msra.mxu0 %v2442
    %2601 = vmatprep.subr.mxu0 %v2440
    %2602 = vmatpush1.msra.mxu0 %v2439
    %2603 = vmatprep.subr.mxu0 %v2437
    %2604 = vmatpush1.msra.mxu0 %v2436
    %2605 = vmatprep.subr.mxu0 %v2434
    %2606 = vmatpush1.msra.mxu0 %v2433
    %2607 = vmatprep.subr.mxu0 %v2431
    %2608 = vmatpush1.msra.mxu0 %v2430
    %2609 = vmatprep.subr.mxu0 %v2428
    %2610 = vmatpush1.msra.mxu0 %v2427
    %2611 = vmatprep.subr.mxu0 %v2425
    %2612 = vmatpush1.msra.mxu0 %v2424
    %2613 = vmatprep.subr.mxu0 %v2422
    %2614 = vmatpush1.msra.mxu0 %v2421
    %2615 = vmatprep.subr.mxu0 %v2515
    %2616 = vmatpush2.msra.mxu0 %v2514
    %2617 = vmatprep.subr.mxu0 %v2512
    %2618 = vmatpush2.msra.mxu0 %v2511
    %2619 = vmatprep.subr.mxu0 %v2509
    %2620 = vmatpush2.msra.mxu0 %v2508
    %2621 = vmatprep.subr.mxu0 %v2506
    %2622 = vmatpush2.msra.mxu0 %v2505
    %2623 = vmatprep.subr.mxu0 %v2503
    %2624 = vmatpush2.msra.mxu0 %v2502
    %2625 = vmatprep.subr.mxu0 %v2500
    %2626 = vmatpush2.msra.mxu0 %v2499
    %2627 = vmatprep.subr.mxu0 %v2497
    %2628 = vmatpush2.msra.mxu0 %v2496
    %2629 = vmatprep.subr.mxu0 %v2494
    %2630 = vmatpush2.msra.mxu0 %v2493
    %2631 = vmatprep.subr.mxu0 %v2491
    %2632 = vmatpush2.msra.mxu0 %v2490
    %2633 = vmatprep.subr.mxu0 %v2488
    %2634 = vmatpush2.msra.mxu0 %v2487
    %2635 = vmatprep.subr.mxu0 %v2485
    %2636 = vmatpush2.msra.mxu0 %v2484
    %2637 = vmatprep.subr.mxu0 %v2482
    %2638 = vmatpush2.msra.mxu0 %v2481
    %2639 = vmatprep.subr.mxu0 %v2479
    %2640 = vmatpush2.msra.mxu0 %v2478
    %2641 = vmatprep.subr.mxu0 %v2476
    %2642 = vmatpush2.msra.mxu0 %v2475
    %2643 = vmatprep.subr.mxu0 %v2473
    %2644 = vmatpush2.msra.mxu0 %v2472
    %2645 = vmatprep.subr.mxu0 %v2470
    %2646 = vmatpush2.msra.mxu0 %v2469
    %2647 = vmatprep.mubr.f32.mxu0 %v2419
    %2648 = vmatmul.mubr.f32.gmra.mxu0 %v2418
    %v2649 = vpop.f32.mrf.mxu0
    %v2650 = vadd.f32 %v2571, %v2649
    %v2651 = vpop.f32.mrf.mxu0
    %v2652 = vadd.f32 %v2575, %v2651
    %2653 = vdwg.mxu0
    %2654 = vmatprep.subr.mxu0 %v2563
    %2655 = vmatpush1.msra.mxu0 %v2562
    %2656 = vmatprep.subr.mxu0 %v2560
    %2657 = vmatpush1.msra.mxu0 %v2559
    %2658 = vmatprep.subr.mxu0 %v2557
    %2659 = vmatpush1.msra.mxu0 %v2556
    %2660 = vmatprep.subr.mxu0 %v2554
    %2661 = vmatpush1.msra.mxu0 %v2553
    %2662 = vmatprep.subr.mxu0 %v2551
    %2663 = vmatpush1.msra.mxu0 %v2550
    %2664 = vmatprep.subr.mxu0 %v2548
    %2665 = vmatpush1.msra.mxu0 %v2547
    %2666 = vmatprep.subr.mxu0 %v2545
    %2667 = vmatpush1.msra.mxu0 %v2544
    %2668 = vmatprep.subr.mxu0 %v2542
    %2669 = vmatpush1.msra.mxu0 %v2541
    %2670 = vmatprep.subr.mxu0 %v2539
    %2671 = vmatpush1.msra.mxu0 %v2538
    %2672 = vmatprep.subr.mxu0 %v2536
    %2673 = vmatpush1.msra.mxu0 %v2535
    %2674 = vmatprep.subr.mxu0 %v2533
    %2675 = vmatpush1.msra.mxu0 %v2532
    %2676 = vmatprep.subr.mxu0 %v2530
    %2677 = vmatpush1.msra.mxu0 %v2529
    %2678 = vmatprep.subr.mxu0 %v2527
    %2679 = vmatpush1.msra.mxu0 %v2526
    %2680 = vmatprep.subr.mxu0 %v2524
    %2681 = vmatpush1.msra.mxu0 %v2523
    %2682 = vmatprep.subr.mxu0 %v2521
    %2683 = vmatpush1.msra.mxu0 %v2520
    %2684 = vmatprep.subr.mxu0 %v2518
    %2685 = vmatpush1.msra.mxu0 %v2517
    %2686 = vmatprep.subr.mxu0 0.0
    %2687 = vmatpush2.msra.mxu0 0.0
    %2688 = vmatprep.subr.mxu0 0.0
    %2689 = vmatpush2.msra.mxu0 0.0
    %2690 = vmatprep.subr.mxu0 0.0
    %2691 = vmatpush2.msra.mxu0 0.0
    %2692 = vmatprep.subr.mxu0 0.0
    %2693 = vmatpush2.msra.mxu0 0.0
    %2694 = vmatprep.subr.mxu0 0.0
    %2695 = vmatpush2.msra.mxu0 0.0
    %2696 = vmatprep.subr.mxu0 0.0
    %2697 = vmatpush2.msra.mxu0 0.0
    %2698 = vmatprep.subr.mxu0 0.0
    %2699 = vmatpush2.msra.mxu0 0.0
    %2700 = vmatprep.subr.mxu0 0.0
    %2701 = vmatpush2.msra.mxu0 0.0
    %2702 = vmatprep.subr.mxu0 0.0
    %2703 = vmatpush2.msra.mxu0 0.0
    %2704 = vmatprep.subr.mxu0 0.0
    %2705 = vmatpush2.msra.mxu0 0.0
    %2706 = vmatprep.subr.mxu0 0.0
    %2707 = vmatpush2.msra.mxu0 0.0
    %2708 = vmatprep.subr.mxu0 0.0
    %2709 = vmatpush2.msra.mxu0 0.0
    %2710 = vmatprep.subr.mxu0 0.0
    %2711 = vmatpush2.msra.mxu0 0.0
    %2712 = vmatprep.subr.mxu0 0.0
    %2713 = vmatpush2.msra.mxu0 0.0
    %2714 = vmatprep.subr.mxu0 0.0
    %2715 = vmatpush2.msra.mxu0 0.0
    %2716 = vmatprep.subr.mxu0 0.0
    %2717 = vmatpush2.msra.mxu0 0.0
    %2718 = vmatprep.mubr.f32.mxu0 0.0
    %2719 = vmatmul.mubr.f32.gmra.mxu0 %v2420
    %v2720 = vpop.f32.mrf.mxu0
    %v2721 = vadd.f32 %v2650, %v2720
    %v2722 = vpop.f32.mrf.mxu0
    %v2723 = vadd.f32 %v2652, %v2722
    %2724 = vdwg.mxu0
    %2725 = vmatprep.subr.mxu0 0.0
    %2726 = vmatpush1.msra.mxu0 %v2468
    %2727 = vmatprep.subr.mxu0 0.0
    %2728 = vmatpush1.msra.mxu0 %v2465
    %2729 = vmatprep.subr.mxu0 0.0
    %2730 = vmatpush1.msra.mxu0 %v2462
    %2731 = vmatprep.subr.mxu0 0.0
    %2732 = vmatpush1.msra.mxu0 %v2459
    %2733 = vmatprep.subr.mxu0 0.0
    %2734 = vmatpush1.msra.mxu0 %v2456
    %2735 = vmatprep.subr.mxu0 0.0
    %2736 = vmatpush1.msra.mxu0 %v2453
    %2737 = vmatprep.subr.mxu0 0.0
    %2738 = vmatpush1.msra.mxu0 %v2450
    %2739 = vmatprep.subr.mxu0 0.0
    %2740 = vmatpush1.msra.mxu0 %v2447
    %2741 = vmatprep.subr.mxu0 0.0
    %2742 = vmatpush1.msra.mxu0 %v2444
    %2743 = vmatprep.subr.mxu0 0.0
    %2744 = vmatpush1.msra.mxu0 %v2441
    %2745 = vmatprep.subr.mxu0 0.0
    %2746 = vmatpush1.msra.mxu0 %v2438
    %2747 = vmatprep.subr.mxu0 0.0
    %2748 = vmatpush1.msra.mxu0 %v2435
    %2749 = vmatprep.subr.mxu0 0.0
    %2750 = vmatpush1.msra.mxu0 %v2432
    %2751 = vmatprep.subr.mxu0 0.0
    %2752 = vmatpush1.msra.mxu0 %v2429
    %2753 = vmatprep.subr.mxu0 0.0
    %2754 = vmatpush1.msra.mxu0 %v2426
    %2755 = vmatprep.subr.mxu0 0.0
    %2756 = vmatpush1.msra.mxu0 %v2423
    %2757 = vmatprep.subr.mxu0 0.0
    %2758 = vmatpush2.msra.mxu0 %v2516
    %2759 = vmatprep.subr.mxu0 0.0
    %2760 = vmatpush2.msra.mxu0 %v2513
    %2761 = vmatprep.subr.mxu0 0.0
    %2762 = vmatpush2.msra.mxu0 %v2510
    %2763 = vmatprep.subr.mxu0 0.0
    %2764 = vmatpush2.msra.mxu0 %v2507
    %2765 = vmatprep.subr.mxu0 0.0
    %2766 = vmatpush2.msra.mxu0 %v2504
    %2767 = vmatprep.subr.mxu0 0.0
    %2768 = vmatpush2.msra.mxu0 %v2501
    %2769 = vmatprep.subr.mxu0 0.0
    %2770 = vmatpush2.msra.mxu0 %v2498
    %2771 = vmatprep.subr.mxu0 0.0
    %2772 = vmatpush2.msra.mxu0 %v2495
    %2773 = vmatprep.subr.mxu0 0.0
    %2774 = vmatpush2.msra.mxu0 %v2492
    %2775 = vmatprep.subr.mxu0 0.0
    %2776 = vmatpush2.msra.mxu0 %v2489
    %2777 = vmatprep.subr.mxu0 0.0
    %2778 = vmatpush2.msra.mxu0 %v2486
    %2779 = vmatprep.subr.mxu0 0.0
    %2780 = vmatpush2.msra.mxu0 %v2483
    %2781 = vmatprep.subr.mxu0 0.0
    %2782 = vmatpush2.msra.mxu0 %v2480
    %2783 = vmatprep.subr.mxu0 0.0
    %2784 = vmatpush2.msra.mxu0 %v2477
    %2785 = vmatprep.subr.mxu0 0.0
    %2786 = vmatpush2.msra.mxu0 %v2474
    %2787 = vmatprep.subr.mxu0 0.0
    %2788 = vmatpush2.msra.mxu0 %v2471
    %2789 = vmatprep.mubr.f32.mxu0 %v2419
    %2790 = vmatmul.mubr.f32.gmra.mxu0 %v2418
    %v2791 = vpop.f32.mrf.mxu0
    %v2792 = vadd.f32 %v2579, %v2791
    %v2793 = vpop.f32.mrf.mxu0
    %2794 = vdwg.mxu0
    %2795 = vmatprep.subr.mxu0 0.0
    %2796 = vmatpush1.msra.mxu0 %v2564
    %2797 = vmatprep.subr.mxu0 0.0
    %2798 = vmatpush1.msra.mxu0 %v2561
    %2799 = vmatprep.subr.mxu0 0.0
    %2800 = vmatpush1.msra.mxu0 %v2558
    %2801 = vmatprep.subr.mxu0 0.0
    %2802 = vmatpush1.msra.mxu0 %v2555
    %2803 = vmatprep.subr.mxu0 0.0
    %2804 = vmatpush1.msra.mxu0 %v2552
    %2805 = vmatprep.subr.mxu0 0.0
    %2806 = vmatpush1.msra.mxu0 %v2549
    %2807 = vmatprep.subr.mxu0 0.0
    %2808 = vmatpush1.msra.mxu0 %v2546
    %2809 = vmatprep.subr.mxu0 0.0
    %2810 = vmatpush1.msra.mxu0 %v2543
    %2811 = vmatprep.subr.mxu0 0.0
    %2812 = vmatpush1.msra.mxu0 %v2540
    %2813 = vmatprep.subr.mxu0 0.0
    %2814 = vmatpush1.msra.mxu0 %v2537
    %2815 = vmatprep.subr.mxu0 0.0
    %2816 = vmatpush1.msra.mxu0 %v2534
    %2817 = vmatprep.subr.mxu0 0.0
    %2818 = vmatpush1.msra.mxu0 %v2531
    %2819 = vmatprep.subr.mxu0 0.0
    %2820 = vmatpush1.msra.mxu0 %v2528
    %2821 = vmatprep.subr.mxu0 0.0
    %2822 = vmatpush1.msra.mxu0 %v2525
    %2823 = vmatprep.subr.mxu0 0.0
    %2824 = vmatpush1.msra.mxu0 %v2522
    %2825 = vmatprep.subr.mxu0 0.0
    %2826 = vmatpush1.msra.mxu0 %v2519
    %2827 = vmatprep.subr.mxu0 0.0
    %2828 = vmatpush2.msra.mxu0 0.0
    %2829 = vmatprep.subr.mxu0 0.0
    %2830 = vmatpush2.msra.mxu0 0.0
    %2831 = vmatprep.subr.mxu0 0.0
    %2832 = vmatpush2.msra.mxu0 0.0
    %2833 = vmatprep.subr.mxu0 0.0
    %2834 = vmatpush2.msra.mxu0 0.0
    %2835 = vmatprep.subr.mxu0 0.0
    %2836 = vmatpush2.msra.mxu0 0.0
    %2837 = vmatprep.subr.mxu0 0.0
    %2838 = vmatpush2.msra.mxu0 0.0
    %2839 = vmatprep.subr.mxu0 0.0
    %2840 = vmatpush2.msra.mxu0 0.0
    %2841 = vmatprep.subr.mxu0 0.0
    %2842 = vmatpush2.msra.mxu0 0.0
    %2843 = vmatprep.subr.mxu0 0.0
    %2844 = vmatpush2.msra.mxu0 0.0
    %2845 = vmatprep.subr.mxu0 0.0
    %2846 = vmatpush2.msra.mxu0 0.0
    %2847 = vmatprep.subr.mxu0 0.0
    %2848 = vmatpush2.msra.mxu0 0.0
    %2849 = vmatprep.subr.mxu0 0.0
    %2850 = vmatpush2.msra.mxu0 0.0
    %2851 = vmatprep.subr.mxu0 0.0
    %2852 = vmatpush2.msra.mxu0 0.0
    %2853 = vmatprep.subr.mxu0 0.0
    %2854 = vmatpush2.msra.mxu0 0.0
    %2855 = vmatprep.subr.mxu0 0.0
    %2856 = vmatpush2.msra.mxu0 0.0
    %2857 = vmatprep.subr.mxu0 0.0
    %2858 = vmatpush2.msra.mxu0 0.0
    %2859 = vmatprep.mubr.f32.mxu0 0.0
    %2860 = vmatmul.mubr.f32.gmra.mxu0 %v2420
    %v2861 = vpop.f32.mrf.mxu0
    %v2862 = vadd.f32 %v2792, %v2861
    %v2863 = vpop.f32.mrf.mxu0
    %2864 = vdwg.mxu0
    %v2865 = vsub.f32 0.0, %v2721
    %v2866 = vsub.f32 0.0, %v2723
    %v2867 = vsub.f32 0.0, %v2862
    %v2868 = vmul.f32 %v2865, 1.442695
    %v2869 = vpow.pop %v2868
    %v2870 = vmul.f32 %v2866, 1.442695
    %v2871 = vpow.pop %v2870
    %v2872 = vmul.f32 %v2867, 1.442695
    %v2873 = vpow.pop %v2872
    %v2874 = vadd.f32 %v2869, 1.0
    %v2875 = vadd.f32 %v2871, 1.0
    %v2876 = vadd.f32 %v2873, 1.0
    %v2877 = vrcp.pop %v2874
    %v2878 = vrcp.pop %v2875
    %v2879 = vrcp.pop %v2876
    %v2880 = vmul.f32 %v2721, %v2877
    %v2881 = vmul.f32 %v2723, %v2878
    %v2882 = vmul.f32 %v2862, %v2879
    %v2883 = vld [vmem:[%s5 + $0x498] sm:$0xff]
    %v2884 = vld [vmem:[%s5 + $0x4a0] sm:$0xff]
    %v2885 = vld [vmem:[%s5 + $0x4a8] sm:$0xff]
    %v2886 = vld [vmem:[%s5 + $0x4b0] sm:$0xff]
    %v2887 = vld [vmem:[%s5 + $0x4b8] sm:$0xff]
    %v2888 = vld [vmem:[%s5 + $0x4c0] sm:$0xff]
    %v2889 = vld [vmem:[%s5 + $0x4c8] sm:$0xff]
    %v2890 = vld [vmem:[%s5 + $0x4d0] sm:$0xff]
    %v2891 = vld [vmem:[%s5 + $0x4d8] sm:$0xff]
    %v2892 = vld [vmem:[%s5 + $0x4e0] sm:$0xff]
    %v2893 = vld [vmem:[%s5 + $0x4e8] sm:$0xff]
    %v2894 = vld [vmem:[%s5 + $0x4f0] sm:$0xff]
    %v2895 = vld [vmem:[%s5 + $0x4f8] sm:$0xff]
    %v2896 = vld [vmem:[%s5 + $0x500] sm:$0xff]
    %v2897 = vld [vmem:[%s5 + $0x508] sm:$0xff]
    %v2898 = vld [vmem:[%s5 + $0x510] sm:$0xff]
    %v2899 = vld [vmem:[%s5 + $0x518] sm:$0xff]
    %v2900 = vld [vmem:[%s5 + $0x520] sm:$0xff]
    %v2901 = vld [vmem:[%s5 + $0x528] sm:$0xff]
    %v2902 = vld [vmem:[%s5 + $0x530] sm:$0xff]
    %v2903 = vld [vmem:[%s5 + $0x538] sm:$0xff]
    %v2904 = vld [vmem:[%s5 + $0x540] sm:$0xff]
    %v2905 = vld [vmem:[%s5 + $0x548] sm:$0xff]
    %v2906 = vld [vmem:[%s5 + $0x550] sm:$0xff]
    %v2907 = vld [vmem:[%s5 + $0x558] sm:$0xff]
    %v2908 = vld [vmem:[%s5 + $0x560] sm:$0xff]
    %v2909 = vld [vmem:[%s5 + $0x568] sm:$0xff]
    %v2910 = vld [vmem:[%s5 + $0x570] sm:$0xff]
    %v2911 = vld [vmem:[%s5 + $0x578] sm:$0xff]
    %v2912 = vld [vmem:[%s5 + $0x580] sm:$0xff]
    %v2913 = vld [vmem:[%s5 + $0x588] sm:$0xff]
    %v2914 = vld [vmem:[%s5 + $0x590] sm:$0xff]
    %v2915 = vld [vmem:[%s5 + $0x598] sm:$0xff]
    %v2916 = vld [vmem:[%s5 + $0x5a0] sm:$0xff]
    %v2917 = vld [vmem:[%s5 + $0x5a8] sm:$0xff]
    %v2918 = vld [vmem:[%s5 + $0x5b0] sm:$0xff]
    %v2919 = vld [vmem:[%s5 + $0x5b8] sm:$0xff]
    %v2920 = vld [vmem:[%s5 + $0x5c0] sm:$0xff]
    %v2921 = vld [vmem:[%s5 + $0x5c8] sm:$0xff]
    %v2922 = vld [vmem:[%s5 + $0x5d0] sm:$0xff]
    %v2923 = vld [vmem:[%s5 + $0x5d8] sm:$0xff]
    %v2924 = vld [vmem:[%s5 + $0x5e0] sm:$0xff]
    %v2925 = vld [vmem:[%s5 + $0x5e8] sm:$0xff]
    %v2926 = vld [vmem:[%s5 + $0x5f0] sm:$0xff]
    %v2927 = vld [vmem:[%s5 + $0x5f8] sm:$0xff]
    %v2928 = vld [vmem:[%s5 + $0x600] sm:$0xff]
    %v2929 = vld [vmem:[%s5 + $0x608] sm:$0xff]
    %v2930 = vld [vmem:[%s5 + $0x610] sm:$0xff]
    %v2931 = vld [vmem:[%s5 + $0x618] sm:$0xff]
    %v2932 = vld [vmem:[%s5 + $0x620] sm:$0xff]
    %v2933 = vld [vmem:[%s5 + $0x628] sm:$0xff]
    %v2934 = vld [vmem:[%s5 + $0x630] sm:$0xff]
    %v2935 = vld [vmem:[%s5 + $0x638] sm:$0xff]
    %v2936 = vld [vmem:[%s5 + $0x640] sm:$0xff]
    %v2937 = vld [vmem:[%s5 + $0x648] sm:$0xff]
    %v2938 = vld [vmem:[%s5 + $0x650] sm:$0xff]
    %v2939 = vld [vmem:[%s5 + $0x658] sm:$0xff]
    %v2940 = vld [vmem:[%s5 + $0x660] sm:$0xff]
    %v2941 = vld [vmem:[%s5 + $0x668] sm:$0xff]
    %v2942 = vld [vmem:[%s5 + $0x670] sm:$0xff]
    %v2943 = vld [vmem:[%s5 + $0x678] sm:$0xff]
    %v2944 = vld [vmem:[%s5 + $0x680] sm:$0xff]
    %v2945 = vld [vmem:[%s5 + $0x688] sm:$0xff]
    %v2946 = vld [vmem:[%s5 + $0x690] sm:$0xff]
    %v2947 = vld [vmem:[%s5 + $0x698] sm:$0xff]
    %v2948 = vld [vmem:[%s5 + $0x6a0] sm:$0xff]
    %v2949 = vld [vmem:[%s5 + $0x6a8] sm:$0xff]
    %v2950 = vld [vmem:[%s5 + $0x6b0] sm:$0xff]
    %v2951 = vld [vmem:[%s5 + $0x6b8] sm:$0xff]
    %v2952 = vld [vmem:[%s5 + $0x6c0] sm:$0xff]
    %v2953 = vld [vmem:[%s5 + $0x6c8] sm:$0xff]
    %v2954 = vld [vmem:[%s5 + $0x6d0] sm:$0xff]
    %v2955 = vld [vmem:[%s5 + $0x6d8] sm:$0xff]
    %v2956 = vld [vmem:[%s5 + $0x6e0] sm:$0xff]
    %v2957 = vld [vmem:[%s5 + $0x6e8] sm:$0xff]
    %v2958 = vld [vmem:[%s5 + $0x6f0] sm:$0xff]
    %v2959 = vld [vmem:[%s5 + $0x6f8] sm:$0xff]
    %v2960 = vld [vmem:[%s5 + $0x700] sm:$0xff]
    %v2961 = vld [vmem:[%s5 + $0x708] sm:$0xff]
    %v2962 = vld [vmem:[%s5 + $0x710] sm:$0xff]
    %v2963 = vld [vmem:[%s5 + $0x718] sm:$0xff]
    %v2964 = vld [vmem:[%s5 + $0x720] sm:$0xff]
    %v2965 = vld [vmem:[%s5 + $0x728] sm:$0xff]
    %v2966 = vld [vmem:[%s5 + $0x730] sm:$0xff]
    %v2967 = vld [vmem:[%s5 + $0x738] sm:$0xff]
    %v2968 = vld [vmem:[%s5 + $0x740] sm:$0xff]
    %v2969 = vld [vmem:[%s5 + $0x748] sm:$0xff]
    %v2970 = vld [vmem:[%s5 + $0x750] sm:$0xff]
    %v2971 = vld [vmem:[%s5 + $0x758] sm:$0xff]
    %v2972 = vld [vmem:[%s5 + $0x760] sm:$0xff]
    %v2973 = vld [vmem:[%s5 + $0x768] sm:$0xff]
    %v2974 = vld [vmem:[%s5 + $0x770] sm:$0xff]
    %v2975 = vld [vmem:[%s5 + $0x778] sm:$0xff]
    %v2976 = vld [vmem:[%s5 + $0x780] sm:$0xff]
    %v2977 = vld [vmem:[%s5 + $0x788] sm:$0xff]
    %v2978 = vld [vmem:[%s5 + $0x790] sm:$0xff]
    %v2979 = vld [vmem:[%s5 + $0x798] sm:$0xff]
    %v2980 = vld [vmem:[%s5 + $0x7a0] sm:$0xff]
    %v2981 = vld [vmem:[%s5 + $0x7a8] sm:$0xff]
    %v2982 = vld [vmem:[%s5 + $0x7b0] sm:$0xff]
    %v2983 = vld [vmem:[%s5 + $0x7b8] sm:$0xff]
    %v2984 = vld [vmem:[%s5 + $0x7c0] sm:$0xff]
    %v2985 = vld [vmem:[%s5 + $0x7c8] sm:$0xff]
    %v2986 = vld [vmem:[%s5 + $0x7d0] sm:$0xff]
    %v2987 = vld [vmem:[%s5 + $0x7d8] sm:$0xff]
    %v2988 = vld [vmem:[%s5 + $0x7e0] sm:$0xff]
    %v2989 = vld [vmem:[%s5 + $0x7e8] sm:$0xff]
    %v2990 = vld [vmem:[%s5 + $0x7f0] sm:$0xff]
    %v2991 = vld [vmem:[%s5 + $0x7f8] sm:$0xff]
    %v2992 = vld [vmem:[%s5 + $0x800] sm:$0xff]
    %v2993 = vld [vmem:[%s5 + $0x808] sm:$0xff]
    %v2994 = vld [vmem:[%s5 + $0x810] sm:$0xff]
    %v2995 = vld [vmem:[%s5 + $0x818] sm:$0xff]
    %v2996 = vld [vmem:[%s5 + $0x820] sm:$0xff]
    %v2997 = vld [vmem:[%s5 + $0x828] sm:$0xff]
    %v2998 = vld [vmem:[%s5 + $0x830] sm:$0xff]
    %v2999 = vld [vmem:[%s5 + $0x838] sm:$0xff]
    %v3000 = vld [vmem:[%s5 + $0x840] sm:$0xff]
    %v3001 = vld [vmem:[%s5 + $0x848] sm:$0xff]
    %v3002 = vld [vmem:[%s5 + $0x850] sm:$0xff]
    %v3003 = vld [vmem:[%s5 + $0x858] sm:$0xff]
    %v3004 = vld [vmem:[%s5 + $0x860] sm:$0xff]
    %v3005 = vld [vmem:[%s5 + $0x868] sm:$0xff]
    %v3006 = vld [vmem:[%s5 + $0x870] sm:$0xff]
    %v3007 = vld [vmem:[%s5 + $0x878] sm:$0xff]
    %v3008 = vld [vmem:[%s5 + $0x880] sm:$0xff]
    %v3009 = vld [vmem:[%s5 + $0x888] sm:$0xff]
    %v3010 = vld [vmem:[%s5 + $0x890] sm:$0xff]
    %v3011 = vld [vmem:[%s5 + $0x898] sm:$0xff]
    %v3012 = vld [vmem:[%s5 + $0x8a0] sm:$0xff]
    %v3013 = vld [vmem:[%s5 + $0x8a8] sm:$0xff]
    %v3014 = vld [vmem:[%s5 + $0x8b0] sm:$0xff]
    %v3015 = vld [vmem:[%s5 + $0x8b8] sm:$0xff]
    %v3016 = vld [vmem:[%s5 + $0x8c0] sm:$0xff]
    %v3017 = vld [vmem:[%s5 + $0x8c8] sm:$0xff]
    %v3018 = vld [vmem:[%s5 + $0x8d0] sm:$0xff]
    %v3019 = vld [vmem:[%s5 + $0x8d8] sm:$0xff]
    %v3020 = vld [vmem:[%s5 + $0x8e0] sm:$0xff]
    %v3021 = vld [vmem:[%s5 + $0x8e8] sm:$0xff]
    %v3022 = vld [vmem:[%s5 + $0x8f0] sm:$0xff]
    %v3023 = vld [vmem:[%s5 + $0x8f8] sm:$0xff]
    %v3024 = vld [vmem:[%s5 + $0x900] sm:$0xff]
    %v3025 = vld [vmem:[%s5 + $0x908] sm:$0xff]
    %v3026 = vld [vmem:[%s5 + $0x910] sm:$0xff]
    %s3027 = scalar_lea.vmem %s6, 6
    %v3028 = vld [vmem:[%s3027] ss:$8 sm:$0x7]
    %v3030 = vlaneseq
    %v3031 = vshrl.u32 %v3030, 7
    %v3032 = vsub.s32 0, %v3031
    %v3033 = vrot.slane %v3028, %v3032
    %v3034 = vlaneseq
    %v3035 = vshrl.u32 %v3034, 7
    %v3036 = vsub.s32 1, %v3035
    %v3037 = vrot.slane %v3028, %v3036
    %v3038 = vlaneseq
    %v3039 = vshrl.u32 %v3038, 7
    %v3040 = vsub.s32 2, %v3039
    %v3041 = vrot.slane %v3028, %v3040
    %3045 = vmatprep.subr.mxu0 %v2929
    %3046 = vmatpush1.msra.mxu0 %v2928
    %3047 = vmatprep.subr.mxu0 %v2926
    %3048 = vmatpush1.msra.mxu0 %v2925
    %3049 = vmatprep.subr.mxu0 %v2923
    %3050 = vmatpush1.msra.mxu0 %v2922
    %3051 = vmatprep.subr.mxu0 %v2920
    %3052 = vmatpush1.msra.mxu0 %v2919
    %3053 = vmatprep.subr.mxu0 %v2917
    %3054 = vmatpush1.msra.mxu0 %v2916
    %3055 = vmatprep.subr.mxu0 %v2914
    %3056 = vmatpush1.msra.mxu0 %v2913
    %3057 = vmatprep.subr.mxu0 %v2911
    %3058 = vmatpush1.msra.mxu0 %v2910
    %3059 = vmatprep.subr.mxu0 %v2908
    %3060 = vmatpush1.msra.mxu0 %v2907
    %3061 = vmatprep.subr.mxu0 %v2905
    %3062 = vmatpush1.msra.mxu0 %v2904
    %3063 = vmatprep.subr.mxu0 %v2902
    %3064 = vmatpush1.msra.mxu0 %v2901
    %3065 = vmatprep.subr.mxu0 %v2899
    %3066 = vmatpush1.msra.mxu0 %v2898
    %3067 = vmatprep.subr.mxu0 %v2896
    %3068 = vmatpush1.msra.mxu0 %v2895
    %3069 = vmatprep.subr.mxu0 %v2893
    %3070 = vmatpush1.msra.mxu0 %v2892
    %3071 = vmatprep.subr.mxu0 %v2890
    %3072 = vmatpush1.msra.mxu0 %v2889
    %3073 = vmatprep.subr.mxu0 %v2887
    %3074 = vmatpush1.msra.mxu0 %v2886
    %3075 = vmatprep.subr.mxu0 %v2884
    %3076 = vmatpush1.msra.mxu0 %v2883
    %3077 = vmatprep.subr.mxu0 %v2977
    %3078 = vmatpush2.msra.mxu0 %v2976
    %3079 = vmatprep.subr.mxu0 %v2974
    %3080 = vmatpush2.msra.mxu0 %v2973
    %3081 = vmatprep.subr.mxu0 %v2971
    %3082 = vmatpush2.msra.mxu0 %v2970
    %3083 = vmatprep.subr.mxu0 %v2968
    %3084 = vmatpush2.msra.mxu0 %v2967
    %3085 = vmatprep.subr.mxu0 %v2965
    %3086 = vmatpush2.msra.mxu0 %v2964
    %3087 = vmatprep.subr.mxu0 %v2962
    %3088 = vmatpush2.msra.mxu0 %v2961
    %3089 = vmatprep.subr.mxu0 %v2959
    %3090 = vmatpush2.msra.mxu0 %v2958
    %3091 = vmatprep.subr.mxu0 %v2956
    %3092 = vmatpush2.msra.mxu0 %v2955
    %3093 = vmatprep.subr.mxu0 %v2953
    %3094 = vmatpush2.msra.mxu0 %v2952
    %3095 = vmatprep.subr.mxu0 %v2950
    %3096 = vmatpush2.msra.mxu0 %v2949
    %3097 = vmatprep.subr.mxu0 %v2947
    %3098 = vmatpush2.msra.mxu0 %v2946
    %3099 = vmatprep.subr.mxu0 %v2944
    %3100 = vmatpush2.msra.mxu0 %v2943
    %3101 = vmatprep.subr.mxu0 %v2941
    %3102 = vmatpush2.msra.mxu0 %v2940
    %3103 = vmatprep.subr.mxu0 %v2938
    %3104 = vmatpush2.msra.mxu0 %v2937
    %3105 = vmatprep.subr.mxu0 %v2935
    %3106 = vmatpush2.msra.mxu0 %v2934
    %3107 = vmatprep.subr.mxu0 %v2932
    %3108 = vmatpush2.msra.mxu0 %v2931
    %3109 = vmatprep.mubr.f32.mxu0 %v2881
    %3110 = vmatmul.mubr.f32.gmra.mxu0 %v2880
    %v3111 = vpop.f32.mrf.mxu0
    %v3112 = vadd.f32 %v3033, %v3111
    %v3113 = vpop.f32.mrf.mxu0
    %v3114 = vadd.f32 %v3037, %v3113
    %3115 = vdwg.mxu0
    %3116 = vmatprep.subr.mxu0 %v3025
    %3117 = vmatpush1.msra.mxu0 %v3024
    %3118 = vmatprep.subr.mxu0 %v3022
    %3119 = vmatpush1.msra.mxu0 %v3021
    %3120 = vmatprep.subr.mxu0 %v3019
    %3121 = vmatpush1.msra.mxu0 %v3018
    %3122 = vmatprep.subr.mxu0 %v3016
    %3123 = vmatpush1.msra.mxu0 %v3015
    %3124 = vmatprep.subr.mxu0 %v3013
    %3125 = vmatpush1.msra.mxu0 %v3012
    %3126 = vmatprep.subr.mxu0 %v3010
    %3127 = vmatpush1.msra.mxu0 %v3009
    %3128 = vmatprep.subr.mxu0 %v3007
    %3129 = vmatpush1.msra.mxu0 %v3006
    %3130 = vmatprep.subr.mxu0 %v3004
    %3131 = vmatpush1.msra.mxu0 %v3003
    %3132 = vmatprep.subr.mxu0 %v3001
    %3133 = vmatpush1.msra.mxu0 %v3000
    %3134 = vmatprep.subr.mxu0 %v2998
    %3135 = vmatpush1.msra.mxu0 %v2997
    %3136 = vmatprep.subr.mxu0 %v2995
    %3137 = vmatpush1.msra.mxu0 %v2994
    %3138 = vmatprep.subr.mxu0 %v2992
    %3139 = vmatpush1.msra.mxu0 %v2991
    %3140 = vmatprep.subr.mxu0 %v2989
    %3141 = vmatpush1.msra.mxu0 %v2988
    %3142 = vmatprep.subr.mxu0 %v2986
    %3143 = vmatpush1.msra.mxu0 %v2985
    %3144 = vmatprep.subr.mxu0 %v2983
    %3145 = vmatpush1.msra.mxu0 %v2982
    %3146 = vmatprep.subr.mxu0 %v2980
    %3147 = vmatpush1.msra.mxu0 %v2979
    %3148 = vmatprep.subr.mxu0 0.0
    %3149 = vmatpush2.msra.mxu0 0.0
    %3150 = vmatprep.subr.mxu0 0.0
    %3151 = vmatpush2.msra.mxu0 0.0
    %3152 = vmatprep.subr.mxu0 0.0
    %3153 = vmatpush2.msra.mxu0 0.0
    %3154 = vmatprep.subr.mxu0 0.0
    %3155 = vmatpush2.msra.mxu0 0.0
    %3156 = vmatprep.subr.mxu0 0.0
    %3157 = vmatpush2.msra.mxu0 0.0
    %3158 = vmatprep.subr.mxu0 0.0
    %3159 = vmatpush2.msra.mxu0 0.0
    %3160 = vmatprep.subr.mxu0 0.0
    %3161 = vmatpush2.msra.mxu0 0.0
    %3162 = vmatprep.subr.mxu0 0.0
    %3163 = vmatpush2.msra.mxu0 0.0
    %3164 = vmatprep.subr.mxu0 0.0
    %3165 = vmatpush2.msra.mxu0 0.0
    %3166 = vmatprep.subr.mxu0 0.0
    %3167 = vmatpush2.msra.mxu0 0.0
    %3168 = vmatprep.subr.mxu0 0.0
    %3169 = vmatpush2.msra.mxu0 0.0
    %3170 = vmatprep.subr.mxu0 0.0
    %3171 = vmatpush2.msra.mxu0 0.0
    %3172 = vmatprep.subr.mxu0 0.0
    %3173 = vmatpush2.msra.mxu0 0.0
    %3174 = vmatprep.subr.mxu0 0.0
    %3175 = vmatpush2.msra.mxu0 0.0
    %3176 = vmatprep.subr.mxu0 0.0
    %3177 = vmatpush2.msra.mxu0 0.0
    %3178 = vmatprep.subr.mxu0 0.0
    %3179 = vmatpush2.msra.mxu0 0.0
    %3180 = vmatprep.mubr.f32.mxu0 0.0
    %3181 = vmatmul.mubr.f32.gmra.mxu0 %v2882
    %v3182 = vpop.f32.mrf.mxu0
    %v3183 = vadd.f32 %v3112, %v3182
    %v3184 = vpop.f32.mrf.mxu0
    %v3185 = vadd.f32 %v3114, %v3184
    %3186 = vdwg.mxu0
    %3187 = vmatprep.subr.mxu0 0.0
    %3188 = vmatpush1.msra.mxu0 %v2930
    %3189 = vmatprep.subr.mxu0 0.0
    %3190 = vmatpush1.msra.mxu0 %v2927
    %3191 = vmatprep.subr.mxu0 0.0
    %3192 = vmatpush1.msra.mxu0 %v2924
    %3193 = vmatprep.subr.mxu0 0.0
    %3194 = vmatpush1.msra.mxu0 %v2921
    %3195 = vmatprep.subr.mxu0 0.0
    %3196 = vmatpush1.msra.mxu0 %v2918
    %3197 = vmatprep.subr.mxu0 0.0
    %3198 = vmatpush1.msra.mxu0 %v2915
    %3199 = vmatprep.subr.mxu0 0.0
    %3200 = vmatpush1.msra.mxu0 %v2912
    %3201 = vmatprep.subr.mxu0 0.0
    %3202 = vmatpush1.msra.mxu0 %v2909
    %3203 = vmatprep.subr.mxu0 0.0
    %3204 = vmatpush1.msra.mxu0 %v2906
    %3205 = vmatprep.subr.mxu0 0.0
    %3206 = vmatpush1.msra.mxu0 %v2903
    %3207 = vmatprep.subr.mxu0 0.0
    %3208 = vmatpush1.msra.mxu0 %v2900
    %3209 = vmatprep.subr.mxu0 0.0
    %3210 = vmatpush1.msra.mxu0 %v2897
    %3211 = vmatprep.subr.mxu0 0.0
    %3212 = vmatpush1.msra.mxu0 %v2894
    %3213 = vmatprep.subr.mxu0 0.0
    %3214 = vmatpush1.msra.mxu0 %v2891
    %3215 = vmatprep.subr.mxu0 0.0
    %3216 = vmatpush1.msra.mxu0 %v2888
    %3217 = vmatprep.subr.mxu0 0.0
    %3218 = vmatpush1.msra.mxu0 %v2885
    %3219 = vmatprep.subr.mxu0 0.0
    %3220 = vmatpush2.msra.mxu0 %v2978
    %3221 = vmatprep.subr.mxu0 0.0
    %3222 = vmatpush2.msra.mxu0 %v2975
    %3223 = vmatprep.subr.mxu0 0.0
    %3224 = vmatpush2.msra.mxu0 %v2972
    %3225 = vmatprep.subr.mxu0 0.0
    %3226 = vmatpush2.msra.mxu0 %v2969
    %3227 = vmatprep.subr.mxu0 0.0
    %3228 = vmatpush2.msra.mxu0 %v2966
    %3229 = vmatprep.subr.mxu0 0.0
    %3230 = vmatpush2.msra.mxu0 %v2963
    %3231 = vmatprep.subr.mxu0 0.0
    %3232 = vmatpush2.msra.mxu0 %v2960
    %3233 = vmatprep.subr.mxu0 0.0
    %3234 = vmatpush2.msra.mxu0 %v2957
    %3235 = vmatprep.subr.mxu0 0.0
    %3236 = vmatpush2.msra.mxu0 %v2954
    %3237 = vmatprep.subr.mxu0 0.0
    %3238 = vmatpush2.msra.mxu0 %v2951
    %3239 = vmatprep.subr.mxu0 0.0
    %3240 = vmatpush2.msra.mxu0 %v2948
    %3241 = vmatprep.subr.mxu0 0.0
    %3242 = vmatpush2.msra.mxu0 %v2945
    %3243 = vmatprep.subr.mxu0 0.0
    %3244 = vmatpush2.msra.mxu0 %v2942
    %3245 = vmatprep.subr.mxu0 0.0
    %3246 = vmatpush2.msra.mxu0 %v2939
    %3247 = vmatprep.subr.mxu0 0.0
    %3248 = vmatpush2.msra.mxu0 %v2936
    %3249 = vmatprep.subr.mxu0 0.0
    %3250 = vmatpush2.msra.mxu0 %v2933
    %3251 = vmatprep.mubr.f32.mxu0 %v2881
    %3252 = vmatmul.mubr.f32.gmra.mxu0 %v2880
    %v3253 = vpop.f32.mrf.mxu0
    %v3254 = vadd.f32 %v3041, %v3253
    %v3255 = vpop.f32.mrf.mxu0
    %3256 = vdwg.mxu0
    %3257 = vmatprep.subr.mxu0 0.0
    %3258 = vmatpush1.msra.mxu0 %v3026
    %3259 = vmatprep.subr.mxu0 0.0
    %3260 = vmatpush1.msra.mxu0 %v3023
    %3261 = vmatprep.subr.mxu0 0.0
    %3262 = vmatpush1.msra.mxu0 %v3020
    %3263 = vmatprep.subr.mxu0 0.0
    %3264 = vmatpush1.msra.mxu0 %v3017
    %3265 = vmatprep.subr.mxu0 0.0
    %3266 = vmatpush1.msra.mxu0 %v3014
    %3267 = vmatprep.subr.mxu0 0.0
    %3268 = vmatpush1.msra.mxu0 %v3011
    %3269 = vmatprep.subr.mxu0 0.0
    %3270 = vmatpush1.msra.mxu0 %v3008
    %3271 = vmatprep.subr.mxu0 0.0
    %3272 = vmatpush1.msra.mxu0 %v3005
    %3273 = vmatprep.subr.mxu0 0.0
    %3274 = vmatpush1.msra.mxu0 %v3002
    %3275 = vmatprep.subr.mxu0 0.0
    %3276 = vmatpush1.msra.mxu0 %v2999
    %3277 = vmatprep.subr.mxu0 0.0
    %3278 = vmatpush1.msra.mxu0 %v2996
    %3279 = vmatprep.subr.mxu0 0.0
    %3280 = vmatpush1.msra.mxu0 %v2993
    %3281 = vmatprep.subr.mxu0 0.0
    %3282 = vmatpush1.msra.mxu0 %v2990
    %3283 = vmatprep.subr.mxu0 0.0
    %3284 = vmatpush1.msra.mxu0 %v2987
    %3285 = vmatprep.subr.mxu0 0.0
    %3286 = vmatpush1.msra.mxu0 %v2984
    %3287 = vmatprep.subr.mxu0 0.0
    %3288 = vmatpush1.msra.mxu0 %v2981
    %3289 = vmatprep.subr.mxu0 0.0
    %3290 = vmatpush2.msra.mxu0 0.0
    %3291 = vmatprep.subr.mxu0 0.0
    %3292 = vmatpush2.msra.mxu0 0.0
    %3293 = vmatprep.subr.mxu0 0.0
    %3294 = vmatpush2.msra.mxu0 0.0
    %3295 = vmatprep.subr.mxu0 0.0
    %3296 = vmatpush2.msra.mxu0 0.0
    %3297 = vmatprep.subr.mxu0 0.0
    %3298 = vmatpush2.msra.mxu0 0.0
    %3299 = vmatprep.subr.mxu0 0.0
    %3300 = vmatpush2.msra.mxu0 0.0
    %3301 = vmatprep.subr.mxu0 0.0
    %3302 = vmatpush2.msra.mxu0 0.0
    %3303 = vmatprep.subr.mxu0 0.0
    %3304 = vmatpush2.msra.mxu0 0.0
    %3305 = vmatprep.subr.mxu0 0.0
    %3306 = vmatpush2.msra.mxu0 0.0
    %3307 = vmatprep.subr.mxu0 0.0
    %3308 = vmatpush2.msra.mxu0 0.0
    %3309 = vmatprep.subr.mxu0 0.0
    %3310 = vmatpush2.msra.mxu0 0.0
    %3311 = vmatprep.subr.mxu0 0.0
    %3312 = vmatpush2.msra.mxu0 0.0
    %3313 = vmatprep.subr.mxu0 0.0
    %3314 = vmatpush2.msra.mxu0 0.0
    %3315 = vmatprep.subr.mxu0 0.0
    %3316 = vmatpush2.msra.mxu0 0.0
    %3317 = vmatprep.subr.mxu0 0.0
    %3318 = vmatpush2.msra.mxu0 0.0
    %3319 = vmatprep.subr.mxu0 0.0
    %3320 = vmatpush2.msra.mxu0 0.0
    %3321 = vmatprep.mubr.f32.mxu0 0.0
    %3322 = vmatmul.mubr.f32.gmra.mxu0 %v2882
    %v3323 = vpop.f32.mrf.mxu0
    %v3324 = vadd.f32 %v3254, %v3323
    %v3325 = vpop.f32.mrf.mxu0
    %3326 = vdwg.mxu0
    %3329 = vrot.lane.b32.xlu0 %v3185, 64
    %v3330 = vpop.permute.xlu0 %3329
    %3331 = vrot.lane.b32.xlu0 %v3324, 64
    %v3332 = vpop.permute.xlu0 %3331
    %v3333 = vsel %vm1741, %v3330, %v3332
    %v3336 = vmul.f32 %v2223, %v3333
    %v3337 = vmul.f32 %v2225, %v3332
    %v3338 = vadd.f32 %v3183, %v3336
    %v3339 = vadd.f32 %v3185, %v3337
    %v3340 = vld [vmem:[%s4 + $0x2a0] sm:$0xff]
    %v3341 = vld [vmem:[%s4 + $0x2a8] sm:$0xff]
    %v3342 = vld [vmem:[%s4 + $0x2b0] sm:$0xff]
    %v3343 = vld [vmem:[%s4 + $0x2b8] sm:$0xff]
    %v3344 = vld [vmem:[%s4 + $0x2c0] sm:$0xff]
    %v3345 = vld [vmem:[%s4 + $0x2c8] sm:$0xff]
    %v3346 = vld [vmem:[%s4 + $0x2d0] sm:$0xff]
    %v3347 = vld [vmem:[%s4 + $0x2d8] sm:$0xff]
    %v3348 = vld [vmem:[%s4 + $0x2e0] sm:$0xff]
    %v3349 = vld [vmem:[%s4 + $0x2e8] sm:$0xff]
    %v3350 = vld [vmem:[%s4 + $0x2f0] sm:$0xff]
    %v3351 = vld [vmem:[%s4 + $0x2f8] sm:$0xff]
    %v3352 = vld [vmem:[%s4 + $0x300] sm:$0xff]
    %v3353 = vld [vmem:[%s4 + $0x308] sm:$0xff]
    %v3354 = vld [vmem:[%s4 + $0x310] sm:$0xff]
    %v3355 = vld [vmem:[%s4 + $0x318] sm:$0xff]
    %v3356 = vld [vmem:[%s4 + $0x320] sm:$0xff]
    %v3357 = vld [vmem:[%s4 + $0x328] sm:$0xff]
    %v3358 = vld [vmem:[%s4 + $0x330] sm:$0xff]
    %v3359 = vld [vmem:[%s4 + $0x338] sm:$0xff]
    %v3360 = vld [vmem:[%s4 + $0x340] sm:$0xff]
    %v3361 = vld [vmem:[%s4 + $0x348] sm:$0xff]
    %v3362 = vld [vmem:[%s4 + $0x350] sm:$0xff]
    %v3363 = vld [vmem:[%s4 + $0x358] sm:$0xff]
    %v3364 = vld [vmem:[%s4 + $0x360] sm:$0xff]
    %v3365 = vld [vmem:[%s4 + $0x368] sm:$0xff]
    %v3366 = vld [vmem:[%s4 + $0x370] sm:$0xff]
    %v3367 = vld [vmem:[%s4 + $0x378] sm:$0xff]
    %v3368 = vld [vmem:[%s4 + $0x380] sm:$0xff]
    %v3369 = vld [vmem:[%s4 + $0x388] sm:$0xff]
    %v3370 = vld [vmem:[%s4 + $0x390] sm:$0xff]
    %v3371 = vld [vmem:[%s4 + $0x398] sm:$0xff]
    %v3372 = vld [vmem:[%s4 + $0x3a0] sm:$0xff]
    %v3373 = vld [vmem:[%s4 + $0x3a8] sm:$0xff]
    %v3374 = vld [vmem:[%s4 + $0x3b0] sm:$0xff]
    %v3375 = vld [vmem:[%s4 + $0x3b8] sm:$0xff]
    %v3376 = vld [vmem:[%s4 + $0x3c0] sm:$0xff]
    %v3377 = vld [vmem:[%s4 + $0x3c8] sm:$0xff]
    %v3378 = vld [vmem:[%s4 + $0x3d0] sm:$0xff]
    %v3379 = vld [vmem:[%s4 + $0x3d8] sm:$0xff]
    %v3380 = vld [vmem:[%s4 + $0x3e0] sm:$0xff]
    %v3381 = vld [vmem:[%s4 + $0x3e8] sm:$0xff]
    %v3382 = vld [vmem:[%s4 + $0x3f0] sm:$0xff]
    %v3383 = vld [vmem:[%s4 + $0x3f8] sm:$0xff]
    %v3384 = vld [vmem:[%s4 + $0x400] sm:$0xff]
    %v3385 = vld [vmem:[%s4 + $0x408] sm:$0xff]
    %v3386 = vld [vmem:[%s4 + $0x410] sm:$0xff]
    %v3387 = vld [vmem:[%s4 + $0x418] sm:$0xff]
    %v3389 = vsel %vm1741, %v3339, 0
    %3391 = vmatprep.subr.mxu0 %v3371
    %3392 = vmatpush1.msra.mxu0 %v3370
    %3393 = vmatprep.subr.mxu0 %v3369
    %3394 = vmatpush1.msra.mxu0 %v3368
    %3395 = vmatprep.subr.mxu0 %v3367
    %3396 = vmatpush1.msra.mxu0 %v3366
    %3397 = vmatprep.subr.mxu0 %v3365
    %3398 = vmatpush1.msra.mxu0 %v3364
    %3399 = vmatprep.subr.mxu0 %v3363
    %3400 = vmatpush1.msra.mxu0 %v3362
    %3401 = vmatprep.subr.mxu0 %v3361
    %3402 = vmatpush1.msra.mxu0 %v3360
    %3403 = vmatprep.subr.mxu0 %v3359
    %3404 = vmatpush1.msra.mxu0 %v3358
    %3405 = vmatprep.subr.mxu0 %v3357
    %3406 = vmatpush1.msra.mxu0 %v3356
    %3407 = vmatprep.subr.mxu0 %v3355
    %3408 = vmatpush1.msra.mxu0 %v3354
    %3409 = vmatprep.subr.mxu0 %v3353
    %3410 = vmatpush1.msra.mxu0 %v3352
    %3411 = vmatprep.subr.mxu0 %v3351
    %3412 = vmatpush1.msra.mxu0 %v3350
    %3413 = vmatprep.subr.mxu0 %v3349
    %3414 = vmatpush1.msra.mxu0 %v3348
    %3415 = vmatprep.subr.mxu0 %v3347
    %3416 = vmatpush1.msra.mxu0 %v3346
    %3417 = vmatprep.subr.mxu0 %v3345
    %3418 = vmatpush1.msra.mxu0 %v3344
    %3419 = vmatprep.subr.mxu0 %v3343
    %3420 = vmatpush1.msra.mxu0 %v3342
    %3421 = vmatprep.subr.mxu0 %v3341
    %3422 = vmatpush1.msra.mxu0 %v3340
    %3423 = vmatprep.subr.mxu0 0.0
    %3424 = vmatpush2.msra.mxu0 0.0
    %3425 = vmatprep.subr.mxu0 0.0
    %3426 = vmatpush2.msra.mxu0 0.0
    %3427 = vmatprep.subr.mxu0 0.0
    %3428 = vmatpush2.msra.mxu0 0.0
    %3429 = vmatprep.subr.mxu0 0.0
    %3430 = vmatpush2.msra.mxu0 0.0
    %3431 = vmatprep.subr.mxu0 0.0
    %3432 = vmatpush2.msra.mxu0 0.0
    %3433 = vmatprep.subr.mxu0 0.0
    %3434 = vmatpush2.msra.mxu0 0.0
    %3435 = vmatprep.subr.mxu0 0.0
    %3436 = vmatpush2.msra.mxu0 0.0
    %3437 = vmatprep.subr.mxu0 0.0
    %3438 = vmatpush2.msra.mxu0 0.0
    %3439 = vmatprep.subr.mxu0 %v3387
    %3440 = vmatpush2.msra.mxu0 %v3386
    %3441 = vmatprep.subr.mxu0 %v3385
    %3442 = vmatpush2.msra.mxu0 %v3384
    %3443 = vmatprep.subr.mxu0 %v3383
    %3444 = vmatpush2.msra.mxu0 %v3382
    %3445 = vmatprep.subr.mxu0 %v3381
    %3446 = vmatpush2.msra.mxu0 %v3380
    %3447 = vmatprep.subr.mxu0 %v3379
    %3448 = vmatpush2.msra.mxu0 %v3378
    %3449 = vmatprep.subr.mxu0 %v3377
    %3450 = vmatpush2.msra.mxu0 %v3376
    %3451 = vmatprep.subr.mxu0 %v3375
    %3452 = vmatpush2.msra.mxu0 %v3374
    %3453 = vmatprep.subr.mxu0 %v3373
    %3454 = vmatpush2.msra.mxu0 %v3372
    %3455 = vmatprep.mubr.f32.mxu0 %v3389
    %3456 = vmatmul.mubr.f32.gmra.mxu0 %v3338
    %v3457 = vpop.f32.mrf.mxu0
    %v3458 = vadd.f32 0.0, %v3457
    %v3459 = vpop.f32.mrf.mxu0
    %v3460 = vadd.f32 0.0, %v3459
    %3461 = vdwg.mxu0
    %v3462 = vsub.f32 %v3338, %v3458
    %v3463 = vsub.f32 %v3339, %v3460
    %v3464 = vmul.f32 %v3462, %v3462
    %v3465 = vmul.f32 %v3463, %v3463
    %v3467 = vsel %vm1741, %v3465, 0
    %3469 = vmatprep.subr.mxu0 %v3371
    %3470 = vmatpush1.msra.mxu0 %v3370
    %3471 = vmatprep.subr.mxu0 %v3369
    %3472 = vmatpush1.msra.mxu0 %v3368
    %3473 = vmatprep.subr.mxu0 %v3367
    %3474 = vmatpush1.msra.mxu0 %v3366
    %3475 = vmatprep.subr.mxu0 %v3365
    %3476 = vmatpush1.msra.mxu0 %v3364
    %3477 = vmatprep.subr.mxu0 %v3363
    %3478 = vmatpush1.msra.mxu0 %v3362
    %3479 = vmatprep.subr.mxu0 %v3361
    %3480 = vmatpush1.msra.mxu0 %v3360
    %3481 = vmatprep.subr.mxu0 %v3359
    %3482 = vmatpush1.msra.mxu0 %v3358
    %3483 = vmatprep.subr.mxu0 %v3357
    %3484 = vmatpush1.msra.mxu0 %v3356
    %3485 = vmatprep.subr.mxu0 %v3355
    %3486 = vmatpush1.msra.mxu0 %v3354
    %3487 = vmatprep.subr.mxu0 %v3353
    %3488 = vmatpush1.msra.mxu0 %v3352
    %3489 = vmatprep.subr.mxu0 %v3351
    %3490 = vmatpush1.msra.mxu0 %v3350
    %3491 = vmatprep.subr.mxu0 %v3349
    %3492 = vmatpush1.msra.mxu0 %v3348
    %3493 = vmatprep.subr.mxu0 %v3347
    %3494 = vmatpush1.msra.mxu0 %v3346
    %3495 = vmatprep.subr.mxu0 %v3345
    %3496 = vmatpush1.msra.mxu0 %v3344
    %3497 = vmatprep.subr.mxu0 %v3343
    %3498 = vmatpush1.msra.mxu0 %v3342
    %3499 = vmatprep.subr.mxu0 %v3341
    %3500 = vmatpush1.msra.mxu0 %v3340
    %3501 = vmatprep.subr.mxu0 0.0
    %3502 = vmatpush2.msra.mxu0 0.0
    %3503 = vmatprep.subr.mxu0 0.0
    %3504 = vmatpush2.msra.mxu0 0.0
    %3505 = vmatprep.subr.mxu0 0.0
    %3506 = vmatpush2.msra.mxu0 0.0
    %3507 = vmatprep.subr.mxu0 0.0
    %3508 = vmatpush2.msra.mxu0 0.0
    %3509 = vmatprep.subr.mxu0 0.0
    %3510 = vmatpush2.msra.mxu0 0.0
    %3511 = vmatprep.subr.mxu0 0.0
    %3512 = vmatpush2.msra.mxu0 0.0
    %3513 = vmatprep.subr.mxu0 0.0
    %3514 = vmatpush2.msra.mxu0 0.0
    %3515 = vmatprep.subr.mxu0 0.0
    %3516 = vmatpush2.msra.mxu0 0.0
    %3517 = vmatprep.subr.mxu0 %v3387
    %3518 = vmatpush2.msra.mxu0 %v3386
    %3519 = vmatprep.subr.mxu0 %v3385
    %3520 = vmatpush2.msra.mxu0 %v3384
    %3521 = vmatprep.subr.mxu0 %v3383
    %3522 = vmatpush2.msra.mxu0 %v3382
    %3523 = vmatprep.subr.mxu0 %v3381
    %3524 = vmatpush2.msra.mxu0 %v3380
    %3525 = vmatprep.subr.mxu0 %v3379
    %3526 = vmatpush2.msra.mxu0 %v3378
    %3527 = vmatprep.subr.mxu0 %v3377
    %3528 = vmatpush2.msra.mxu0 %v3376
    %3529 = vmatprep.subr.mxu0 %v3375
    %3530 = vmatpush2.msra.mxu0 %v3374
    %3531 = vmatprep.subr.mxu0 %v3373
    %3532 = vmatpush2.msra.mxu0 %v3372
    %3533 = vmatprep.mubr.f32.mxu0 %v3467
    %3534 = vmatmul.mubr.f32.gmra.mxu0 %v3464
    %v3535 = vpop.f32.mrf.mxu0
    %v3536 = vadd.f32 1e-05, %v3535
    %v3537 = vpop.f32.mrf.mxu0
    %v3538 = vadd.f32 1e-05, %v3537
    %3539 = vdwg.mxu0
    %v3540 = vrsqrt.pop %v3536
    %v3541 = vrsqrt.pop %v3538
    %v3542 = vmul.f32 %v3462, %v3540
    %v3543 = vmul.f32 %v3463, %v3541
    %v3544 = vld [vmem:[%s4 + $0x420] sm:$0xff]
    %v3545 = vld [vmem:[%s4 + $0x428] sm:$0xff]
    %v3546 = vld [vmem:[%s4 + $0x430] sm:$0xff]
    %v3547 = vld [vmem:[%s4 + $0x438] sm:$0xff]
    %v3548 = vld [vmem:[%s4 + $0x440] sm:$0xff]
    %v3549 = vld [vmem:[%s4 + $0x448] sm:$0xff]
    %v3550 = vld [vmem:[%s4 + $0x450] sm:$0xff]
    %v3551 = vld [vmem:[%s4 + $0x458] sm:$0xff]
    %v3552 = vld [vmem:[%s4 + $0x460] sm:$0xff]
    %v3553 = vld [vmem:[%s4 + $0x468] sm:$0xff]
    %v3554 = vld [vmem:[%s4 + $0x470] sm:$0xff]
    %v3555 = vld [vmem:[%s4 + $0x478] sm:$0xff]
    %v3556 = vld [vmem:[%s4 + $0x480] sm:$0xff]
    %v3557 = vld [vmem:[%s4 + $0x488] sm:$0xff]
    %v3558 = vld [vmem:[%s4 + $0x490] sm:$0xff]
    %v3559 = vld [vmem:[%s4 + $0x498] sm:$0xff]
    %v3560 = vld [vmem:[%s4 + $0x4a0] sm:$0xff]
    %v3561 = vld [vmem:[%s4 + $0x4a8] sm:$0xff]
    %v3562 = vld [vmem:[%s4 + $0x4b0] sm:$0xff]
    %v3563 = vld [vmem:[%s4 + $0x4b8] sm:$0xff]
    %v3564 = vld [vmem:[%s4 + $0x4c0] sm:$0xff]
    %v3565 = vld [vmem:[%s4 + $0x4c8] sm:$0xff]
    %v3566 = vld [vmem:[%s4 + $0x4d0] sm:$0xff]
    %v3567 = vld [vmem:[%s4 + $0x4d8] sm:$0xff]
    %v3568 = vld [vmem:[%s4 + $0x4e0] sm:$0xff]
    %v3569 = vld [vmem:[%s4 + $0x4e8] sm:$0xff]
    %v3570 = vld [vmem:[%s4 + $0x4f0] sm:$0xff]
    %v3571 = vld [vmem:[%s4 + $0x4f8] sm:$0xff]
    %v3572 = vld [vmem:[%s4 + $0x500] sm:$0xff]
    %v3573 = vld [vmem:[%s4 + $0x508] sm:$0xff]
    %v3574 = vld [vmem:[%s4 + $0x510] sm:$0xff]
    %v3575 = vld [vmem:[%s4 + $0x518] sm:$0xff]
    %v3576 = vld [vmem:[%s4 + $0x520] sm:$0xff]
    %v3577 = vld [vmem:[%s4 + $0x528] sm:$0xff]
    %v3578 = vld [vmem:[%s4 + $0x530] sm:$0xff]
    %v3579 = vld [vmem:[%s4 + $0x538] sm:$0xff]
    %v3580 = vld [vmem:[%s4 + $0x540] sm:$0xff]
    %v3581 = vld [vmem:[%s4 + $0x548] sm:$0xff]
    %v3582 = vld [vmem:[%s4 + $0x550] sm:$0xff]
    %v3583 = vld [vmem:[%s4 + $0x558] sm:$0xff]
    %v3584 = vld [vmem:[%s4 + $0x560] sm:$0xff]
    %v3585 = vld [vmem:[%s4 + $0x568] sm:$0xff]
    %v3586 = vld [vmem:[%s4 + $0x570] sm:$0xff]
    %v3587 = vld [vmem:[%s4 + $0x578] sm:$0xff]
    %v3588 = vld [vmem:[%s4 + $0x580] sm:$0xff]
    %v3589 = vld [vmem:[%s4 + $0x588] sm:$0xff]
    %v3590 = vld [vmem:[%s4 + $0x590] sm:$0xff]
    %v3591 = vld [vmem:[%s4 + $0x598] sm:$0xff]
    %s3592 = scalar_lea.vmem %s6, 7
    %v3593 = vld [vmem:[%s3592] ss:$8 sm:$0x3]
    %v3595 = vlaneseq
    %v3596 = vshrl.u32 %v3595, 7
    %v3597 = vsub.s32 0, %v3596
    %v3598 = vrot.slane %v3593, %v3597
    %v3599 = vlaneseq
    %v3600 = vshrl.u32 %v3599, 7
    %v3601 = vsub.s32 1, %v3600
    %v3602 = vrot.slane %v3593, %v3601
    %v3606 = vsel %vm1741, %v3543, 0
    %3608 = vmatprep.subr.mxu0 %v3575
    %3609 = vmatpush1.msra.mxu0 %v3574
    %3610 = vmatprep.subr.mxu0 %v3573
    %3611 = vmatpush1.msra.mxu0 %v3572
    %3612 = vmatprep.subr.mxu0 %v3571
    %3613 = vmatpush1.msra.mxu0 %v3570
    %3614 = vmatprep.subr.mxu0 %v3569
    %3615 = vmatpush1.msra.mxu0 %v3568
    %3616 = vmatprep.subr.mxu0 %v3567
    %3617 = vmatpush1.msra.mxu0 %v3566
    %3618 = vmatprep.subr.mxu0 %v3565
    %3619 = vmatpush1.msra.mxu0 %v3564
    %3620 = vmatprep.subr.mxu0 %v3563
    %3621 = vmatpush1.msra.mxu0 %v3562
    %3622 = vmatprep.subr.mxu0 %v3561
    %3623 = vmatpush1.msra.mxu0 %v3560
    %3624 = vmatprep.subr.mxu0 %v3559
    %3625 = vmatpush1.msra.mxu0 %v3558
    %3626 = vmatprep.subr.mxu0 %v3557
    %3627 = vmatpush1.msra.mxu0 %v3556
    %3628 = vmatprep.subr.mxu0 %v3555
    %3629 = vmatpush1.msra.mxu0 %v3554
    %3630 = vmatprep.subr.mxu0 %v3553
    %3631 = vmatpush1.msra.mxu0 %v3552
    %3632 = vmatprep.subr.mxu0 %v3551
    %3633 = vmatpush1.msra.mxu0 %v3550
    %3634 = vmatprep.subr.mxu0 %v3549
    %3635 = vmatpush1.msra.mxu0 %v3548
    %3636 = vmatprep.subr.mxu0 %v3547
    %3637 = vmatpush1.msra.mxu0 %v3546
    %3638 = vmatprep.subr.mxu0 %v3545
    %3639 = vmatpush1.msra.mxu0 %v3544
    %3640 = vmatprep.subr.mxu0 0.0
    %3641 = vmatpush2.msra.mxu0 0.0
    %3642 = vmatprep.subr.mxu0 0.0
    %3643 = vmatpush2.msra.mxu0 0.0
    %3644 = vmatprep.subr.mxu0 0.0
    %3645 = vmatpush2.msra.mxu0 0.0
    %3646 = vmatprep.subr.mxu0 0.0
    %3647 = vmatpush2.msra.mxu0 0.0
    %3648 = vmatprep.subr.mxu0 0.0
    %3649 = vmatpush2.msra.mxu0 0.0
    %3650 = vmatprep.subr.mxu0 0.0
    %3651 = vmatpush2.msra.mxu0 0.0
    %3652 = vmatprep.subr.mxu0 0.0
    %3653 = vmatpush2.msra.mxu0 0.0
    %3654 = vmatprep.subr.mxu0 0.0
    %3655 = vmatpush2.msra.mxu0 0.0
    %3656 = vmatprep.subr.mxu0 %v3591
    %3657 = vmatpush2.msra.mxu0 %v3590
    %3658 = vmatprep.subr.mxu0 %v3589
    %3659 = vmatpush2.msra.mxu0 %v3588
    %3660 = vmatprep.subr.mxu0 %v3587
    %3661 = vmatpush2.msra.mxu0 %v3586
    %3662 = vmatprep.subr.mxu0 %v3585
    %3663 = vmatpush2.msra.mxu0 %v3584
    %3664 = vmatprep.subr.mxu0 %v3583
    %3665 = vmatpush2.msra.mxu0 %v3582
    %3666 = vmatprep.subr.mxu0 %v3581
    %3667 = vmatpush2.msra.mxu0 %v3580
    %3668 = vmatprep.subr.mxu0 %v3579
    %3669 = vmatpush2.msra.mxu0 %v3578
    %3670 = vmatprep.subr.mxu0 %v3577
    %3671 = vmatpush2.msra.mxu0 %v3576
    %3672 = vmatprep.mubr.f32.mxu0 %v3606
    %3673 = vmatmul.mubr.f32.gmra.mxu0 %v3542
    %v3674 = vpop.f32.mrf.mxu0
    %v3675 = vadd.f32 %v3598, %v3674
    %v3676 = vpop.f32.mrf.mxu0
    %v3677 = vadd.f32 %v3602, %v3676
    %3678 = vdwg.mxu0
    %v3679 = vsub.f32 0.0, %v3675
    %v3680 = vsub.f32 0.0, %v3677
    %v3681 = vmul.f32 %v3679, 1.442695
    %v3682 = vpow.pop %v3681
    %v3683 = vmul.f32 %v3680, 1.442695
    %v3684 = vpow.pop %v3683
    %v3685 = vadd.f32 %v3682, 1.0
    %v3686 = vadd.f32 %v3684, 1.0
    %v3687 = vrcp.pop %v3685
    %v3688 = vrcp.pop %v3686
    %v3689 = vmul.f32 %v3675, %v3687
    %v3690 = vmul.f32 %v3677, %v3688
    %v3691 = vld [vmem:[%s4 + $0x5a0] sm:$0xff]
    %v3692 = vld [vmem:[%s4 + $0x5a8] sm:$0xff]
    %v3693 = vld [vmem:[%s4 + $0x5b0] sm:$0xff]
    %v3694 = vld [vmem:[%s4 + $0x5b8] sm:$0xff]
    %v3695 = vld [vmem:[%s4 + $0x5c0] sm:$0xff]
    %v3696 = vld [vmem:[%s4 + $0x5c8] sm:$0xff]
    %v3697 = vld [vmem:[%s4 + $0x5d0] sm:$0xff]
    %v3698 = vld [vmem:[%s4 + $0x5d8] sm:$0xff]
    %v3699 = vld [vmem:[%s4 + $0x5e0] sm:$0xff]
    %v3700 = vld [vmem:[%s4 + $0x5e8] sm:$0xff]
    %v3701 = vld [vmem:[%s4 + $0x5f0] sm:$0xff]
    %v3702 = vld [vmem:[%s4 + $0x5f8] sm:$0xff]
    %v3703 = vld [vmem:[%s4 + $0x600] sm:$0xff]
    %v3704 = vld [vmem:[%s4 + $0x608] sm:$0xff]
    %v3705 = vld [vmem:[%s4 + $0x610] sm:$0xff]
    %v3706 = vld [vmem:[%s4 + $0x618] sm:$0xff]
    %v3707 = vld [vmem:[%s4 + $0x620] sm:$0xff]
    %v3708 = vld [vmem:[%s4 + $0x628] sm:$0xff]
    %v3709 = vld [vmem:[%s4 + $0x630] sm:$0xff]
    %v3710 = vld [vmem:[%s4 + $0x638] sm:$0xff]
    %v3711 = vld [vmem:[%s4 + $0x640] sm:$0xff]
    %v3712 = vld [vmem:[%s4 + $0x648] sm:$0xff]
    %v3713 = vld [vmem:[%s4 + $0x650] sm:$0xff]
    %v3714 = vld [vmem:[%s4 + $0x658] sm:$0xff]
    %v3715 = vld [vmem:[%s4 + $0x660] sm:$0xff]
    %v3716 = vld [vmem:[%s4 + $0x668] sm:$0xff]
    %v3717 = vld [vmem:[%s4 + $0x670] sm:$0xff]
    %v3718 = vld [vmem:[%s4 + $0x678] sm:$0xff]
    %v3719 = vld [vmem:[%s4 + $0x680] sm:$0xff]
    %v3720 = vld [vmem:[%s4 + $0x688] sm:$0xff]
    %v3721 = vld [vmem:[%s4 + $0x690] sm:$0xff]
    %v3722 = vld [vmem:[%s4 + $0x698] sm:$0xff]
    %v3723 = vld [vmem:[%s4 + $0x6a0] sm:$0xff]
    %v3724 = vld [vmem:[%s4 + $0x6a8] sm:$0xff]
    %v3725 = vld [vmem:[%s4 + $0x6b0] sm:$0xff]
    %v3726 = vld [vmem:[%s4 + $0x6b8] sm:$0xff]
    %v3727 = vld [vmem:[%s4 + $0x6c0] sm:$0xff]
    %v3728 = vld [vmem:[%s4 + $0x6c8] sm:$0xff]
    %v3729 = vld [vmem:[%s4 + $0x6d0] sm:$0xff]
    %v3730 = vld [vmem:[%s4 + $0x6d8] sm:$0xff]
    %v3731 = vld [vmem:[%s4 + $0x6e0] sm:$0xff]
    %v3732 = vld [vmem:[%s4 + $0x6e8] sm:$0xff]
    %v3733 = vld [vmem:[%s4 + $0x6f0] sm:$0xff]
    %v3734 = vld [vmem:[%s4 + $0x6f8] sm:$0xff]
    %v3735 = vld [vmem:[%s4 + $0x700] sm:$0xff]
    %v3736 = vld [vmem:[%s4 + $0x708] sm:$0xff]
    %v3737 = vld [vmem:[%s4 + $0x710] sm:$0xff]
    %v3738 = vld [vmem:[%s4 + $0x718] sm:$0xff]
    %s3739 = scalar_lea.vmem %s6, 24
    %v3740 = vld [vmem:[%s3739] ss:$8 sm:$0x3]
    %v3742 = vlaneseq
    %v3743 = vshrl.u32 %v3742, 7
    %v3744 = vsub.s32 0, %v3743
    %v3745 = vrot.slane %v3740, %v3744
    %v3746 = vlaneseq
    %v3747 = vshrl.u32 %v3746, 7
    %v3748 = vsub.s32 1, %v3747
    %v3749 = vrot.slane %v3740, %v3748
    %v3753 = vsel %vm1741, %v3690, 0
    %3755 = vmatprep.subr.mxu0 %v3722
    %3756 = vmatpush1.msra.mxu0 %v3721
    %3757 = vmatprep.subr.mxu0 %v3720
    %3758 = vmatpush1.msra.mxu0 %v3719
    %3759 = vmatprep.subr.mxu0 %v3718
    %3760 = vmatpush1.msra.mxu0 %v3717
    %3761 = vmatprep.subr.mxu0 %v3716
    %3762 = vmatpush1.msra.mxu0 %v3715
    %3763 = vmatprep.subr.mxu0 %v3714
    %3764 = vmatpush1.msra.mxu0 %v3713
    %3765 = vmatprep.subr.mxu0 %v3712
    %3766 = vmatpush1.msra.mxu0 %v3711
    %3767 = vmatprep.subr.mxu0 %v3710
    %3768 = vmatpush1.msra.mxu0 %v3709
    %3769 = vmatprep.subr.mxu0 %v3708
    %3770 = vmatpush1.msra.mxu0 %v3707
    %3771 = vmatprep.subr.mxu0 %v3706
    %3772 = vmatpush1.msra.mxu0 %v3705
    %3773 = vmatprep.subr.mxu0 %v3704
    %3774 = vmatpush1.msra.mxu0 %v3703
    %3775 = vmatprep.subr.mxu0 %v3702
    %3776 = vmatpush1.msra.mxu0 %v3701
    %3777 = vmatprep.subr.mxu0 %v3700
    %3778 = vmatpush1.msra.mxu0 %v3699
    %3779 = vmatprep.subr.mxu0 %v3698
    %3780 = vmatpush1.msra.mxu0 %v3697
    %3781 = vmatprep.subr.mxu0 %v3696
    %3782 = vmatpush1.msra.mxu0 %v3695
    %3783 = vmatprep.subr.mxu0 %v3694
    %3784 = vmatpush1.msra.mxu0 %v3693
    %3785 = vmatprep.subr.mxu0 %v3692
    %3786 = vmatpush1.msra.mxu0 %v3691
    %3787 = vmatprep.subr.mxu0 0.0
    %3788 = vmatpush2.msra.mxu0 0.0
    %3789 = vmatprep.subr.mxu0 0.0
    %3790 = vmatpush2.msra.mxu0 0.0
    %3791 = vmatprep.subr.mxu0 0.0
    %3792 = vmatpush2.msra.mxu0 0.0
    %3793 = vmatprep.subr.mxu0 0.0
    %3794 = vmatpush2.msra.mxu0 0.0
    %3795 = vmatprep.subr.mxu0 0.0
    %3796 = vmatpush2.msra.mxu0 0.0
    %3797 = vmatprep.subr.mxu0 0.0
    %3798 = vmatpush2.msra.mxu0 0.0
    %3799 = vmatprep.subr.mxu0 0.0
    %3800 = vmatpush2.msra.mxu0 0.0
    %3801 = vmatprep.subr.mxu0 0.0
    %3802 = vmatpush2.msra.mxu0 0.0
    %3803 = vmatprep.subr.mxu0 %v3738
    %3804 = vmatpush2.msra.mxu0 %v3737
    %3805 = vmatprep.subr.mxu0 %v3736
    %3806 = vmatpush2.msra.mxu0 %v3735
    %3807 = vmatprep.subr.mxu0 %v3734
    %3808 = vmatpush2.msra.mxu0 %v3733
    %3809 = vmatprep.subr.mxu0 %v3732
    %3810 = vmatpush2.msra.mxu0 %v3731
    %3811 = vmatprep.subr.mxu0 %v3730
    %3812 = vmatpush2.msra.mxu0 %v3729
    %3813 = vmatprep.subr.mxu0 %v3728
    %3814 = vmatpush2.msra.mxu0 %v3727
    %3815 = vmatprep.subr.mxu0 %v3726
    %3816 = vmatpush2.msra.mxu0 %v3725
    %3817 = vmatprep.subr.mxu0 %v3724
    %3818 = vmatpush2.msra.mxu0 %v3723
    %3819 = vmatprep.mubr.f32.mxu0 %v3753
    %3820 = vmatmul.mubr.f32.gmra.mxu0 %v3689
    %v3821 = vpop.f32.mrf.mxu0
    %v3822 = vadd.f32 %v3745, %v3821
    %v3823 = vpop.f32.mrf.mxu0
    %v3824 = vadd.f32 %v3749, %v3823
    %3825 = vdwg.mxu0
    %v3826 = vsub.f32 0.0, %v3822
    %v3827 = vsub.f32 0.0, %v3824
    %v3828 = vmul.f32 %v3826, 1.442695
    %v3829 = vpow.pop %v3828
    %v3830 = vmul.f32 %v3827, 1.442695
    %v3831 = vpow.pop %v3830
    %v3832 = vadd.f32 %v3829, 1.0
    %v3833 = vadd.f32 %v3831, 1.0
    %v3834 = vrcp.pop %v3832
    %v3835 = vrcp.pop %v3833
    %v3836 = vmul.f32 %v3822, %v3834
    %v3837 = vmul.f32 %v3824, %v3835
    %s3838 = scalar_lea.vmem %s6, 25
    %v3839 = vld [vmem:[%s3838] ss:$8 sm:$0x3]
    %v3841 = vlaneseq
    %v3842 = vshrl.u32 %v3841, 7
    %v3843 = vsub.s32 0, %v3842
    %v3844 = vrot.slane %v3839, %v3843
    %v3845 = vlaneseq
    %v3846 = vshrl.u32 %v3845, 7
    %v3847 = vsub.s32 1, %v3846
    %v3848 = vrot.slane %v3839, %v3847
    %v3851 = vmul.f32 %v3836, %v3844
    %v3852 = vmul.f32 %v3837, %v3848
    %v3853 = vsel %vm2252, %v3851, 0.0
    %vm3854 = vcmask 519168
    %v3855 = vsel %vm3854, %v3852, 0.0
    %v3856 = vadd.f32 %v3853, %v3855
    %3857 = vadd.xlane.f32.xlu0 %v3856
    %v3858 = vpop.xlane.xlu0 %3857
    %v3859 = vld [vmem:[%s6 + $0x1a] ss:$0 sm:$0xff]
    %3860 = vset.pattern.permute.xlu0 48
    %3861 = vperm.xlu0 %3860, %v1824
    %v3862 = vpop.permute.xlu0 %3861
    %v3864 = vmul.f32 %v3862, %v3859
    %v3865 = vld [vmem:[%s4 + $0x720] sm:$0xf]
    %v3867 = vsel %vm2252, %v3865, 0
    %3869 = vmatprep.subr.mxu0 0.0
    %3870 = vmatpush1.msra.mxu0 0.0
    %3871 = vmatprep.subr.mxu0 0.0
    %3872 = vmatpush1.msra.mxu0 0.0
    %3873 = vmatprep.subr.mxu0 0.0
    %3874 = vmatpush1.msra.mxu0 0.0
    %3875 = vmatprep.subr.mxu0 0.0
    %3876 = vmatpush1.msra.mxu0 0.0
    %3877 = vmatprep.subr.mxu0 0.0
    %3878 = vmatpush1.msra.mxu0 0.0
    %3879 = vmatprep.subr.mxu0 0.0
    %3880 = vmatpush1.msra.mxu0 0.0
    %3881 = vmatprep.subr.mxu0 0.0
    %3882 = vmatpush1.msra.mxu0 0.0
    %3883 = vmatprep.subr.mxu0 0.0
    %3884 = vmatpush1.msra.mxu0 0.0
    %3885 = vmatprep.subr.mxu0 0.0
    %3886 = vmatpush1.msra.mxu0 0.0
    %3887 = vmatprep.subr.mxu0 0.0
    %3888 = vmatpush1.msra.mxu0 0.0
    %3889 = vmatprep.subr.mxu0 0.0
    %3890 = vmatpush1.msra.mxu0 0.0
    %3891 = vmatprep.subr.mxu0 0.0
    %3892 = vmatpush1.msra.mxu0 0.0
    %3893 = vmatprep.subr.mxu0 0.0
    %3894 = vmatpush1.msra.mxu0 0.0
    %3895 = vmatprep.subr.mxu0 0.0
    %3896 = vmatpush1.msra.mxu0 0.0
    %3897 = vmatprep.subr.mxu0 0.0
    %3898 = vmatpush1.msra.mxu0 0.0
    %3899 = vmatprep.subr.mxu0 0.0
    %3900 = vmatpush1.msra.mxu0 %v3867
    %3901 = vmatprep.subr.mxu0 0.0
    %3902 = vmatpush2.msra.mxu0 0.0
    %3903 = vmatprep.subr.mxu0 0.0
    %3904 = vmatpush2.msra.mxu0 0.0
    %3905 = vmatprep.subr.mxu0 0.0
    %3906 = vmatpush2.msra.mxu0 0.0
    %3907 = vmatprep.subr.mxu0 0.0
    %3908 = vmatpush2.msra.mxu0 0.0
    %3909 = vmatprep.subr.mxu0 0.0
    %3910 = vmatpush2.msra.mxu0 0.0
    %3911 = vmatprep.subr.mxu0 0.0
    %3912 = vmatpush2.msra.mxu0 0.0
    %3913 = vmatprep.subr.mxu0 0.0
    %3914 = vmatpush2.msra.mxu0 0.0
    %3915 = vmatprep.subr.mxu0 0.0
    %3916 = vmatpush2.msra.mxu0 0.0
    %3917 = vmatprep.subr.mxu0 0.0
    %3918 = vmatpush2.msra.mxu0 0.0
    %3919 = vmatprep.subr.mxu0 0.0
    %3920 = vmatpush2.msra.mxu0 0.0
    %3921 = vmatprep.subr.mxu0 0.0
    %3922 = vmatpush2.msra.mxu0 0.0
    %3923 = vmatprep.subr.mxu0 0.0
    %3924 = vmatpush2.msra.mxu0 0.0
    %3925 = vmatprep.subr.mxu0 0.0
    %3926 = vmatpush2.msra.mxu0 0.0
    %3927 = vmatprep.subr.mxu0 0.0
    %3928 = vmatpush2.msra.mxu0 0.0
    %3929 = vmatprep.subr.mxu0 0.0
    %3930 = vmatpush2.msra.mxu0 0.0
    %3931 = vmatprep.subr.mxu0 0.0
    %3932 = vmatpush2.msra.mxu0 0.0
    %3933 = vmatprep.mubr.f32.mxu0 0.0
    %3934 = vmatmul.mubr.f32.gmra.mxu0 %v2250
    %v3935 = vpop.f32.mrf.mxu0
    %v3936 = vadd.f32 0.0, %v3935
    %v3937 = vpop.f32.mrf.mxu0
    %3938 = vdwg.mxu0
    %v3939 = vadd.f32 %v3864, %v3936
    %v3940 = vld [vmem:[%s6 + $0x1b] ss:$0 sm:$0xff]
    %v3941 = vadd.f32 %v3939, %v3940
    %v3942 = vsub.f32 0.0, %v3941
    %v3943 = vmul.f32 %v3942, 1.442695
    %v3944 = vpow.pop %v3943
    %v3945 = vadd.f32 %v3944, 1.0
    %v3946 = vrcp.pop %v3945
    %v3947 = vmul.f32 %v3941, %v3946
    %v3948 = vld [vmem:[%s4 + $0x730] sm:$0xff]
    %v3949 = vld [vmem:[%s4 + $0x740] sm:$0xff]
    %v3950 = vld [vmem:[%s4 + $0x750] sm:$0xff]
    %v3951 = vld [vmem:[%s4 + $0x760] sm:$0xff]
    %v3952 = vld [vmem:[%s4 + $0x770] sm:$0xff]
    %v3953 = vld [vmem:[%s4 + $0x780] sm:$0xff]
    %v3954 = vld [vmem:[%s4 + $0x790] sm:$0xff]
    %v3955 = vld [vmem:[%s4 + $0x7a0] sm:$0xff]
    %v3956 = vld [vmem:[%s4 + $0x7b0] sm:$0xff]
    %v3957 = vld [vmem:[%s4 + $0x7c0] sm:$0xff]
    %v3958 = vld [vmem:[%s4 + $0x7d0] sm:$0xff]
    %v3959 = vld [vmem:[%s4 + $0x7e0] sm:$0xff]
    %v3960 = vld [vmem:[%s4 + $0x7f0] sm:$0xff]
    %v3961 = vld [vmem:[%s4 + $0x800] sm:$0xff]
    %v3962 = vld [vmem:[%s4 + $0x810] sm:$0xff]
    %v3963 = vld [vmem:[%s4 + $0x820] sm:$0xff]
    %v3964 = vld [vmem:[%s6 + $0x1c] ss:$0 sm:$0xff]
    %3965 = vmatprep.subr.mxu0 0.0
    %3966 = vmatpush1.msra.mxu0 %v3963
    %3967 = vmatprep.subr.mxu0 0.0
    %3968 = vmatpush1.msra.mxu0 %v3962
    %3969 = vmatprep.subr.mxu0 0.0
    %3970 = vmatpush1.msra.mxu0 %v3961
    %3971 = vmatprep.subr.mxu0 0.0
    %3972 = vmatpush1.msra.mxu0 %v3960
    %3973 = vmatprep.subr.mxu0 0.0
    %3974 = vmatpush1.msra.mxu0 %v3959
    %3975 = vmatprep.subr.mxu0 0.0
    %3976 = vmatpush1.msra.mxu0 %v3958
    %3977 = vmatprep.subr.mxu0 0.0
    %3978 = vmatpush1.msra.mxu0 %v3957
    %3979 = vmatprep.subr.mxu0 0.0
    %3980 = vmatpush1.msra.mxu0 %v3956
    %3981 = vmatprep.subr.mxu0 0.0
    %3982 = vmatpush1.msra.mxu0 %v3955
    %3983 = vmatprep.subr.mxu0 0.0
    %3984 = vmatpush1.msra.mxu0 %v3954
    %3985 = vmatprep.subr.mxu0 0.0
    %3986 = vmatpush1.msra.mxu0 %v3953
    %3987 = vmatprep.subr.mxu0 0.0
    %3988 = vmatpush1.msra.mxu0 %v3952
    %3989 = vmatprep.subr.mxu0 0.0
    %3990 = vmatpush1.msra.mxu0 %v3951
    %3991 = vmatprep.subr.mxu0 0.0
    %3992 = vmatpush1.msra.mxu0 %v3950
    %3993 = vmatprep.subr.mxu0 0.0
    %3994 = vmatpush1.msra.mxu0 %v3949
    %3995 = vmatprep.subr.mxu0 0.0
    %3996 = vmatpush1.msra.mxu0 %v3948
    %3997 = vmatprep.subr.mxu0 0.0
    %3998 = vmatpush2.msra.mxu0 0.0
    %3999 = vmatprep.subr.mxu0 0.0
    %4000 = vmatpush2.msra.mxu0 0.0
    %4001 = vmatprep.subr.mxu0 0.0
    %4002 = vmatpush2.msra.mxu0 0.0
    %4003 = vmatprep.subr.mxu0 0.0
    %4004 = vmatpush2.msra.mxu0 0.0
    %4005 = vmatprep.subr.mxu0 0.0
    %4006 = vmatpush2.msra.mxu0 0.0
    %4007 = vmatprep.subr.mxu0 0.0
    %4008 = vmatpush2.msra.mxu0 0.0
    %4009 = vmatprep.subr.mxu0 0.0
    %4010 = vmatpush2.msra.mxu0 0.0
    %4011 = vmatprep.subr.mxu0 0.0
    %4012 = vmatpush2.msra.mxu0 0.0
    %4013 = vmatprep.subr.mxu0 0.0
    %4014 = vmatpush2.msra.mxu0 0.0
    %4015 = vmatprep.subr.mxu0 0.0
    %4016 = vmatpush2.msra.mxu0 0.0
    %4017 = vmatprep.subr.mxu0 0.0
    %4018 = vmatpush2.msra.mxu0 0.0
    %4019 = vmatprep.subr.mxu0 0.0
    %4020 = vmatpush2.msra.mxu0 0.0
    %4021 = vmatprep.subr.mxu0 0.0
    %4022 = vmatpush2.msra.mxu0 0.0
    %4023 = vmatprep.subr.mxu0 0.0
    %4024 = vmatpush2.msra.mxu0 0.0
    %4025 = vmatprep.subr.mxu0 0.0
    %4026 = vmatpush2.msra.mxu0 0.0
    %4027 = vmatprep.subr.mxu0 0.0
    %4028 = vmatpush2.msra.mxu0 0.0
    %4029 = vmatprep.mubr.f32.mxu0 0.0
    %4030 = vmatmul.mubr.f32.gmra.mxu0 %v3947
    %v4031 = vpop.f32.mrf.mxu0
    %v4032 = vadd.f32 %v3964, %v4031
    %v4033 = vpop.f32.mrf.mxu0
    %4034 = vdwg.mxu0
    %v4035 = vsub.f32 0.0, %v4032
    %v4036 = vmul.f32 %v4035, 1.442695
    %v4037 = vpow.pop %v4036
    %v4038 = vadd.f32 %v4037, 1.0
    %v4039 = vrcp.pop %v4038
    %v4040 = vmul.f32 %v4032, %v4039
    %v4041 = vld [vmem:[%s6 + $0x1d] ss:$0 sm:$0xff]
    %v4042 = vmul.f32 %v4040, %v4041
    %v4043 = vsel %vm2252, %v4042, 0.0
    %4044 = vadd.xlane.f32.xlu0 %v4043
    %v4045 = vpop.xlane.xlu0 %4044
    %v4046 = vlaneseq
    %v4047 = vshrl.u32 %v4046, 7
    %vm4048 = vcmp.lt.s32.totalorder %v4047, 2
    %v4049 = vsel %vm4048, 1.0, -1.0
    %v4050 = vadd.f32 %v3858, %v4045
    %v4051 = vmul.f32 %v4049, %v4050
    %vm4052 = vcmask 3072
    %v4053 = vsel %vm4052, %v4051, 0.0
    %4054 = vadd.xlane.f32.xlu0 %v4053
    %v4055 = vpop.xlane.xlu0 %4054
    %v4056 = vrot.slane %v4055, 4
    %v4057 = vadd.f32 %v4055, %v4056
    %v4058 = vrot.slane %v4057, 2
    %v4059 = vadd.f32 %v4057, %v4058
    %v4060 = vrot.slane %v4059, 1
    %v4061 = vadd.f32 %v4059, %v4060
    %s4062 = vtos %v4061
    %s4063 = ssub.f32 0.0, %s4062
    %v4064 = vrcp.pop 8.0
    %s4065 = vtos %v4064
    %s4066 = smul.f32 %s4063, %s4065
    %v4067 = vstv %s4066
    %4068 = vst [vmem:[#allocation2] sm:$0x1] %v4067
    // Predicated region
    $region30: #{step.1} parent=1 // pred_check
      _
    $region31: #{step.1} parent=1 // pred_check_branch
      %4070 = sbr.rel (0) target = $region33
    $region32: #{step.1} parent=1 // pred_region
      %s4072 = ssub.s32 16, 16
      %4073 = vsyncadd [#allocation3], %s4072
      %s4075 = sshll.u32 [#allocation2], 4
      %s4076 = int_to_ptr.vmem [resolvable:$true] %s4075
      %4078 = dma.vmem_to_hbm [thread:$0]  %s4076, 16, %s7, [#allocation3]
    $region33: #{step.1} parent=1 // pred_fallthru
      _
    // Predicated region
    $region34: #{step.1} parent=1 // pred_check
      _
    $region35: #{step.1} parent=1 // pred_check_branch
      %4080 = sbr.rel (0) target = $region37
    $region36: #{step.1} parent=1 // pred_region
      %4081 = dma.done [#allocation3], 16
    $region37: #{step.1} parent=1 // pred_fallthru
      _
    %4082 = vsyncpa [#allocation3], 1

</llo_original>
